<compile_context>
chip_gen: v7x
topology: tpu7x:2x2x1
jax: 0.10.0
libtpu: 0.0.40
codegen_flags: <defaults>
</compile_context>

<pallas_src>
import functools

import jax
import jax.numpy as jnp
from jax import lax
from jax.experimental import pallas as pl
from jax.experimental.pallas import tpu as pltpu

EPS = 1e-5


# ------------------------------ helpers ------------------------------

def _bilinear_matrix(in_size, out_size):
    """(out,in) row-weight matrix == F.interpolate(mode='bilinear', align_corners=False)."""
    scale = in_size / out_size
    i = jnp.arange(out_size, dtype=jnp.float32)
    src = jnp.maximum(scale * (i + 0.5) - 0.5, 0.0)
    i0 = jnp.minimum(jnp.floor(src).astype(jnp.int32), in_size - 1)
    i1 = jnp.minimum(i0 + 1, in_size - 1)
    w1 = src - i0.astype(jnp.float32)
    w0 = 1.0 - w1
    rows = jnp.arange(out_size)
    a = jnp.zeros((out_size, in_size), jnp.float32)
    a = a.at[rows, i0].add(w0)
    a = a.at[rows, i1].add(w1)
    return a


def _vmem_limit_bytes():
    """Generation-aware VMEM limit (~75% of capacity, capped at 100 MiB)."""
    try:
        cap = int(pltpu.get_tpu_info().vmem_capacity_bytes)
    except Exception:
        cap = 64 * 1024 * 1024
    return min((cap * 3) // 4, 100 * 1024 * 1024)


# ------------------------------ fused Pallas kernel ------------------------------

def _fused_upsample_kernel(*refs, hs, ws, wx, cin, cout, use_skip):
    """Per batch element: bilinear upsample + bottleneck add + BN/ReLU + 3x3 conv.

    Layouts:
      x_ref    : (1, Hx, Wx*Cin)   bf16  (BN2 scale pre-folded)
      skip_ref : (1, Hs*Ws, Cs)    bf16  (BN1 scale pre-folded)      [use_skip]
      ah_ref   : (Hs, Hx)          bf16  H-interp matrix
      awb_ref  : (Hs, Ws, Wx)      bf16  W-interp matrix broadcast over Hs
      w1_ref   : (Cs, Cin)         bf16  1x1 bottleneck weight (BN2 scale folded) [use_skip]
      b1_ref   : (1, Cs)           f32   BN1 shift                                [use_skip]
      wc_ref   : (Cin, 9*Cout)     bf16  3x3 conv taps packed along lanes
      b2_ref   : (1, Cin)          f32   BN2 shift
      o_ref    : (1, Hs*Ws, Cout)  f32
    """
    if use_skip:
        (x_ref, skip_ref, ah_ref, awb_ref, w1_ref, b1_ref, wc_ref, b2_ref,
         o_ref) = refs
    else:
        (x_ref, ah_ref, awb_ref, wc_ref, b2_ref, o_ref) = refs
        skip_ref = w1_ref = b1_ref = None
    m = hs * ws

    # ---- bilinear upsample of x (no Kronecker operators) ----
    # H interp: (Hs,Hx) @ (Hx, Wx*Cin) -> (Hs, Wx*Cin), f32 MXU accumulation.
    th = jnp.dot(ah_ref[...], x_ref[0], preferred_element_type=jnp.float32)
    # W interp: batched matmul over the Hs rows: (Hs,Ws,Wx) x (Hs,Wx,Cin) -> (Hs,Ws,Cin).
    th3 = th.astype(jnp.bfloat16).reshape(hs, wx, cin)
    up = jnp.einsum("hox,hxc->hoc", awb_ref[...], th3,
                    preferred_element_type=jnp.float32)
    z = up.reshape(m, cin)                                              # (Hs*Ws, Cin)

    if use_skip:
        # bottleneck on skip: (BN1 scale pre-folded) + shift + ReLU, then 1x1 conv
        # as a plain channel contraction with M = Hs*Ws rows (fills the MXU).
        a = jnp.maximum(skip_ref[0].astype(jnp.float32) + b1_ref[...], 0.0)
        z = z + jnp.dot(a.astype(jnp.bfloat16), w1_ref[...],
                        preferred_element_type=jnp.float32)             # (Hs*Ws, Cin)

    # BN2 shift + ReLU (scale already folded into x / w1); single bf16 cast.
    act = jnp.maximum(z + b2_ref[...], 0.0).astype(jnp.bfloat16)        # (Hs*Ws, Cin)

    # ---- 3x3 "same" conv: one wide channel-contraction matmul, 9 shifted adds ----
    c_all = jnp.dot(act, wc_ref[...], preferred_element_type=jnp.float32)  # (M, 9*Cout)

    w_idx = lax.broadcasted_iota(jnp.int32, (m, 1), 0) % ws
    mask_l = w_idx > 0            # tap dw = -1 invalid at w == 0
    mask_r = w_idx < (ws - 1)     # tap dw = +1 invalid at w == Ws-1

    acc = jnp.zeros((m, cout), jnp.float32)
    t = 0
    for dh in (-1, 0, 1):
        for dw in (-1, 0, 1):
            chunk = c_all[:, t * cout:(t + 1) * cout]                   # (M, Cout)
            s = dh * ws + dw       # out[r] += chunk[r + s]  (H padding via shift-in zeros)
            if s > 0:
                shifted = jnp.concatenate(
                    [chunk[s:, :], jnp.zeros((s, cout), jnp.float32)], axis=0)
            elif s < 0:
                shifted = jnp.concatenate(
                    [jnp.zeros((-s, cout), jnp.float32), chunk[:m + s, :]], axis=0)
            else:
                shifted = chunk
            if dw == -1:
                shifted = jnp.where(mask_l, shifted, 0.0)
            elif dw == 1:
                shifted = jnp.where(mask_r, shifted, 0.0)
            acc = acc + shifted
            t += 1

    o_ref[0] = acc                                                      # (Hs*Ws, Cout)


# ------------------------------ wrapper (glue) ------------------------------

def upsample_forward(x_nchw, skip_nchw, params, use_skip=True):
    n, cin, hx, wx = x_nchw.shape
    _, cs, hs, ws = skip_nchw.shape
    cout = params["w_blend"].shape[0]
    m = hs * ws

    # Eval-mode BN folded to per-channel scale/shift.
    s1 = params["bn1_gamma"] / jnp.sqrt(params["bn1_var"] + EPS)
    b1 = params["bn1_beta"] - params["bn1_mean"] * s1
    s2 = params["bn2_gamma"] / jnp.sqrt(params["bn2_var"] + EPS)
    b2 = params["bn2_beta"] - params["bn2_mean"] * s2

    # NCHW -> (rows = H*W, lanes = C); BN scales folded into the same fused
    # transpose+cast pass (no extra elementwise HBM sweeps, bf16 writeback).
    x_l = (jnp.transpose(x_nchw, (0, 2, 3, 1)) * s2[None, None, None, :]
           ).astype(jnp.bfloat16).reshape(n, hx, wx * cin)
    if use_skip:
        skip_l = (jnp.transpose(skip_nchw, (0, 2, 3, 1)) * s1[None, None, None, :]
                  ).astype(jnp.bfloat16).reshape(n, m, cs)

    # Tiny interpolation operators (no O(Ws^2*C^2) blowup).
    a_h = _bilinear_matrix(hx, hs).astype(jnp.bfloat16)                 # (Hs, Hx)
    a_w = _bilinear_matrix(wx, ws)                                      # (Ws, Wx)
    a_wb = jnp.broadcast_to(a_w[None], (hs, ws, wx)).astype(jnp.bfloat16)

    # 1x1 bottleneck weight (Cs, Cin) with BN2 scale folded into its output channels.
    w1 = params["w_bottleneck"][:, :, 0, 0]                             # (Cin, Cs) OIHW
    w1s = jnp.transpose(w1 * s2[:, None], (1, 0)).astype(jnp.bfloat16)  # (Cs, Cin)

    # 3x3 blend conv packed as one (Cin, 9*Cout) channel-contraction weight,
    # tap order t = (kh*3 + kw) matching the kernel's (dh, dw) loop.
    w3 = jnp.transpose(params["w_blend"], (2, 3, 1, 0))                 # (3,3,Cin,Cout)
    wc = jnp.transpose(w3.reshape(9, cin, cout), (1, 0, 2)).reshape(cin, 9 * cout)
    wc = wc.astype(jnp.bfloat16)

    b1r = b1.reshape(1, cs).astype(jnp.float32)
    b2r = b2.reshape(1, cin).astype(jnp.float32)

    kernel = functools.partial(_fused_upsample_kernel, hs=hs, ws=ws, wx=wx,
                               cin=cin, cout=cout, use_skip=use_skip)

    const2 = lambda b: (0, 0)
    const3 = lambda b: (0, 0, 0)

    in_specs = [pl.BlockSpec((1, hx, wx * cin), lambda b: (b, 0, 0))]   # x
    args = [x_l]
    if use_skip:
        in_specs.append(pl.BlockSpec((1, m, cs), lambda b: (b, 0, 0)))  # skip
        args.append(skip_l)
    in_specs += [pl.BlockSpec((hs, hx), const2),                        # a_h
                 pl.BlockSpec((hs, ws, wx), const3)]                    # a_w broadcast
    args += [a_h, a_wb]
    if use_skip:
        in_specs += [pl.BlockSpec((cs, cin), const2),                   # w1 (scaled)
                     pl.BlockSpec((1, cs), const2)]                     # b1
        args += [w1s, b1r]
    in_specs += [pl.BlockSpec((cin, 9 * cout), const2),                 # packed 3x3 weights
                 pl.BlockSpec((1, cin), const2)]                        # b2
    args += [wc, b2r]

    out = pl.pallas_call(
        kernel,
        out_shape=jax.ShapeDtypeStruct((n, m, cout), jnp.float32),
        grid=(n,),
        in_specs=in_specs,
        out_specs=pl.BlockSpec((1, m, cout), lambda b: (b, 0, 0)),
        compiler_params=pltpu.CompilerParams(
            dimension_semantics=("parallel",),
            vmem_limit_bytes=_vmem_limit_bytes()),
    )(*args)

    # (N, Hs*Ws, Cout) -> NCHW f32 (module semantics).
    return jnp.transpose(out.reshape(n, hs, ws, cout), (0, 3, 1, 2))


# ------------------------------ pure-JAX reference ------------------------------

def upsample_reference(x, skip, params, use_skip=True):
    n, cin, hx, wx = x.shape
    _, cs, hs, ws = skip.shape
    s1 = params["bn1_gamma"] / jnp.sqrt(params["bn1_var"] + EPS)
    b1 = params["bn1_beta"] - params["bn1_mean"] * s1
    s2 = params["bn2_gamma"] / jnp.sqrt(params["bn2_var"] + EPS)
    b2 = params["bn2_beta"] - params["bn2_mean"] * s2

    a_h = _bilinear_matrix(hx, hs)
    a_w = _bilinear_matrix(wx, ws)
    up = jnp.einsum("gh,nchw->ncgw", a_h, x)
    up = jnp.einsum("vw,ncgw->ncgv", a_w, up)

    z = up
    if use_skip:
        a = jnp.maximum(skip * s1[None, :, None, None] + b1[None, :, None, None], 0.0)
        bt = lax.conv_general_dilated(a, params["w_bottleneck"], (1, 1), ((0, 0), (0, 0)),
                                      dimension_numbers=("NCHW", "OIHW", "NCHW"))
        z = z + bt
    act = jnp.maximum(z * s2[None, :, None, None] + b2[None, :, None, None], 0.0)
    return lax.conv_general_dilated(act, params["w_blend"], (1, 1), ((1, 1), (1, 1)),
                                    dimension_numbers=("NCHW", "OIHW", "NCHW"))


# ------------------------------ demo ------------------------------

if __name__ == "__main__":
    num_maps_in, skip_maps_in, num_maps_out = 8, 16, 8
    n, hx, wx = 2, 8, 8          # low-res feature map x
    hs, ws = 16, 16              # skip spatial size (upsample target, 2x)

    key = jax.random.PRNGKey(0)
    kx, ks, k1, k2, k3, k4 = jax.random.split(key, 6)
    x = jax.random.normal(kx, (n, num_maps_in, hx, wx), jnp.float32)          # NCHW
    skip = jax.random.normal(ks, (n, skip_maps_in, hs, ws), jnp.float32)      # NCHW

    params = dict(
        # Conv2d weights (torch OIHW layout, bias=False as in BNReluConv).
        w_bottleneck=0.1 * jax.random.normal(k1, (num_maps_in, skip_maps_in, 1, 1), jnp.float32),
        w_blend=0.1 * jax.random.normal(k2, (num_maps_out, num_maps_in, 3, 3), jnp.float32),
        # Eval-mode BatchNorm2d params / running stats (mildly non-trivial).
        bn1_gamma=1.0 + 0.1 * jax.random.normal(k3, (skip_maps_in,), jnp.float32),
        bn1_beta=0.1 * jnp.ones((skip_maps_in,), jnp.float32),
        bn1_mean=0.05 * jnp.ones((skip_maps_in,), jnp.float32),
        bn1_var=jnp.full((skip_maps_in,), 1.2, jnp.float32),
        bn2_gamma=1.0 + 0.1 * jax.random.normal(k4, (num_maps_in,), jnp.float32),
        bn2_beta=-0.1 * jnp.ones((num_maps_in,), jnp.float32),
        bn2_mean=0.05 * jnp.ones((num_maps_in,), jnp.float32),
        bn2_var=jnp.full((num_maps_in,), 0.8, jnp.float32),
    )

    run = jax.jit(functools.partial(upsample_forward, use_skip=True))
    out = run(x, skip, params)
    jax.block_until_ready(out)
    assert out.shape == (n, num_maps_out, hs, ws)
    assert out.dtype == jnp.float32

    ref = upsample_reference(x, skip, params, use_skip=True)
    err = float(jnp.max(jnp.abs(out - ref)))
    assert err < 1.5e-1, f"max abs error vs reference: {err}"
    print("KERNEL_OK")
</pallas_src>

<mosaic_0001>
module attributes {stable_mosaic.version = 11 : i64} {
  func.func private @main(%arg0: i32) attributes {dimension_semantics = [#tpu.dimension_semantics<core_parallel>], iteration_bounds = array<i64: 2>, tpu.core_type = #tpu.core_type<sc_scalar_subcore>, window_params = []} {
    return
  }
}

module attributes {stable_mosaic.version = 11 : i64} {
  func.func private @main(%arg0: i32) attributes {dimension_semantics = [#tpu.dimension_semantics<core_parallel>], iteration_bounds = array<i64: 2>, tpu.core_type = #tpu.core_type<sc_scalar_subcore>, window_params = []} {
    return
  }
}

module attributes {stable_mosaic.version = 11 : i64} {
  func.func @_fused_upsample_kernel(%arg0: i32, %arg1: memref<1x8x64xbf16, #tpu.memory_space<vmem>>, %arg2: memref<1x256x16xbf16, #tpu.memory_space<vmem>>, %arg3: memref<16x8xbf16, #tpu.memory_space<vmem>>, %arg4: memref<16x16x8xbf16, #tpu.memory_space<vmem>>, %arg5: memref<16x8xbf16, #tpu.memory_space<vmem>>, %arg6: memref<1x16xf32, #tpu.memory_space<vmem>>, %arg7: memref<8x72xbf16, #tpu.memory_space<vmem>>, %arg8: memref<1x8xf32, #tpu.memory_space<vmem>>, %arg9: memref<1x256x8xf32, #tpu.memory_space<vmem>>) attributes {dimension_semantics = [#tpu.dimension_semantics<parallel>], iteration_bounds = array<i64: 2>, scalar_prefetch = 0 : i64, scratch_operands = 0 : i64, tpu.core_type = #tpu.core_type<tc>, window_params = [{transform_indices = @transform_0, window_bounds = array<i64: 1, 8, 64>}, {transform_indices = @transform_1, window_bounds = array<i64: 1, 256, 16>}, {pipeline_mode = #tpu.pipeline_mode<synchronous>, transform_indices = @transform_2, window_bounds = array<i64: 16, 8>}, {pipeline_mode = #tpu.pipeline_mode<synchronous>, transform_indices = @transform_3, window_bounds = array<i64: 16, 16, 8>}, {pipeline_mode = #tpu.pipeline_mode<synchronous>, transform_indices = @transform_4, window_bounds = array<i64: 16, 8>}, {pipeline_mode = #tpu.pipeline_mode<synchronous>, transform_indices = @transform_5, window_bounds = array<i64: 1, 16>}, {pipeline_mode = #tpu.pipeline_mode<synchronous>, transform_indices = @transform_6, window_bounds = array<i64: 8, 72>}, {pipeline_mode = #tpu.pipeline_mode<synchronous>, transform_indices = @transform_7, window_bounds = array<i64: 1, 8>}, {transform_indices = @transform_8, window_bounds = array<i64: 1, 256, 8>}]} {
    %c0 = arith.constant 0 : index
    %c0_0 = arith.constant 0 : index
    %0 = vector.load %arg3[%c0, %c0_0] : memref<16x8xbf16, #tpu.memory_space<vmem>>, vector<16x8xbf16>
    %c0_1 = arith.constant 0 : index
    %c0_2 = arith.constant 0 : index
    %c0_3 = arith.constant 0 : index
    %1 = vector.load %arg1[%c0_1, %c0_2, %c0_3] : memref<1x8x64xbf16, #tpu.memory_space<vmem>>, vector<1x8x64xbf16>
    %2 = vector.shape_cast %1 : vector<1x8x64xbf16> to vector<8x64xbf16>
    %cst = arith.constant dense<0.000000e+00> : vector<16x64xf32>
    %3 = tpu.matmul %0, %2, %cst {dimension_numbers = #tpu.dot_dimension_numbers<[1], [0], [0], [1], [0, 0, 1, 1], [], []>} : vector<16x8xbf16>, vector<8x64xbf16>, vector<16x64xf32> -> vector<16x64xf32>
    %4 = arith.truncf %3 : vector<16x64xf32> to vector<16x64xbf16>
    %5 = vector.shape_cast %4 : vector<16x64xbf16> to vector<16x8x8xbf16>
    %c0_4 = arith.constant 0 : index
    %c0_5 = arith.constant 0 : index
    %c0_6 = arith.constant 0 : index
    %6 = vector.load %arg4[%c0_4, %c0_5, %c0_6] : memref<16x16x8xbf16, #tpu.memory_space<vmem>>, vector<16x16x8xbf16>
    "tpu.trace_start"() <{level = 10 : i32, message = "hox,hxc->hoc"}> : () -> ()
    %cst_7 = arith.constant dense<0.000000e+00> : vector<16x16x8xf32>
    %7 = tpu.matmul %6, %5, %cst_7 {dimension_numbers = #tpu.dot_dimension_numbers<[2], [1], [1], [2], [0, 0, 0, 1, 1, 2], [0], [0]>} : vector<16x16x8xbf16>, vector<16x8x8xbf16>, vector<16x16x8xf32> -> vector<16x16x8xf32>
    "tpu.trace_stop"() : () -> ()
    %8 = vector.shape_cast %7 : vector<16x16x8xf32> to vector<256x8xf32>
    %c0_8 = arith.constant 0 : index
    %c0_9 = arith.constant 0 : index
    %c0_10 = arith.constant 0 : index
    %9 = vector.load %arg2[%c0_8, %c0_9, %c0_10] : memref<1x256x16xbf16, #tpu.memory_space<vmem>>, vector<1x256x16xbf16>
    %10 = vector.shape_cast %9 : vector<1x256x16xbf16> to vector<256x16xbf16>
    %11 = arith.extf %10 : vector<256x16xbf16> to vector<256x16xf32>
    %c0_11 = arith.constant 0 : index
    %c0_12 = arith.constant 0 : index
    %12 = vector.load %arg6[%c0_11, %c0_12] : memref<1x16xf32, #tpu.memory_space<vmem>>, vector<1x16xf32>
    %13 = vector.broadcast %12 : vector<1x16xf32> to vector<256x16xf32>
    %14 = arith.addf %11, %13 : vector<256x16xf32>
    %cst_13 = arith.constant 0.000000e+00 : f32
    %15 = vector.broadcast %cst_13 : f32 to vector<256x16xf32>
    %16 = arith.maximumf %14, %15 : vector<256x16xf32>
    %17 = arith.truncf %16 : vector<256x16xf32> to vector<256x16xbf16>
    %c0_14 = arith.constant 0 : index
    %c0_15 = arith.constant 0 : index
    %18 = vector.load %arg5[%c0_14, %c0_15] : memref<16x8xbf16, #tpu.memory_space<vmem>>, vector<16x8xbf16>
    %cst_16 = arith.constant dense<0.000000e+00> : vector<256x8xf32>
    %19 = tpu.matmul %17, %18, %cst_16 {dimension_numbers = #tpu.dot_dimension_numbers<[1], [0], [0], [1], [0, 0, 1, 1], [], []>} : vector<256x16xbf16>, vector<16x8xbf16>, vector<256x8xf32> -> vector<256x8xf32>
    %20 = arith.addf %8, %19 : vector<256x8xf32>
    %c0_17 = arith.constant 0 : index
    %c0_18 = arith.constant 0 : index
    %21 = vector.load %arg8[%c0_17, %c0_18] : memref<1x8xf32, #tpu.memory_space<vmem>>, vector<1x8xf32>
    %22 = vector.broadcast %21 : vector<1x8xf32> to vector<256x8xf32>
    %23 = arith.addf %20, %22 : vector<256x8xf32>
    %cst_19 = arith.constant 0.000000e+00 : f32
    %24 = vector.broadcast %cst_19 : f32 to vector<256x8xf32>
    %25 = arith.maximumf %23, %24 : vector<256x8xf32>
    %26 = arith.truncf %25 : vector<256x8xf32> to vector<256x8xbf16>
    %c0_20 = arith.constant 0 : index
    %c0_21 = arith.constant 0 : index
    %27 = vector.load %arg7[%c0_20, %c0_21] : memref<8x72xbf16, #tpu.memory_space<vmem>>, vector<8x72xbf16>
    %cst_22 = arith.constant dense<0.000000e+00> : vector<256x72xf32>
    %28 = tpu.matmul %26, %27, %cst_22 {dimension_numbers = #tpu.dot_dimension_numbers<[1], [0], [0], [1], [0, 0, 1, 1], [], []>} : vector<256x8xbf16>, vector<8x72xbf16>, vector<256x72xf32> -> vector<256x72xf32>
    %29 = tpu.iota {dimensions = array<i32: 0>} : vector<256x1xi32>
    %c16_i32 = arith.constant 16 : i32
    %c0_i32 = arith.constant 0 : i32
    %30 = arith.cmpi eq, %c16_i32, %c0_i32 : i32
    %c1_i32 = arith.constant 1 : i32
    %31 = arith.select %30, %c1_i32, %c16_i32 : i32
    %32 = vector.broadcast %31 : i32 to vector<256x1xi32>
    %33 = arith.remsi %29, %32 : vector<256x1xi32>
    %c0_i32_23 = arith.constant 0 : i32
    %34 = vector.broadcast %c0_i32_23 : i32 to vector<256x1xi32>
    %35 = arith.cmpi ne, %33, %34 : vector<256x1xi32>
    %c0_i32_24 = arith.constant 0 : i32
    %36 = vector.broadcast %c0_i32_24 : i32 to vector<256x1xi32>
    %37 = arith.cmpi slt, %33, %36 : vector<256x1xi32>
    %c0_i32_25 = arith.constant 0 : i32
    %38 = arith.cmpi slt, %31, %c0_i32_25 : i32
    %39 = vector.broadcast %38 : i1 to vector<256x1xi1>
    %40 = vector.broadcast %39 : vector<256x1xi1> to vector<256x1xi1>
    %41 = arith.xori %37, %40 : vector<256x1xi1>
    %42 = arith.andi %41, %35 : vector<256x1xi1>
    %43 = vector.broadcast %31 : i32 to vector<256x1xi32>
    %44 = arith.addi %33, %43 : vector<256x1xi32>
    %45 = arith.select %42, %44, %33 : vector<256x1xi1>, vector<256x1xi32>
    %c0_i32_26 = arith.constant 0 : i32
    %46 = vector.broadcast %c0_i32_26 : i32 to vector<256x1xi32>
    %47 = arith.cmpi sgt, %45, %46 : vector<256x1xi32>
    %c15_i32 = arith.constant 15 : i32
    %48 = vector.broadcast %c15_i32 : i32 to vector<256x1xi32>
    %49 = arith.cmpi slt, %45, %48 : vector<256x1xi32>
    %cst_27 = arith.constant 0.000000e+00 : f32
    %50 = vector.broadcast %cst_27 : f32 to vector<256x8xf32>
    %51 = vector.extract_strided_slice %28 {offsets = [0, 0], sizes = [256, 8], strides = [1, 1]} : vector<256x72xf32> to vector<256x8xf32>
    %cst_28 = arith.constant 0.000000e+00 : f32
    %52 = vector.broadcast %cst_28 : f32 to vector<17x8xf32>
    %53 = vector.extract_strided_slice %51 {offsets = [0, 0], sizes = [239, 8], strides = [1, 1]} : vector<256x8xf32> to vector<239x8xf32>
    %54 = tpu.concatenate %52, %53 in 0 : vector<17x8xf32>, vector<239x8xf32> -> vector<256x8xf32>
    %cst_29 = arith.constant 0.000000e+00 : f32
    %55 = vector.shape_cast %47 : vector<256x1xi1> to vector<256x1xi1>
    %56 = vector.broadcast %55 : vector<256x1xi1> to vector<256x8xi1>
    %57 = vector.broadcast %cst_29 : f32 to vector<256x8xf32>
    %58 = arith.select %56, %54, %57 : vector<256x8xi1>, vector<256x8xf32>
    %59 = arith.addf %50, %58 : vector<256x8xf32>
    %60 = vector.extract_strided_slice %28 {offsets = [0, 8], sizes = [256, 8], strides = [1, 1]} : vector<256x72xf32> to vector<256x8xf32>
    %cst_30 = arith.constant 0.000000e+00 : f32
    %61 = vector.broadcast %cst_30 : f32 to vector<16x8xf32>
    %62 = vector.extract_strided_slice %60 {offsets = [0, 0], sizes = [240, 8], strides = [1, 1]} : vector<256x8xf32> to vector<240x8xf32>
    %63 = tpu.concatenate %61, %62 in 0 : vector<16x8xf32>, vector<240x8xf32> -> vector<256x8xf32>
    %64 = arith.addf %59, %63 : vector<256x8xf32>
    %65 = vector.extract_strided_slice %28 {offsets = [0, 16], sizes = [256, 8], strides = [1, 1]} : vector<256x72xf32> to vector<256x8xf32>
    %cst_31 = arith.constant 0.000000e+00 : f32
    %66 = vector.broadcast %cst_31 : f32 to vector<15x8xf32>
    %67 = vector.extract_strided_slice %65 {offsets = [0, 0], sizes = [241, 8], strides = [1, 1]} : vector<256x8xf32> to vector<241x8xf32>
    %68 = tpu.concatenate %66, %67 in 0 : vector<15x8xf32>, vector<241x8xf32> -> vector<256x8xf32>
    %cst_32 = arith.constant 0.000000e+00 : f32
    %69 = vector.shape_cast %49 : vector<256x1xi1> to vector<256x1xi1>
    %70 = vector.broadcast %69 : vector<256x1xi1> to vector<256x8xi1>
    %71 = vector.broadcast %cst_32 : f32 to vector<256x8xf32>
    %72 = arith.select %70, %68, %71 : vector<256x8xi1>, vector<256x8xf32>
    %73 = arith.addf %64, %72 : vector<256x8xf32>
    %74 = vector.extract_strided_slice %28 {offsets = [0, 24], sizes = [256, 8], strides = [1, 1]} : vector<256x72xf32> to vector<256x8xf32>
    %cst_33 = arith.constant 0.000000e+00 : f32
    %75 = vector.broadcast %cst_33 : f32 to vector<1x8xf32>
    %76 = vector.extract_strided_slice %74 {offsets = [0, 0], sizes = [255, 8], strides = [1, 1]} : vector<256x8xf32> to vector<255x8xf32>
    %77 = tpu.concatenate %75, %76 in 0 : vector<1x8xf32>, vector<255x8xf32> -> vector<256x8xf32>
    %cst_34 = arith.constant 0.000000e+00 : f32
    %78 = vector.shape_cast %47 : vector<256x1xi1> to vector<256x1xi1>
    %79 = vector.broadcast %78 : vector<256x1xi1> to vector<256x8xi1>
    %80 = vector.broadcast %cst_34 : f32 to vector<256x8xf32>
    %81 = arith.select %79, %77, %80 : vector<256x8xi1>, vector<256x8xf32>
    %82 = arith.addf %73, %81 : vector<256x8xf32>
    %83 = vector.extract_strided_slice %28 {offsets = [0, 32], sizes = [256, 8], strides = [1, 1]} : vector<256x72xf32> to vector<256x8xf32>
    %84 = arith.addf %82, %83 : vector<256x8xf32>
    %85 = vector.extract_strided_slice %28 {offsets = [0, 40], sizes = [256, 8], strides = [1, 1]} : vector<256x72xf32> to vector<256x8xf32>
    %86 = vector.extract_strided_slice %85 {offsets = [1, 0], sizes = [255, 8], strides = [1, 1]} : vector<256x8xf32> to vector<255x8xf32>
    %cst_35 = arith.constant 0.000000e+00 : f32
    %87 = vector.broadcast %cst_35 : f32 to vector<1x8xf32>
    %88 = tpu.concatenate %86, %87 in 0 : vector<255x8xf32>, vector<1x8xf32> -> vector<256x8xf32>
    %cst_36 = arith.constant 0.000000e+00 : f32
    %89 = vector.shape_cast %49 : vector<256x1xi1> to vector<256x1xi1>
    %90 = vector.broadcast %89 : vector<256x1xi1> to vector<256x8xi1>
    %91 = vector.broadcast %cst_36 : f32 to vector<256x8xf32>
    %92 = arith.select %90, %88, %91 : vector<256x8xi1>, vector<256x8xf32>
    %93 = arith.addf %84, %92 : vector<256x8xf32>
    %94 = vector.extract_strided_slice %28 {offsets = [0, 48], sizes = [256, 8], strides = [1, 1]} : vector<256x72xf32> to vector<256x8xf32>
    %95 = vector.extract_strided_slice %94 {offsets = [15, 0], sizes = [241, 8], strides = [1, 1]} : vector<256x8xf32> to vector<241x8xf32>
    %cst_37 = arith.constant 0.000000e+00 : f32
    %96 = vector.broadcast %cst_37 : f32 to vector<15x8xf32>
    %97 = tpu.concatenate %95, %96 in 0 : vector<241x8xf32>, vector<15x8xf32> -> vector<256x8xf32>
    %cst_38 = arith.constant 0.000000e+00 : f32
    %98 = vector.shape_cast %47 : vector<256x1xi1> to vector<256x1xi1>
    %99 = vector.broadcast %98 : vector<256x1xi1> to vector<256x8xi1>
    %100 = vector.broadcast %cst_38 : f32 to vector<256x8xf32>
    %101 = arith.select %99, %97, %100 : vector<256x8xi1>, vector<256x8xf32>
    %102 = arith.addf %93, %101 : vector<256x8xf32>
    %103 = vector.extract_strided_slice %28 {offsets = [0, 56], sizes = [256, 8], strides = [1, 1]} : vector<256x72xf32> to vector<256x8xf32>
    %104 = vector.extract_strided_slice %103 {offsets = [16, 0], sizes = [240, 8], strides = [1, 1]} : vector<256x8xf32> to vector<240x8xf32>
    %cst_39 = arith.constant 0.000000e+00 : f32
    %105 = vector.broadcast %cst_39 : f32 to vector<16x8xf32>
    %106 = tpu.concatenate %104, %105 in 0 : vector<240x8xf32>, vector<16x8xf32> -> vector<256x8xf32>
    %107 = arith.addf %102, %106 : vector<256x8xf32>
    %108 = vector.extract_strided_slice %28 {offsets = [0, 64], sizes = [256, 8], strides = [1, 1]} : vector<256x72xf32> to vector<256x8xf32>
    %109 = vector.extract_strided_slice %108 {offsets = [17, 0], sizes = [239, 8], strides = [1, 1]} : vector<256x8xf32> to vector<239x8xf32>
    %cst_40 = arith.constant 0.000000e+00 : f32
    %110 = vector.broadcast %cst_40 : f32 to vector<17x8xf32>
    %111 = tpu.concatenate %109, %110 in 0 : vector<239x8xf32>, vector<17x8xf32> -> vector<256x8xf32>
    %cst_41 = arith.constant 0.000000e+00 : f32
    %112 = vector.shape_cast %49 : vector<256x1xi1> to vector<256x1xi1>
    %113 = vector.broadcast %112 : vector<256x1xi1> to vector<256x8xi1>
    %114 = vector.broadcast %cst_41 : f32 to vector<256x8xf32>
    %115 = arith.select %113, %111, %114 : vector<256x8xi1>, vector<256x8xf32>
    %116 = arith.addf %107, %115 : vector<256x8xf32>
    %c0_42 = arith.constant 0 : index
    %c0_43 = arith.constant 0 : index
    %c0_44 = arith.constant 0 : index
    %117 = vector.load %arg9[%c0_42, %c0_43, %c0_44] : memref<1x256x8xf32, #tpu.memory_space<vmem>>, vector<1x256x8xf32>
    %118 = vector.shape_cast %117 : vector<1x256x8xf32> to vector<256x8xf32>
    %119 = vector.shape_cast %116 : vector<256x8xf32> to vector<1x256x8xf32>
    tpu.vector_store %arg9[%c0_42, %c0_43, %c0_44], %119 {strides = array<i32>} : memref<1x256x8xf32, #tpu.memory_space<vmem>>, vector<1x256x8xf32>,
    return
  }
  func.func @transform_0(%arg0: i32) -> (i32, i32, i32) {
    %c0_i32 = arith.constant 0 : i32
    %c0_i32_0 = arith.constant 0 : i32
    %c0_i32_1 = arith.constant 0 : i32
    return %arg0, %c0_i32, %c0_i32_0 : i32, i32, i32
  }
  func.func @transform_1(%arg0: i32) -> (i32, i32, i32) {
    %c0_i32 = arith.constant 0 : i32
    %c0_i32_0 = arith.constant 0 : i32
    %c0_i32_1 = arith.constant 0 : i32
    return %arg0, %c0_i32, %c0_i32_0 : i32, i32, i32
  }
  func.func @transform_2(%arg0: i32) -> (i32, i32) {
    %c0_i32 = arith.constant 0 : i32
    %c0_i32_0 = arith.constant 0 : i32
    %c0_i32_1 = arith.constant 0 : i32
    return %c0_i32, %c0_i32_0 : i32, i32
  }
  func.func @transform_3(%arg0: i32) -> (i32, i32, i32) {
    %c0_i32 = arith.constant 0 : i32
    %c0_i32_0 = arith.constant 0 : i32
    %c0_i32_1 = arith.constant 0 : i32
    %c0_i32_2 = arith.constant 0 : i32
    return %c0_i32, %c0_i32_0, %c0_i32_1 : i32, i32, i32
  }
  func.func @transform_4(%arg0: i32) -> (i32, i32) {
    %c0_i32 = arith.constant 0 : i32
    %c0_i32_0 = arith.constant 0 : i32
    %c0_i32_1 = arith.constant 0 : i32
    return %c0_i32, %c0_i32_0 : i32, i32
  }
  func.func @transform_5(%arg0: i32) -> (i32, i32) {
    %c0_i32 = arith.constant 0 : i32
    %c0_i32_0 = arith.constant 0 : i32
    %c0_i32_1 = arith.constant 0 : i32
    return %c0_i32, %c0_i32_0 : i32, i32
  }
  func.func @transform_6(%arg0: i32) -> (i32, i32) {
    %c0_i32 = arith.constant 0 : i32
    %c0_i32_0 = arith.constant 0 : i32
    %c0_i32_1 = arith.constant 0 : i32
    return %c0_i32, %c0_i32_0 : i32, i32
  }
  func.func @transform_7(%arg0: i32) -> (i32, i32) {
    %c0_i32 = arith.constant 0 : i32
    %c0_i32_0 = arith.constant 0 : i32
    %c0_i32_1 = arith.constant 0 : i32
    return %c0_i32, %c0_i32_0 : i32, i32
  }
  func.func @transform_8(%arg0: i32) -> (i32, i32, i32) {
    %c0_i32 = arith.constant 0 : i32
    %c0_i32_0 = arith.constant 0 : i32
    %c0_i32_1 = arith.constant 0 : i32
    return %arg0, %c0_i32, %c0_i32_0 : i32, i32, i32
  }
}

</mosaic_0001>

<llo_original>
// kernel: upsample_forward.1
$region0: #{upsample_forward.1}
  #allocation0 [shape = 'u32[]', space=smem, size = 0x4, offset = 0x4, fixed_abs, tag = 'smem constant byte address 0x4 - core index']
  #allocation1 [shape = 'u32[144,128]{1,0:T(1,128)}', space=vmem, size = 0x12000, scoped, tag = 'internal scratch']
  %s0 = inlined_call_operand.vmem [shape: bf16[2,8,64], index: 0, kind: input, shape index: {}]
  %s1 = inlined_call_operand.vmem [shape: bf16[2,256,16], index: 1, kind: input, shape index: {}]
  %s2 = inlined_call_operand.vmem [shape: bf16[16,8], index: 2, kind: input, shape index: {}]
  %s3 = inlined_call_operand.vmem [shape: bf16[16,16,8], index: 3, kind: input, shape index: {}]
  %s4 = inlined_call_operand.vmem [shape: bf16[16,8], index: 4, kind: input, shape index: {}]
  %s5 = inlined_call_operand.vmem [shape: f32[1,16], index: 5, kind: input, shape index: {}]
  %s6 = inlined_call_operand.vmem [shape: bf16[8,72], index: 6, kind: input, shape index: {}]
  %s7 = inlined_call_operand.vmem [shape: f32[1,8], index: 7, kind: input, shape index: {}]
  %s8 = inlined_call_operand.vmem [shape: f32[2,256,8], index: 8, kind: output, shape index: {}]
  %s9 = sld [smem:[#allocation0]]
  $region65: #{upsample_forward.1} parent=0
    _
  %s11 = ssub.s32 1, %s9
  %s12 = scalar_select 0, %s11, %s9
  loop: start=0, step=1, limit=4
  $region2: #{upsample_forward.1} parent=0 // loop_pre_header
    _
  $region3: #{upsample_forward.1} parent=0 // loop_header
    %s14 = sphi 0, %s18
    %p15 = scmp.ge.s32.totalorder %s14, 4
    %s24 = sphi 0, %s26
    %s27 = sphi 0, %s24
    %s28 = sphi 0, %s27
    %s44 = sphi 0, %s28
    %s50 = sphi 0, %s52
    %s53 = sphi 0, %s50
    %s54 = sphi 0, %s53
    %s70 = sphi 0, %s54
    %s74 = sphi 0, %s74
    %s76 = sphi 0, %s74
    %s77 = sphi 0, %s76
    %s91 = sphi 0, %s77
    %s95 = sphi 0, %s95
    %s97 = sphi 0, %s95
    %s98 = sphi 0, %s97
    %s112 = sphi 0, %s98
    %s116 = sphi 0, %s116
    %s118 = sphi 0, %s116
    %s119 = sphi 0, %s118
    %s133 = sphi 0, %s119
    %s137 = sphi 0, %s137
    %s139 = sphi 0, %s137
    %s140 = sphi 0, %s139
    %s154 = sphi 0, %s140
    %s158 = sphi 0, %s158
    %s160 = sphi 0, %s158
    %s161 = sphi 0, %s160
    %s175 = sphi 0, %s161
    %s179 = sphi 0, %s179
    %s181 = sphi 0, %s179
    %s182 = sphi 0, %s181
    %s196 = sphi 0, %s182
    %s202 = sphi 0, %s204
    %s205 = sphi 0, %s202
    %s206 = sphi 0, %s205
    %s222 = sphi 0, %s206
  $region4: #{upsample_forward.1} parent=0 // loop_header_branch
    %17 = sbr.rel (%p15) target = $region8
  $region5: #{upsample_forward.1} parent=0 // loop_body
    %s19 = ssub.s32 %s14, 1
    %s20 = ssub.s32 %s14, 2
    %s21 = sadd.s32 %s14, 1
    %s22 = ssub.s32 %s14, %s21
    %p23 = scmp.eq.s32.totalorder %s22, 0
    %s25 = sadd.s32 %s24, 1
    %s26 = scalar_select %p23, %s24, %s25
    %p29 = pneg %p23
    %p30 = scmp.eq.s32.totalorder %s14, 1
    %p31 = por %p29, %p30
    %p32 = scmp.ne.s32.totalorder %s24, %s27
    %p33 = scmp.eq.s32.totalorder %s14, 0
    %p34 = por %p32, %p33
    %p35 = scmp.ne.s32.totalorder %s24, %s27
    %p36 = scmp.eq.s32.totalorder %s19, 1
    %p37 = por %p35, %p36
    %p38 = scmp.ne.s32.totalorder %s27, %s28
    %p39 = scmp.eq.s32.totalorder %s19, 0
    %p40 = por %p38, %p39
    %p41 = scmp.ne.s32.totalorder %s27, %s28
    %p42 = scmp.eq.s32.totalorder %s20, 1
    %p43 = por %p41, %p42
    %p45 = scmp.ne.s32.totalorder %s28, %s44
    %p46 = scmp.eq.s32.totalorder %s20, 0
    %p47 = por %p45, %p46
    %s48 = ssub.s32 %s14, %s21
    %p49 = scmp.eq.s32.totalorder %s48, 0
    %s51 = sadd.s32 %s50, 1
    %s52 = scalar_select %p49, %s50, %s51
    %p55 = pneg %p49
    %p56 = scmp.eq.s32.totalorder %s14, 1
    %p57 = por %p55, %p56
    %p58 = scmp.ne.s32.totalorder %s50, %s53
    %p59 = scmp.eq.s32.totalorder %s14, 0
    %p60 = por %p58, %p59
    %p61 = scmp.ne.s32.totalorder %s50, %s53
    %p62 = scmp.eq.s32.totalorder %s19, 1
    %p63 = por %p61, %p62
    %p64 = scmp.ne.s32.totalorder %s53, %s54
    %p65 = scmp.eq.s32.totalorder %s19, 0
    %p66 = por %p64, %p65
    %p67 = scmp.ne.s32.totalorder %s53, %s54
    %p68 = scmp.eq.s32.totalorder %s20, 1
    %p69 = por %p67, %p68
    %p71 = scmp.ne.s32.totalorder %s54, %s70
    %p72 = scmp.eq.s32.totalorder %s20, 0
    %p73 = por %p71, %p72
    %s75 = sadd.s32 %s74, 1
    %p78 = scmp.eq.s32.totalorder %s14, 1
    %p79 = scmp.ne.s32.totalorder %s74, %s76
    %p80 = scmp.eq.s32.totalorder %s14, 0
    %p81 = por %p79, %p80
    %p82 = scmp.ne.s32.totalorder %s74, %s76
    %p83 = scmp.eq.s32.totalorder %s19, 1
    %p84 = por %p82, %p83
    %p85 = scmp.ne.s32.totalorder %s76, %s77
    %p86 = scmp.eq.s32.totalorder %s19, 0
    %p87 = por %p85, %p86
    %p88 = scmp.ne.s32.totalorder %s76, %s77
    %p89 = scmp.eq.s32.totalorder %s20, 1
    %p90 = por %p88, %p89
    %p92 = scmp.ne.s32.totalorder %s77, %s91
    %p93 = scmp.eq.s32.totalorder %s20, 0
    %p94 = por %p92, %p93
    %s96 = sadd.s32 %s95, 1
    %p99 = scmp.eq.s32.totalorder %s14, 1
    %p100 = scmp.ne.s32.totalorder %s95, %s97
    %p101 = scmp.eq.s32.totalorder %s14, 0
    %p102 = por %p100, %p101
    %p103 = scmp.ne.s32.totalorder %s95, %s97
    %p104 = scmp.eq.s32.totalorder %s19, 1
    %p105 = por %p103, %p104
    %p106 = scmp.ne.s32.totalorder %s97, %s98
    %p107 = scmp.eq.s32.totalorder %s19, 0
    %p108 = por %p106, %p107
    %p109 = scmp.ne.s32.totalorder %s97, %s98
    %p110 = scmp.eq.s32.totalorder %s20, 1
    %p111 = por %p109, %p110
    %p113 = scmp.ne.s32.totalorder %s98, %s112
    %p114 = scmp.eq.s32.totalorder %s20, 0
    %p115 = por %p113, %p114
    %s117 = sadd.s32 %s116, 1
    %p120 = scmp.eq.s32.totalorder %s14, 1
    %p121 = scmp.ne.s32.totalorder %s116, %s118
    %p122 = scmp.eq.s32.totalorder %s14, 0
    %p123 = por %p121, %p122
    %p124 = scmp.ne.s32.totalorder %s116, %s118
    %p125 = scmp.eq.s32.totalorder %s19, 1
    %p126 = por %p124, %p125
    %p127 = scmp.ne.s32.totalorder %s118, %s119
    %p128 = scmp.eq.s32.totalorder %s19, 0
    %p129 = por %p127, %p128
    %p130 = scmp.ne.s32.totalorder %s118, %s119
    %p131 = scmp.eq.s32.totalorder %s20, 1
    %p132 = por %p130, %p131
    %p134 = scmp.ne.s32.totalorder %s119, %s133
    %p135 = scmp.eq.s32.totalorder %s20, 0
    %p136 = por %p134, %p135
    %s138 = sadd.s32 %s137, 1
    %p141 = scmp.eq.s32.totalorder %s14, 1
    %p142 = scmp.ne.s32.totalorder %s137, %s139
    %p143 = scmp.eq.s32.totalorder %s14, 0
    %p144 = por %p142, %p143
    %p145 = scmp.ne.s32.totalorder %s137, %s139
    %p146 = scmp.eq.s32.totalorder %s19, 1
    %p147 = por %p145, %p146
    %p148 = scmp.ne.s32.totalorder %s139, %s140
    %p149 = scmp.eq.s32.totalorder %s19, 0
    %p150 = por %p148, %p149
    %p151 = scmp.ne.s32.totalorder %s139, %s140
    %p152 = scmp.eq.s32.totalorder %s20, 1
    %p153 = por %p151, %p152
    %p155 = scmp.ne.s32.totalorder %s140, %s154
    %p156 = scmp.eq.s32.totalorder %s20, 0
    %p157 = por %p155, %p156
    %s159 = sadd.s32 %s158, 1
    %p162 = scmp.eq.s32.totalorder %s14, 1
    %p163 = scmp.ne.s32.totalorder %s158, %s160
    %p164 = scmp.eq.s32.totalorder %s14, 0
    %p165 = por %p163, %p164
    %p166 = scmp.ne.s32.totalorder %s158, %s160
    %p167 = scmp.eq.s32.totalorder %s19, 1
    %p168 = por %p166, %p167
    %p169 = scmp.ne.s32.totalorder %s160, %s161
    %p170 = scmp.eq.s32.totalorder %s19, 0
    %p171 = por %p169, %p170
    %p172 = scmp.ne.s32.totalorder %s160, %s161
    %p173 = scmp.eq.s32.totalorder %s20, 1
    %p174 = por %p172, %p173
    %p176 = scmp.ne.s32.totalorder %s161, %s175
    %p177 = scmp.eq.s32.totalorder %s20, 0
    %p178 = por %p176, %p177
    %s180 = sadd.s32 %s179, 1
    %p183 = scmp.eq.s32.totalorder %s14, 1
    %p184 = scmp.ne.s32.totalorder %s179, %s181
    %p185 = scmp.eq.s32.totalorder %s14, 0
    %p186 = por %p184, %p185
    %p187 = scmp.ne.s32.totalorder %s179, %s181
    %p188 = scmp.eq.s32.totalorder %s19, 1
    %p189 = por %p187, %p188
    %p190 = scmp.ne.s32.totalorder %s181, %s182
    %p191 = scmp.eq.s32.totalorder %s19, 0
    %p192 = por %p190, %p191
    %p193 = scmp.ne.s32.totalorder %s181, %s182
    %p194 = scmp.eq.s32.totalorder %s20, 1
    %p195 = por %p193, %p194
    %p197 = scmp.ne.s32.totalorder %s182, %s196
    %p198 = scmp.eq.s32.totalorder %s20, 0
    %p199 = por %p197, %p198
    %s200 = ssub.s32 %s14, %s21
    %p201 = scmp.eq.s32.totalorder %s200, 0
    %s203 = sadd.s32 %s202, 1
    %s204 = scalar_select %p201, %s202, %s203
    %p207 = pneg %p201
    %p208 = scmp.eq.s32.totalorder %s14, 1
    %p209 = por %p207, %p208
    %p210 = scmp.ne.s32.totalorder %s202, %s205
    %p211 = scmp.eq.s32.totalorder %s14, 0
    %p212 = por %p210, %p211
    %p213 = scmp.ne.s32.totalorder %s202, %s205
    %p214 = scmp.eq.s32.totalorder %s19, 1
    %p215 = por %p213, %p214
    %p216 = scmp.ne.s32.totalorder %s205, %s206
    %p217 = scmp.eq.s32.totalorder %s19, 0
    %p218 = por %p216, %p217
    %p219 = scmp.ne.s32.totalorder %s205, %s206
    %p220 = scmp.eq.s32.totalorder %s20, 1
    %p221 = por %p219, %p220
    %p223 = scmp.ne.s32.totalorder %s206, %s222
    %p224 = scmp.eq.s32.totalorder %s20, 0
    %p225 = por %p223, %p224
    %p226 = scmp.le.s32.totalorder 1, %s14
    %p227 = scmp.lt.s32.totalorder %s14, 3
    %p228 = pnand %p226, %p227
    %p229 = pneg %p228
    // Predicated region
    $region9: #{upsample_forward.1} parent=5 // pred_check
      _
    $region10: #{upsample_forward.1} parent=5 // pred_check_branch
      %231 = sbr.rel (%p228) target = $region12
    $region11: #{upsample_forward.1} parent=5 // pred_region
      %s232 = ssub.s32 %s14, 1
      // Predicated region
      $region13: #{upsample_forward.1} parent=11 // pred_check
        %p233 = pneg %p87
      $region14: #{upsample_forward.1} parent=11 // pred_check_branch
        %235 = sbr.rel (%p233) target = $region16
      $region15: #{upsample_forward.1} parent=11 // pred_region
        _
      $region16: #{upsample_forward.1} parent=11 // pred_fallthru
        _
      // Predicated region
      $region17: #{upsample_forward.1} parent=11 // pred_check
        %p236 = pneg %p108
      $region18: #{upsample_forward.1} parent=11 // pred_check_branch
        %238 = sbr.rel (%p236) target = $region20
      $region19: #{upsample_forward.1} parent=11 // pred_region
        _
      $region20: #{upsample_forward.1} parent=11 // pred_fallthru
        _
      // Predicated region
      $region21: #{upsample_forward.1} parent=11 // pred_check
        %p239 = pneg %p129
      $region22: #{upsample_forward.1} parent=11 // pred_check_branch
        %241 = sbr.rel (%p239) target = $region24
      $region23: #{upsample_forward.1} parent=11 // pred_region
        _
      $region24: #{upsample_forward.1} parent=11 // pred_fallthru
        _
      // Predicated region
      $region25: #{upsample_forward.1} parent=11 // pred_check
        %p242 = pneg %p150
      $region26: #{upsample_forward.1} parent=11 // pred_check_branch
        %244 = sbr.rel (%p242) target = $region28
      $region27: #{upsample_forward.1} parent=11 // pred_region
        _
      $region28: #{upsample_forward.1} parent=11 // pred_fallthru
        _
      // Predicated region
      $region29: #{upsample_forward.1} parent=11 // pred_check
        %p245 = pneg %p171
      $region30: #{upsample_forward.1} parent=11 // pred_check_branch
        %247 = sbr.rel (%p245) target = $region32
      $region31: #{upsample_forward.1} parent=11 // pred_region
        _
      $region32: #{upsample_forward.1} parent=11 // pred_fallthru
        _
      // Predicated region
      $region33: #{upsample_forward.1} parent=11 // pred_check
        %p248 = pneg %p192
      $region34: #{upsample_forward.1} parent=11 // pred_check_branch
        %250 = sbr.rel (%p248) target = $region36
      $region35: #{upsample_forward.1} parent=11 // pred_region
        _
      $region36: #{upsample_forward.1} parent=11 // pred_fallthru
        _
    $region12: #{upsample_forward.1} parent=5 // pred_fallthru
      _
    %p251 = scmp.lt.s32.totalorder %s14, 2
    // Predicated region
    $region37: #{upsample_forward.1} parent=5 // pred_check
      %p252 = pneg %p251
    $region38: #{upsample_forward.1} parent=5 // pred_check_branch
      %254 = sbr.rel (%p252) target = $region40
    $region39: #{upsample_forward.1} parent=5 // pred_region
      // Predicated region
      $region41: #{upsample_forward.1} parent=39 // pred_check
        %p255 = pneg %p34
      $region42: #{upsample_forward.1} parent=39 // pred_check_branch
        %257 = sbr.rel (%p255) target = $region44
      $region43: #{upsample_forward.1} parent=39 // pred_region
        %p258 = scmp.lt.s32.totalorder %s14, 1
        %s259 = scalar_select %p258, %s14, 1
        %s260 = smul.addr %s259, 4
        %s261 = scalar_lea.vmem %s0, %s260
      $region44: #{upsample_forward.1} parent=39 // pred_fallthru
        _
      // Predicated region
      $region45: #{upsample_forward.1} parent=39 // pred_check
        %p262 = pneg %p60
      $region46: #{upsample_forward.1} parent=39 // pred_check_branch
        %264 = sbr.rel (%p262) target = $region48
      $region47: #{upsample_forward.1} parent=39 // pred_region
        %p265 = scmp.lt.s32.totalorder %s14, 1
        %s266 = scalar_select %p265, %s14, 1
        %s267 = smul.addr %s266, 32
        %s268 = smul.addr %s267, 4
        %s269 = scalar_lea.vmem %s1, %s268
      $region48: #{upsample_forward.1} parent=39 // pred_fallthru
        _
    $region40: #{upsample_forward.1} parent=5 // pred_fallthru
      _
    %p270 = scmp.le.s32.totalorder 1, %s14
    %p271 = scmp.lt.s32.totalorder %s14, 3
    %p272 = pnand %p270, %p271
    %p273 = pneg %p272
    // Predicated region
    $region49: #{upsample_forward.1} parent=5 // pred_check
      _
    $region50: #{upsample_forward.1} parent=5 // pred_check_branch
      %275 = sbr.rel (%p272) target = $region52
    $region51: #{upsample_forward.1} parent=5 // pred_region
      %s276 = ssub.s32 %s14, 1
      %p277 = scmp.lt.s32.totalorder %s19, 1
      %s278 = scalar_select %p277, %s19, 1
      %s279 = smul.addr %s278, 4
      %s280 = scalar_lea.vmem %s0, %s279
      %p281 = pneg %p40
      %p282 = pneg %p37
      %p283 = scmp.lt.s32.totalorder %s19, 1
      %s284 = scalar_select %p283, %s19, 1
      %s285 = smul.addr %s284, 32
      %s286 = smul.addr %s285, 4
      %s287 = scalar_lea.vmem %s1, %s286
      %p288 = pneg %p66
      %p289 = pneg %p63
      %p290 = pneg %p87
      %p291 = pneg %p84
      %p292 = pneg %p108
      %p293 = pneg %p105
      %p294 = pneg %p129
      %p295 = pneg %p126
      %p296 = pneg %p150
      %p297 = pneg %p147
      %p298 = pneg %p171
      %p299 = pneg %p168
      %p300 = pneg %p192
      %p301 = pneg %p189
      %p302 = pneg %p218
      %p303 = pneg %p215
      %p304 = scmp.lt.s32.totalorder %s19, 1
      %s305 = scalar_select %p304, %s19, 1
      %s306 = smul.addr %s305, 32
      %s307 = smul.addr %s306, 8
      %s308 = scalar_lea.vmem %s8, %s307
      %p309 = scmp.lt.s32.totalorder %s19, 1
      %s310 = scalar_select %p309, %s19, 1
      %s311 = smul.addr %s310, 4
      %s312 = scalar_lea.vmem %s0, %s311
      %p313 = scmp.lt.s32.totalorder %s19, 1
      %s314 = scalar_select %p313, %s19, 1
      %s315 = smul.addr %s314, 32
      %s316 = smul.addr %s315, 4
      %s317 = scalar_lea.vmem %s1, %s316
      %p318 = scmp.lt.s32.totalorder %s19, 1
      %s319 = scalar_select %p318, %s19, 1
      %s320 = smul.addr %s319, 32
      %s321 = smul.addr %s320, 8
      %s322 = scalar_lea.vmem %s8, %s321
      %v324 = vld [vmem:[%s2] sm:$0xf]
      %v325 = vld [vmem:[%s2 + $0x4] sm:$0xf]
      %v326 = vld [vmem:[%s312] sm:$0xf]
      %v329 = vunpack.c.l.b16 %v324
      %v330 = vunpack.c.l.b16 %v325
      %v331 = vpack.c.b16 %v330, %v329
      %vm332 = vcmask 64512
      %v334 = vsel %vm332, %v331, 0
      %vm336 = vcmask 1043456
      %v338 = vsel %vm336, %v326, 0
      %340 = vmatprep.subr.bf16.mxu0 0
      %341 = vmatpush1.bf16.msra.mxu0 %v338
      %342 = vmatprep.subr.bf16.mxu0 0
      %343 = vmatpush1.bf16.msra.mxu0 0
      %344 = vmatprep.subr.bf16.mxu0 0
      %345 = vmatpush1.bf16.msra.mxu0 0
      %346 = vmatprep.subr.bf16.mxu0 0
      %347 = vmatpush1.bf16.msra.mxu0 0
      %348 = vmatprep.subr.bf16.mxu0 0
      %349 = vmatpush1.bf16.msra.mxu0 0
      %350 = vmatprep.subr.bf16.mxu0 0
      %351 = vmatpush1.bf16.msra.mxu0 0
      %352 = vmatprep.subr.bf16.mxu0 0
      %353 = vmatpush1.bf16.msra.mxu0 0
      %354 = vmatprep.subr.bf16.mxu0 0
      %355 = vmatpush1.bf16.msra.mxu0 0
      %356 = vmatprep.subr.bf16.mxu0 0
      %357 = vmatpush1.bf16.msra.mxu0 0
      %358 = vmatprep.subr.bf16.mxu0 0
      %359 = vmatpush1.bf16.msra.mxu0 0
      %360 = vmatprep.subr.bf16.mxu0 0
      %361 = vmatpush1.bf16.msra.mxu0 0
      %362 = vmatprep.subr.bf16.mxu0 0
      %363 = vmatpush1.bf16.msra.mxu0 0
      %364 = vmatprep.subr.bf16.mxu0 0
      %365 = vmatpush1.bf16.msra.mxu0 0
      %366 = vmatprep.subr.bf16.mxu0 0
      %367 = vmatpush1.bf16.msra.mxu0 0
      %368 = vmatprep.subr.bf16.mxu0 0
      %369 = vmatpush1.bf16.msra.mxu0 0
      %370 = vmatprep.subr.bf16.mxu0 0
      %371 = vmatpush1.bf16.msra.mxu0 0
      %372 = vmatprep.mubr.bf16.mxu0 0
      %373 = vmatmul.mubr.bf16.gmra.mrb[0].mxu0 %v334
      %v374 = vpop.f32.mrb[0].mxu0
      %v375 = vadd.f32 0.0, %v374
      %v376 = vpop.f32.mrb[0].mxu0
      %v377 = vpop.f32.mrb[0].mxu0
      %v378 = vadd.f32 0.0, %v377
      %v379 = vpop.f32.mrb[0].mxu0
      %380 = vdwg.mxu0
      %v381 = vpack.c.bf16 %v378, %v375
      %383 = vrot.lane.b32.xlu0 %v381, 120
      %v384 = vpop.permute.xlu0 %383
      %385 = vrot.lane.b32.xlu0 %v381, 112
      %v386 = vpop.permute.xlu0 %385
      %387 = vrot.lane.b32.xlu0 %v381, 104
      %v388 = vpop.permute.xlu0 %387
      %389 = vrot.lane.b32.xlu0 %v381, 96
      %v390 = vpop.permute.xlu0 %389
      %391 = vrot.lane.b32.xlu0 %v381, 88
      %v392 = vpop.permute.xlu0 %391
      %393 = vrot.lane.b32.xlu0 %v381, 80
      %v394 = vpop.permute.xlu0 %393
      %395 = vrot.lane.b32.xlu0 %v381, 72
      %v396 = vpop.permute.xlu0 %395
      %v399 = vpack.i.b16 %v384, %v381
      %v401 = vshrl.u32 %v381, 16
      %v402 = vshrl.u32 %v384, 16
      %v403 = vpack.i.b16 %v402, %v401
      %v407 = vpack.i.b16 %v388, %v386
      %v409 = vshrl.u32 %v386, 16
      %v410 = vshrl.u32 %v388, 16
      %v411 = vpack.i.b16 %v410, %v409
      %v415 = vpack.i.b16 %v392, %v390
      %v417 = vshrl.u32 %v390, 16
      %v418 = vshrl.u32 %v392, 16
      %v419 = vpack.i.b16 %v418, %v417
      %v423 = vpack.i.b16 %v396, %v394
      %v425 = vshrl.u32 %v394, 16
      %v426 = vshrl.u32 %v396, 16
      %v427 = vpack.i.b16 %v426, %v425
      %v429 = vcombine.low %v399, %v415
      %v430 = vcombine.high %v399, %v415
      %v432 = vunpack.c.l.s4 1983009808
      %v433 = vunpack.c.0.s8 %v432
      %v434 = vlaneseq
      %v435 = vshrl.u32 %v434, 7
      %v436 = vsub.s32 %v433, %v435
      %v437 = vrot.slane %v429, %v436
      %v439 = vunpack.c.l.s4 1983009808
      %v440 = vunpack.c.0.s8 %v439
      %v441 = vlaneseq
      %v442 = vshrl.u32 %v441, 7
      %v443 = vsub.s32 %v440, %v442
      %v444 = vrot.slane %v430, %v443
      %v445 = vcombine.low %v407, %v423
      %v446 = vcombine.high %v407, %v423
      %v448 = vunpack.c.l.s4 1983009808
      %v449 = vunpack.c.0.s8 %v448
      %v450 = vlaneseq
      %v451 = vshrl.u32 %v450, 7
      %v452 = vsub.s32 %v449, %v451
      %v453 = vrot.slane %v445, %v452
      %v455 = vunpack.c.l.s4 1983009808
      %v456 = vunpack.c.0.s8 %v455
      %v457 = vlaneseq
      %v458 = vshrl.u32 %v457, 7
      %v459 = vsub.s32 %v456, %v458
      %v460 = vrot.slane %v446, %v459
      %v461 = vcombine.low %v437, %v453
      %v462 = vcombine.high %v437, %v453
      %v464 = vunpack.c.l.s4 1934713408
      %v465 = vunpack.c.0.s8 %v464
      %v466 = vlaneseq
      %v467 = vshrl.u32 %v466, 7
      %v468 = vsub.s32 %v465, %v467
      %v469 = vrot.slane %v461, %v468
      %v471 = vunpack.c.l.s4 1934713408
      %v472 = vunpack.c.0.s8 %v471
      %v473 = vlaneseq
      %v474 = vshrl.u32 %v473, 7
      %v475 = vsub.s32 %v472, %v474
      %v476 = vrot.slane %v462, %v475
      %v477 = vcombine.low %v444, %v460
      %v478 = vcombine.high %v444, %v460
      %v480 = vunpack.c.l.s4 1934713408
      %v481 = vunpack.c.0.s8 %v480
      %v482 = vlaneseq
      %v483 = vshrl.u32 %v482, 7
      %v484 = vsub.s32 %v481, %v483
      %v485 = vrot.slane %v477, %v484
      %v487 = vunpack.c.l.s4 1934713408
      %v488 = vunpack.c.0.s8 %v487
      %v489 = vlaneseq
      %v490 = vshrl.u32 %v489, 7
      %v491 = vsub.s32 %v488, %v490
      %v492 = vrot.slane %v478, %v491
      %v493 = vcombine.high %v469, 0
      %v494 = vcombine.high %v476, 0
      %v495 = vcombine.high %v485, 0
      %v496 = vcombine.high %v492, 0
      %v497 = vcombine.low %v403, %v419
      %v498 = vcombine.high %v403, %v419
      %v500 = vunpack.c.l.s4 1983009808
      %v501 = vunpack.c.0.s8 %v500
      %v502 = vlaneseq
      %v503 = vshrl.u32 %v502, 7
      %v504 = vsub.s32 %v501, %v503
      %v505 = vrot.slane %v497, %v504
      %v507 = vunpack.c.l.s4 1983009808
      %v508 = vunpack.c.0.s8 %v507
      %v509 = vlaneseq
      %v510 = vshrl.u32 %v509, 7
      %v511 = vsub.s32 %v508, %v510
      %v512 = vrot.slane %v498, %v511
      %v513 = vcombine.low %v411, %v427
      %v514 = vcombine.high %v411, %v427
      %v516 = vunpack.c.l.s4 1983009808
      %v517 = vunpack.c.0.s8 %v516
      %v518 = vlaneseq
      %v519 = vshrl.u32 %v518, 7
      %v520 = vsub.s32 %v517, %v519
      %v521 = vrot.slane %v513, %v520
      %v523 = vunpack.c.l.s4 1983009808
      %v524 = vunpack.c.0.s8 %v523
      %v525 = vlaneseq
      %v526 = vshrl.u32 %v525, 7
      %v527 = vsub.s32 %v524, %v526
      %v528 = vrot.slane %v514, %v527
      %v529 = vcombine.low %v505, %v521
      %v530 = vcombine.high %v505, %v521
      %v532 = vunpack.c.l.s4 1934713408
      %v533 = vunpack.c.0.s8 %v532
      %v534 = vlaneseq
      %v535 = vshrl.u32 %v534, 7
      %v536 = vsub.s32 %v533, %v535
      %v537 = vrot.slane %v529, %v536
      %v539 = vunpack.c.l.s4 1934713408
      %v540 = vunpack.c.0.s8 %v539
      %v541 = vlaneseq
      %v542 = vshrl.u32 %v541, 7
      %v543 = vsub.s32 %v540, %v542
      %v544 = vrot.slane %v530, %v543
      %v545 = vcombine.low %v512, %v528
      %v546 = vcombine.high %v512, %v528
      %v548 = vunpack.c.l.s4 1934713408
      %v549 = vunpack.c.0.s8 %v548
      %v550 = vlaneseq
      %v551 = vshrl.u32 %v550, 7
      %v552 = vsub.s32 %v549, %v551
      %v553 = vrot.slane %v545, %v552
      %v555 = vunpack.c.l.s4 1934713408
      %v556 = vunpack.c.0.s8 %v555
      %v557 = vlaneseq
      %v558 = vshrl.u32 %v557, 7
      %v559 = vsub.s32 %v556, %v558
      %v560 = vrot.slane %v546, %v559
      %v561 = vcombine.high %v537, 0
      %v562 = vcombine.high %v544, 0
      %v563 = vcombine.high %v553, 0
      %v564 = vcombine.high %v560, 0
      %v565 = vld [vmem:[%s3] sm:$0xf]
      %v566 = vld [vmem:[%s3 + $0x4] sm:$0xf]
      %v567 = vld [vmem:[%s3 + $0x8] sm:$0xf]
      %v568 = vld [vmem:[%s3 + $0xc] sm:$0xf]
      %v569 = vld [vmem:[%s3 + $0x10] sm:$0xf]
      %v570 = vld [vmem:[%s3 + $0x14] sm:$0xf]
      %v571 = vld [vmem:[%s3 + $0x18] sm:$0xf]
      %v572 = vld [vmem:[%s3 + $0x1c] sm:$0xf]
      %v573 = vld [vmem:[%s3 + $0x20] sm:$0xf]
      %v574 = vld [vmem:[%s3 + $0x24] sm:$0xf]
      %v575 = vld [vmem:[%s3 + $0x28] sm:$0xf]
      %v576 = vld [vmem:[%s3 + $0x2c] sm:$0xf]
      %v577 = vld [vmem:[%s3 + $0x30] sm:$0xf]
      %v578 = vld [vmem:[%s3 + $0x34] sm:$0xf]
      %v579 = vld [vmem:[%s3 + $0x38] sm:$0xf]
      %v580 = vld [vmem:[%s3 + $0x3c] sm:$0xf]
      %v581 = vld [vmem:[%s3 + $0x40] sm:$0xf]
      %v582 = vld [vmem:[%s3 + $0x44] sm:$0xf]
      %v583 = vld [vmem:[%s3 + $0x48] sm:$0xf]
      %v584 = vld [vmem:[%s3 + $0x4c] sm:$0xf]
      %v585 = vld [vmem:[%s3 + $0x50] sm:$0xf]
      %v586 = vld [vmem:[%s3 + $0x54] sm:$0xf]
      %v587 = vld [vmem:[%s3 + $0x58] sm:$0xf]
      %v588 = vld [vmem:[%s3 + $0x5c] sm:$0xf]
      %v589 = vld [vmem:[%s3 + $0x60] sm:$0xf]
      %v590 = vld [vmem:[%s3 + $0x64] sm:$0xf]
      %v591 = vld [vmem:[%s3 + $0x68] sm:$0xf]
      %v592 = vld [vmem:[%s3 + $0x6c] sm:$0xf]
      %v593 = vld [vmem:[%s3 + $0x70] sm:$0xf]
      %v594 = vld [vmem:[%s3 + $0x74] sm:$0xf]
      %v595 = vld [vmem:[%s3 + $0x78] sm:$0xf]
      %v596 = vld [vmem:[%s3 + $0x7c] sm:$0xf]
      %v599 = vunpack.c.l.b16 %v565
      %v600 = vunpack.c.l.b16 %v566
      %v601 = vpack.c.b16 %v600, %v599
      %v603 = vsel %vm332, %v601, 0
      %v606 = vsel %vm336, %v469, 0
      %608 = vmatprep.subr.bf16.mxu0 0
      %609 = vmatpush1.bf16.msra.mxu0 %v606
      %610 = vmatprep.subr.bf16.mxu0 0
      %611 = vmatpush1.bf16.msra.mxu0 0
      %612 = vmatprep.subr.bf16.mxu0 0
      %613 = vmatpush1.bf16.msra.mxu0 0
      %614 = vmatprep.subr.bf16.mxu0 0
      %615 = vmatpush1.bf16.msra.mxu0 0
      %616 = vmatprep.subr.bf16.mxu0 0
      %617 = vmatpush1.bf16.msra.mxu0 0
      %618 = vmatprep.subr.bf16.mxu0 0
      %619 = vmatpush1.bf16.msra.mxu0 0
      %620 = vmatprep.subr.bf16.mxu0 0
      %621 = vmatpush1.bf16.msra.mxu0 0
      %622 = vmatprep.subr.bf16.mxu0 0
      %623 = vmatpush1.bf16.msra.mxu0 0
      %624 = vmatprep.subr.bf16.mxu0 0
      %625 = vmatpush1.bf16.msra.mxu0 0
      %626 = vmatprep.subr.bf16.mxu0 0
      %627 = vmatpush1.bf16.msra.mxu0 0
      %628 = vmatprep.subr.bf16.mxu0 0
      %629 = vmatpush1.bf16.msra.mxu0 0
      %630 = vmatprep.subr.bf16.mxu0 0
      %631 = vmatpush1.bf16.msra.mxu0 0
      %632 = vmatprep.subr.bf16.mxu0 0
      %633 = vmatpush1.bf16.msra.mxu0 0
      %634 = vmatprep.subr.bf16.mxu0 0
      %635 = vmatpush1.bf16.msra.mxu0 0
      %636 = vmatprep.subr.bf16.mxu0 0
      %637 = vmatpush1.bf16.msra.mxu0 0
      %638 = vmatprep.subr.bf16.mxu0 0
      %639 = vmatpush1.bf16.msra.mxu0 0
      %640 = vmatprep.mubr.bf16.mxu0 0
      %641 = vmatmul.mubr.bf16.gmra.mrb[0].mxu0 %v603
      %v642 = vpop.f32.mrb[0].mxu0
      %v643 = vadd.f32 0.0, %v642
      %v644 = vpop.f32.mrb[0].mxu0
      %v645 = vpop.f32.mrb[0].mxu0
      %v646 = vadd.f32 0.0, %v645
      %v647 = vpop.f32.mrb[0].mxu0
      %648 = vdwg.mxu0
      %v651 = vunpack.c.l.b16 %v567
      %v652 = vunpack.c.l.b16 %v568
      %v653 = vpack.c.b16 %v652, %v651
      %v655 = vsel %vm332, %v653, 0
      %v658 = vsel %vm336, %v537, 0
      %660 = vmatprep.subr.bf16.mxu0 0
      %661 = vmatpush1.bf16.msra.mxu0 %v658
      %662 = vmatprep.subr.bf16.mxu0 0
      %663 = vmatpush1.bf16.msra.mxu0 0
      %664 = vmatprep.subr.bf16.mxu0 0
      %665 = vmatpush1.bf16.msra.mxu0 0
      %666 = vmatprep.subr.bf16.mxu0 0
      %667 = vmatpush1.bf16.msra.mxu0 0
      %668 = vmatprep.subr.bf16.mxu0 0
      %669 = vmatpush1.bf16.msra.mxu0 0
      %670 = vmatprep.subr.bf16.mxu0 0
      %671 = vmatpush1.bf16.msra.mxu0 0
      %672 = vmatprep.subr.bf16.mxu0 0
      %673 = vmatpush1.bf16.msra.mxu0 0
      %674 = vmatprep.subr.bf16.mxu0 0
      %675 = vmatpush1.bf16.msra.mxu0 0
      %676 = vmatprep.subr.bf16.mxu0 0
      %677 = vmatpush1.bf16.msra.mxu0 0
      %678 = vmatprep.subr.bf16.mxu0 0
      %679 = vmatpush1.bf16.msra.mxu0 0
      %680 = vmatprep.subr.bf16.mxu0 0
      %681 = vmatpush1.bf16.msra.mxu0 0
      %682 = vmatprep.subr.bf16.mxu0 0
      %683 = vmatpush1.bf16.msra.mxu0 0
      %684 = vmatprep.subr.bf16.mxu0 0
      %685 = vmatpush1.bf16.msra.mxu0 0
      %686 = vmatprep.subr.bf16.mxu0 0
      %687 = vmatpush1.bf16.msra.mxu0 0
      %688 = vmatprep.subr.bf16.mxu0 0
      %689 = vmatpush1.bf16.msra.mxu0 0
      %690 = vmatprep.subr.bf16.mxu0 0
      %691 = vmatpush1.bf16.msra.mxu0 0
      %692 = vmatprep.mubr.bf16.mxu0 0
      %693 = vmatmul.mubr.bf16.gmra.mrb[0].mxu0 %v655
      %v694 = vpop.f32.mrb[0].mxu0
      %v695 = vadd.f32 0.0, %v694
      %v696 = vpop.f32.mrb[0].mxu0
      %v697 = vpop.f32.mrb[0].mxu0
      %v698 = vadd.f32 0.0, %v697
      %v699 = vpop.f32.mrb[0].mxu0
      %700 = vdwg.mxu0
      %v703 = vunpack.c.l.b16 %v569
      %v704 = vunpack.c.l.b16 %v570
      %v705 = vpack.c.b16 %v704, %v703
      %v707 = vsel %vm332, %v705, 0
      %v710 = vsel %vm336, %v493, 0
      %712 = vmatprep.subr.bf16.mxu0 0
      %713 = vmatpush1.bf16.msra.mxu0 %v710
      %714 = vmatprep.subr.bf16.mxu0 0
      %715 = vmatpush1.bf16.msra.mxu0 0
      %716 = vmatprep.subr.bf16.mxu0 0
      %717 = vmatpush1.bf16.msra.mxu0 0
      %718 = vmatprep.subr.bf16.mxu0 0
      %719 = vmatpush1.bf16.msra.mxu0 0
      %720 = vmatprep.subr.bf16.mxu0 0
      %721 = vmatpush1.bf16.msra.mxu0 0
      %722 = vmatprep.subr.bf16.mxu0 0
      %723 = vmatpush1.bf16.msra.mxu0 0
      %724 = vmatprep.subr.bf16.mxu0 0
      %725 = vmatpush1.bf16.msra.mxu0 0
      %726 = vmatprep.subr.bf16.mxu0 0
      %727 = vmatpush1.bf16.msra.mxu0 0
      %728 = vmatprep.subr.bf16.mxu0 0
      %729 = vmatpush1.bf16.msra.mxu0 0
      %730 = vmatprep.subr.bf16.mxu0 0
      %731 = vmatpush1.bf16.msra.mxu0 0
      %732 = vmatprep.subr.bf16.mxu0 0
      %733 = vmatpush1.bf16.msra.mxu0 0
      %734 = vmatprep.subr.bf16.mxu0 0
      %735 = vmatpush1.bf16.msra.mxu0 0
      %736 = vmatprep.subr.bf16.mxu0 0
      %737 = vmatpush1.bf16.msra.mxu0 0
      %738 = vmatprep.subr.bf16.mxu0 0
      %739 = vmatpush1.bf16.msra.mxu0 0
      %740 = vmatprep.subr.bf16.mxu0 0
      %741 = vmatpush1.bf16.msra.mxu0 0
      %742 = vmatprep.subr.bf16.mxu0 0
      %743 = vmatpush1.bf16.msra.mxu0 0
      %744 = vmatprep.mubr.bf16.mxu0 0
      %745 = vmatmul.mubr.bf16.gmra.mrb[0].mxu0 %v707
      %v746 = vpop.f32.mrb[0].mxu0
      %v747 = vadd.f32 0.0, %v746
      %v748 = vpop.f32.mrb[0].mxu0
      %v749 = vpop.f32.mrb[0].mxu0
      %v750 = vadd.f32 0.0, %v749
      %v751 = vpop.f32.mrb[0].mxu0
      %752 = vdwg.mxu0
      %v755 = vunpack.c.l.b16 %v571
      %v756 = vunpack.c.l.b16 %v572
      %v757 = vpack.c.b16 %v756, %v755
      %v759 = vsel %vm332, %v757, 0
      %v762 = vsel %vm336, %v561, 0
      %764 = vmatprep.subr.bf16.mxu0 0
      %765 = vmatpush1.bf16.msra.mxu0 %v762
      %766 = vmatprep.subr.bf16.mxu0 0
      %767 = vmatpush1.bf16.msra.mxu0 0
      %768 = vmatprep.subr.bf16.mxu0 0
      %769 = vmatpush1.bf16.msra.mxu0 0
      %770 = vmatprep.subr.bf16.mxu0 0
      %771 = vmatpush1.bf16.msra.mxu0 0
      %772 = vmatprep.subr.bf16.mxu0 0
      %773 = vmatpush1.bf16.msra.mxu0 0
      %774 = vmatprep.subr.bf16.mxu0 0
      %775 = vmatpush1.bf16.msra.mxu0 0
      %776 = vmatprep.subr.bf16.mxu0 0
      %777 = vmatpush1.bf16.msra.mxu0 0
      %778 = vmatprep.subr.bf16.mxu0 0
      %779 = vmatpush1.bf16.msra.mxu0 0
      %780 = vmatprep.subr.bf16.mxu0 0
      %781 = vmatpush1.bf16.msra.mxu0 0
      %782 = vmatprep.subr.bf16.mxu0 0
      %783 = vmatpush1.bf16.msra.mxu0 0
      %784 = vmatprep.subr.bf16.mxu0 0
      %785 = vmatpush1.bf16.msra.mxu0 0
      %786 = vmatprep.subr.bf16.mxu0 0
      %787 = vmatpush1.bf16.msra.mxu0 0
      %788 = vmatprep.subr.bf16.mxu0 0
      %789 = vmatpush1.bf16.msra.mxu0 0
      %790 = vmatprep.subr.bf16.mxu0 0
      %791 = vmatpush1.bf16.msra.mxu0 0
      %792 = vmatprep.subr.bf16.mxu0 0
      %793 = vmatpush1.bf16.msra.mxu0 0
      %794 = vmatprep.subr.bf16.mxu0 0
      %795 = vmatpush1.bf16.msra.mxu0 0
      %796 = vmatprep.mubr.bf16.mxu0 0
      %797 = vmatmul.mubr.bf16.gmra.mrb[0].mxu0 %v759
      %v798 = vpop.f32.mrb[0].mxu0
      %v799 = vadd.f32 0.0, %v798
      %v800 = vpop.f32.mrb[0].mxu0
      %v801 = vpop.f32.mrb[0].mxu0
      %v802 = vadd.f32 0.0, %v801
      %v803 = vpop.f32.mrb[0].mxu0
      %804 = vdwg.mxu0
      %v807 = vunpack.c.l.b16 %v573
      %v808 = vunpack.c.l.b16 %v574
      %v809 = vpack.c.b16 %v808, %v807
      %v811 = vsel %vm332, %v809, 0
      %v814 = vsel %vm336, %v476, 0
      %816 = vmatprep.subr.bf16.mxu0 0
      %817 = vmatpush1.bf16.msra.mxu0 %v814
      %818 = vmatprep.subr.bf16.mxu0 0
      %819 = vmatpush1.bf16.msra.mxu0 0
      %820 = vmatprep.subr.bf16.mxu0 0
      %821 = vmatpush1.bf16.msra.mxu0 0
      %822 = vmatprep.subr.bf16.mxu0 0
      %823 = vmatpush1.bf16.msra.mxu0 0
      %824 = vmatprep.subr.bf16.mxu0 0
      %825 = vmatpush1.bf16.msra.mxu0 0
      %826 = vmatprep.subr.bf16.mxu0 0
      %827 = vmatpush1.bf16.msra.mxu0 0
      %828 = vmatprep.subr.bf16.mxu0 0
      %829 = vmatpush1.bf16.msra.mxu0 0
      %830 = vmatprep.subr.bf16.mxu0 0
      %831 = vmatpush1.bf16.msra.mxu0 0
      %832 = vmatprep.subr.bf16.mxu0 0
      %833 = vmatpush1.bf16.msra.mxu0 0
      %834 = vmatprep.subr.bf16.mxu0 0
      %835 = vmatpush1.bf16.msra.mxu0 0
      %836 = vmatprep.subr.bf16.mxu0 0
      %837 = vmatpush1.bf16.msra.mxu0 0
      %838 = vmatprep.subr.bf16.mxu0 0
      %839 = vmatpush1.bf16.msra.mxu0 0
      %840 = vmatprep.subr.bf16.mxu0 0
      %841 = vmatpush1.bf16.msra.mxu0 0
      %842 = vmatprep.subr.bf16.mxu0 0
      %843 = vmatpush1.bf16.msra.mxu0 0
      %844 = vmatprep.subr.bf16.mxu0 0
      %845 = vmatpush1.bf16.msra.mxu0 0
      %846 = vmatprep.subr.bf16.mxu0 0
      %847 = vmatpush1.bf16.msra.mxu0 0
      %848 = vmatprep.mubr.bf16.mxu0 0
      %849 = vmatmul.mubr.bf16.gmra.mrb[0].mxu0 %v811
      %v850 = vpop.f32.mrb[0].mxu0
      %v851 = vadd.f32 0.0, %v850
      %v852 = vpop.f32.mrb[0].mxu0
      %v853 = vpop.f32.mrb[0].mxu0
      %v854 = vadd.f32 0.0, %v853
      %v855 = vpop.f32.mrb[0].mxu0
      %856 = vdwg.mxu0
      %v859 = vunpack.c.l.b16 %v575
      %v860 = vunpack.c.l.b16 %v576
      %v861 = vpack.c.b16 %v860, %v859
      %v863 = vsel %vm332, %v861, 0
      %v866 = vsel %vm336, %v544, 0
      %868 = vmatprep.subr.bf16.mxu0 0
      %869 = vmatpush1.bf16.msra.mxu0 %v866
      %870 = vmatprep.subr.bf16.mxu0 0
      %871 = vmatpush1.bf16.msra.mxu0 0
      %872 = vmatprep.subr.bf16.mxu0 0
      %873 = vmatpush1.bf16.msra.mxu0 0
      %874 = vmatprep.subr.bf16.mxu0 0
      %875 = vmatpush1.bf16.msra.mxu0 0
      %876 = vmatprep.subr.bf16.mxu0 0
      %877 = vmatpush1.bf16.msra.mxu0 0
      %878 = vmatprep.subr.bf16.mxu0 0
      %879 = vmatpush1.bf16.msra.mxu0 0
      %880 = vmatprep.subr.bf16.mxu0 0
      %881 = vmatpush1.bf16.msra.mxu0 0
      %882 = vmatprep.subr.bf16.mxu0 0
      %883 = vmatpush1.bf16.msra.mxu0 0
      %884 = vmatprep.subr.bf16.mxu0 0
      %885 = vmatpush1.bf16.msra.mxu0 0
      %886 = vmatprep.subr.bf16.mxu0 0
      %887 = vmatpush1.bf16.msra.mxu0 0
      %888 = vmatprep.subr.bf16.mxu0 0
      %889 = vmatpush1.bf16.msra.mxu0 0
      %890 = vmatprep.subr.bf16.mxu0 0
      %891 = vmatpush1.bf16.msra.mxu0 0
      %892 = vmatprep.subr.bf16.mxu0 0
      %893 = vmatpush1.bf16.msra.mxu0 0
      %894 = vmatprep.subr.bf16.mxu0 0
      %895 = vmatpush1.bf16.msra.mxu0 0
      %896 = vmatprep.subr.bf16.mxu0 0
      %897 = vmatpush1.bf16.msra.mxu0 0
      %898 = vmatprep.subr.bf16.mxu0 0
      %899 = vmatpush1.bf16.msra.mxu0 0
      %900 = vmatprep.mubr.bf16.mxu0 0
      %901 = vmatmul.mubr.bf16.gmra.mrb[0].mxu0 %v863
      %v902 = vpop.f32.mrb[0].mxu0
      %v903 = vadd.f32 0.0, %v902
      %v904 = vpop.f32.mrb[0].mxu0
      %v905 = vpop.f32.mrb[0].mxu0
      %v906 = vadd.f32 0.0, %v905
      %v907 = vpop.f32.mrb[0].mxu0
      %908 = vdwg.mxu0
      %v911 = vunpack.c.l.b16 %v577
      %v912 = vunpack.c.l.b16 %v578
      %v913 = vpack.c.b16 %v912, %v911
      %v915 = vsel %vm332, %v913, 0
      %v918 = vsel %vm336, %v494, 0
      %920 = vmatprep.subr.bf16.mxu0 0
      %921 = vmatpush1.bf16.msra.mxu0 %v918
      %922 = vmatprep.subr.bf16.mxu0 0
      %923 = vmatpush1.bf16.msra.mxu0 0
      %924 = vmatprep.subr.bf16.mxu0 0
      %925 = vmatpush1.bf16.msra.mxu0 0
      %926 = vmatprep.subr.bf16.mxu0 0
      %927 = vmatpush1.bf16.msra.mxu0 0
      %928 = vmatprep.subr.bf16.mxu0 0
      %929 = vmatpush1.bf16.msra.mxu0 0
      %930 = vmatprep.subr.bf16.mxu0 0
      %931 = vmatpush1.bf16.msra.mxu0 0
      %932 = vmatprep.subr.bf16.mxu0 0
      %933 = vmatpush1.bf16.msra.mxu0 0
      %934 = vmatprep.subr.bf16.mxu0 0
      %935 = vmatpush1.bf16.msra.mxu0 0
      %936 = vmatprep.subr.bf16.mxu0 0
      %937 = vmatpush1.bf16.msra.mxu0 0
      %938 = vmatprep.subr.bf16.mxu0 0
      %939 = vmatpush1.bf16.msra.mxu0 0
      %940 = vmatprep.subr.bf16.mxu0 0
      %941 = vmatpush1.bf16.msra.mxu0 0
      %942 = vmatprep.subr.bf16.mxu0 0
      %943 = vmatpush1.bf16.msra.mxu0 0
      %944 = vmatprep.subr.bf16.mxu0 0
      %945 = vmatpush1.bf16.msra.mxu0 0
      %946 = vmatprep.subr.bf16.mxu0 0
      %947 = vmatpush1.bf16.msra.mxu0 0
      %948 = vmatprep.subr.bf16.mxu0 0
      %949 = vmatpush1.bf16.msra.mxu0 0
      %950 = vmatprep.subr.bf16.mxu0 0
      %951 = vmatpush1.bf16.msra.mxu0 0
      %952 = vmatprep.mubr.bf16.mxu0 0
      %953 = vmatmul.mubr.bf16.gmra.mrb[0].mxu0 %v915
      %v954 = vpop.f32.mrb[0].mxu0
      %v955 = vadd.f32 0.0, %v954
      %v956 = vpop.f32.mrb[0].mxu0
      %v957 = vpop.f32.mrb[0].mxu0
      %v958 = vadd.f32 0.0, %v957
      %v959 = vpop.f32.mrb[0].mxu0
      %960 = vdwg.mxu0
      %v963 = vunpack.c.l.b16 %v579
      %v964 = vunpack.c.l.b16 %v580
      %v965 = vpack.c.b16 %v964, %v963
      %v967 = vsel %vm332, %v965, 0
      %v970 = vsel %vm336, %v562, 0
      %972 = vmatprep.subr.bf16.mxu0 0
      %973 = vmatpush1.bf16.msra.mxu0 %v970
      %974 = vmatprep.subr.bf16.mxu0 0
      %975 = vmatpush1.bf16.msra.mxu0 0
      %976 = vmatprep.subr.bf16.mxu0 0
      %977 = vmatpush1.bf16.msra.mxu0 0
      %978 = vmatprep.subr.bf16.mxu0 0
      %979 = vmatpush1.bf16.msra.mxu0 0
      %980 = vmatprep.subr.bf16.mxu0 0
      %981 = vmatpush1.bf16.msra.mxu0 0
      %982 = vmatprep.subr.bf16.mxu0 0
      %983 = vmatpush1.bf16.msra.mxu0 0
      %984 = vmatprep.subr.bf16.mxu0 0
      %985 = vmatpush1.bf16.msra.mxu0 0
      %986 = vmatprep.subr.bf16.mxu0 0
      %987 = vmatpush1.bf16.msra.mxu0 0
      %988 = vmatprep.subr.bf16.mxu0 0
      %989 = vmatpush1.bf16.msra.mxu0 0
      %990 = vmatprep.subr.bf16.mxu0 0
      %991 = vmatpush1.bf16.msra.mxu0 0
      %992 = vmatprep.subr.bf16.mxu0 0
      %993 = vmatpush1.bf16.msra.mxu0 0
      %994 = vmatprep.subr.bf16.mxu0 0
      %995 = vmatpush1.bf16.msra.mxu0 0
      %996 = vmatprep.subr.bf16.mxu0 0
      %997 = vmatpush1.bf16.msra.mxu0 0
      %998 = vmatprep.subr.bf16.mxu0 0
      %999 = vmatpush1.bf16.msra.mxu0 0
      %1000 = vmatprep.subr.bf16.mxu0 0
      %1001 = vmatpush1.bf16.msra.mxu0 0
      %1002 = vmatprep.subr.bf16.mxu0 0
      %1003 = vmatpush1.bf16.msra.mxu0 0
      %1004 = vmatprep.mubr.bf16.mxu0 0
      %1005 = vmatmul.mubr.bf16.gmra.mrb[0].mxu0 %v967
      %v1006 = vpop.f32.mrb[0].mxu0
      %v1007 = vadd.f32 0.0, %v1006
      %v1008 = vpop.f32.mrb[0].mxu0
      %v1009 = vpop.f32.mrb[0].mxu0
      %v1010 = vadd.f32 0.0, %v1009
      %v1011 = vpop.f32.mrb[0].mxu0
      %1012 = vdwg.mxu0
      %v1015 = vunpack.c.l.b16 %v581
      %v1016 = vunpack.c.l.b16 %v582
      %v1017 = vpack.c.b16 %v1016, %v1015
      %v1019 = vsel %vm332, %v1017, 0
      %v1022 = vsel %vm336, %v485, 0
      %1024 = vmatprep.subr.bf16.mxu0 0
      %1025 = vmatpush1.bf16.msra.mxu0 %v1022
      %1026 = vmatprep.subr.bf16.mxu0 0
      %1027 = vmatpush1.bf16.msra.mxu0 0
      %1028 = vmatprep.subr.bf16.mxu0 0
      %1029 = vmatpush1.bf16.msra.mxu0 0
      %1030 = vmatprep.subr.bf16.mxu0 0
      %1031 = vmatpush1.bf16.msra.mxu0 0
      %1032 = vmatprep.subr.bf16.mxu0 0
      %1033 = vmatpush1.bf16.msra.mxu0 0
      %1034 = vmatprep.subr.bf16.mxu0 0
      %1035 = vmatpush1.bf16.msra.mxu0 0
      %1036 = vmatprep.subr.bf16.mxu0 0
      %1037 = vmatpush1.bf16.msra.mxu0 0
      %1038 = vmatprep.subr.bf16.mxu0 0
      %1039 = vmatpush1.bf16.msra.mxu0 0
      %1040 = vmatprep.subr.bf16.mxu0 0
      %1041 = vmatpush1.bf16.msra.mxu0 0
      %1042 = vmatprep.subr.bf16.mxu0 0
      %1043 = vmatpush1.bf16.msra.mxu0 0
      %1044 = vmatprep.subr.bf16.mxu0 0
      %1045 = vmatpush1.bf16.msra.mxu0 0
      %1046 = vmatprep.subr.bf16.mxu0 0
      %1047 = vmatpush1.bf16.msra.mxu0 0
      %1048 = vmatprep.subr.bf16.mxu0 0
      %1049 = vmatpush1.bf16.msra.mxu0 0
      %1050 = vmatprep.subr.bf16.mxu0 0
      %1051 = vmatpush1.bf16.msra.mxu0 0
      %1052 = vmatprep.subr.bf16.mxu0 0
      %1053 = vmatpush1.bf16.msra.mxu0 0
      %1054 = vmatprep.subr.bf16.mxu0 0
      %1055 = vmatpush1.bf16.msra.mxu0 0
      %1056 = vmatprep.mubr.bf16.mxu0 0
      %1057 = vmatmul.mubr.bf16.gmra.mrb[0].mxu0 %v1019
      %v1058 = vpop.f32.mrb[0].mxu0
      %v1059 = vadd.f32 0.0, %v1058
      %v1060 = vpop.f32.mrb[0].mxu0
      %v1061 = vpop.f32.mrb[0].mxu0
      %v1062 = vadd.f32 0.0, %v1061
      %v1063 = vpop.f32.mrb[0].mxu0
      %1064 = vdwg.mxu0
      %v1067 = vunpack.c.l.b16 %v583
      %v1068 = vunpack.c.l.b16 %v584
      %v1069 = vpack.c.b16 %v1068, %v1067
      %v1071 = vsel %vm332, %v1069, 0
      %v1074 = vsel %vm336, %v553, 0
      %1076 = vmatprep.subr.bf16.mxu0 0
      %1077 = vmatpush1.bf16.msra.mxu0 %v1074
      %1078 = vmatprep.subr.bf16.mxu0 0
      %1079 = vmatpush1.bf16.msra.mxu0 0
      %1080 = vmatprep.subr.bf16.mxu0 0
      %1081 = vmatpush1.bf16.msra.mxu0 0
      %1082 = vmatprep.subr.bf16.mxu0 0
      %1083 = vmatpush1.bf16.msra.mxu0 0
      %1084 = vmatprep.subr.bf16.mxu0 0
      %1085 = vmatpush1.bf16.msra.mxu0 0
      %1086 = vmatprep.subr.bf16.mxu0 0
      %1087 = vmatpush1.bf16.msra.mxu0 0
      %1088 = vmatprep.subr.bf16.mxu0 0
      %1089 = vmatpush1.bf16.msra.mxu0 0
      %1090 = vmatprep.subr.bf16.mxu0 0
      %1091 = vmatpush1.bf16.msra.mxu0 0
      %1092 = vmatprep.subr.bf16.mxu0 0
      %1093 = vmatpush1.bf16.msra.mxu0 0
      %1094 = vmatprep.subr.bf16.mxu0 0
      %1095 = vmatpush1.bf16.msra.mxu0 0
      %1096 = vmatprep.subr.bf16.mxu0 0
      %1097 = vmatpush1.bf16.msra.mxu0 0
      %1098 = vmatprep.subr.bf16.mxu0 0
      %1099 = vmatpush1.bf16.msra.mxu0 0
      %1100 = vmatprep.subr.bf16.mxu0 0
      %1101 = vmatpush1.bf16.msra.mxu0 0
      %1102 = vmatprep.subr.bf16.mxu0 0
      %1103 = vmatpush1.bf16.msra.mxu0 0
      %1104 = vmatprep.subr.bf16.mxu0 0
      %1105 = vmatpush1.bf16.msra.mxu0 0
      %1106 = vmatprep.subr.bf16.mxu0 0
      %1107 = vmatpush1.bf16.msra.mxu0 0
      %1108 = vmatprep.mubr.bf16.mxu0 0
      %1109 = vmatmul.mubr.bf16.gmra.mrb[0].mxu0 %v1071
      %v1110 = vpop.f32.mrb[0].mxu0
      %v1111 = vadd.f32 0.0, %v1110
      %v1112 = vpop.f32.mrb[0].mxu0
      %v1113 = vpop.f32.mrb[0].mxu0
      %v1114 = vadd.f32 0.0, %v1113
      %v1115 = vpop.f32.mrb[0].mxu0
      %1116 = vdwg.mxu0
      %v1119 = vunpack.c.l.b16 %v585
      %v1120 = vunpack.c.l.b16 %v586
      %v1121 = vpack.c.b16 %v1120, %v1119
      %v1123 = vsel %vm332, %v1121, 0
      %v1126 = vsel %vm336, %v495, 0
      %1128 = vmatprep.subr.bf16.mxu0 0
      %1129 = vmatpush1.bf16.msra.mxu0 %v1126
      %1130 = vmatprep.subr.bf16.mxu0 0
      %1131 = vmatpush1.bf16.msra.mxu0 0
      %1132 = vmatprep.subr.bf16.mxu0 0
      %1133 = vmatpush1.bf16.msra.mxu0 0
      %1134 = vmatprep.subr.bf16.mxu0 0
      %1135 = vmatpush1.bf16.msra.mxu0 0
      %1136 = vmatprep.subr.bf16.mxu0 0
      %1137 = vmatpush1.bf16.msra.mxu0 0
      %1138 = vmatprep.subr.bf16.mxu0 0
      %1139 = vmatpush1.bf16.msra.mxu0 0
      %1140 = vmatprep.subr.bf16.mxu0 0
      %1141 = vmatpush1.bf16.msra.mxu0 0
      %1142 = vmatprep.subr.bf16.mxu0 0
      %1143 = vmatpush1.bf16.msra.mxu0 0
      %1144 = vmatprep.subr.bf16.mxu0 0
      %1145 = vmatpush1.bf16.msra.mxu0 0
      %1146 = vmatprep.subr.bf16.mxu0 0
      %1147 = vmatpush1.bf16.msra.mxu0 0
      %1148 = vmatprep.subr.bf16.mxu0 0
      %1149 = vmatpush1.bf16.msra.mxu0 0
      %1150 = vmatprep.subr.bf16.mxu0 0
      %1151 = vmatpush1.bf16.msra.mxu0 0
      %1152 = vmatprep.subr.bf16.mxu0 0
      %1153 = vmatpush1.bf16.msra.mxu0 0
      %1154 = vmatprep.subr.bf16.mxu0 0
      %1155 = vmatpush1.bf16.msra.mxu0 0
      %1156 = vmatprep.subr.bf16.mxu0 0
      %1157 = vmatpush1.bf16.msra.mxu0 0
      %1158 = vmatprep.subr.bf16.mxu0 0
      %1159 = vmatpush1.bf16.msra.mxu0 0
      %1160 = vmatprep.mubr.bf16.mxu0 0
      %1161 = vmatmul.mubr.bf16.gmra.mrb[0].mxu0 %v1123
      %v1162 = vpop.f32.mrb[0].mxu0
      %v1163 = vadd.f32 0.0, %v1162
      %v1164 = vpop.f32.mrb[0].mxu0
      %v1165 = vpop.f32.mrb[0].mxu0
      %v1166 = vadd.f32 0.0, %v1165
      %v1167 = vpop.f32.mrb[0].mxu0
      %1168 = vdwg.mxu0
      %v1171 = vunpack.c.l.b16 %v587
      %v1172 = vunpack.c.l.b16 %v588
      %v1173 = vpack.c.b16 %v1172, %v1171
      %v1175 = vsel %vm332, %v1173, 0
      %v1178 = vsel %vm336, %v563, 0
      %1180 = vmatprep.subr.bf16.mxu0 0
      %1181 = vmatpush1.bf16.msra.mxu0 %v1178
      %1182 = vmatprep.subr.bf16.mxu0 0
      %1183 = vmatpush1.bf16.msra.mxu0 0
      %1184 = vmatprep.subr.bf16.mxu0 0
      %1185 = vmatpush1.bf16.msra.mxu0 0
      %1186 = vmatprep.subr.bf16.mxu0 0
      %1187 = vmatpush1.bf16.msra.mxu0 0
      %1188 = vmatprep.subr.bf16.mxu0 0
      %1189 = vmatpush1.bf16.msra.mxu0 0
      %1190 = vmatprep.subr.bf16.mxu0 0
      %1191 = vmatpush1.bf16.msra.mxu0 0
      %1192 = vmatprep.subr.bf16.mxu0 0
      %1193 = vmatpush1.bf16.msra.mxu0 0
      %1194 = vmatprep.subr.bf16.mxu0 0
      %1195 = vmatpush1.bf16.msra.mxu0 0
      %1196 = vmatprep.subr.bf16.mxu0 0
      %1197 = vmatpush1.bf16.msra.mxu0 0
      %1198 = vmatprep.subr.bf16.mxu0 0
      %1199 = vmatpush1.bf16.msra.mxu0 0
      %1200 = vmatprep.subr.bf16.mxu0 0
      %1201 = vmatpush1.bf16.msra.mxu0 0
      %1202 = vmatprep.subr.bf16.mxu0 0
      %1203 = vmatpush1.bf16.msra.mxu0 0
      %1204 = vmatprep.subr.bf16.mxu0 0
      %1205 = vmatpush1.bf16.msra.mxu0 0
      %1206 = vmatprep.subr.bf16.mxu0 0
      %1207 = vmatpush1.bf16.msra.mxu0 0
      %1208 = vmatprep.subr.bf16.mxu0 0
      %1209 = vmatpush1.bf16.msra.mxu0 0
      %1210 = vmatprep.subr.bf16.mxu0 0
      %1211 = vmatpush1.bf16.msra.mxu0 0
      %1212 = vmatprep.mubr.bf16.mxu0 0
      %1213 = vmatmul.mubr.bf16.gmra.mrb[0].mxu0 %v1175
      %v1214 = vpop.f32.mrb[0].mxu0
      %v1215 = vadd.f32 0.0, %v1214
      %v1216 = vpop.f32.mrb[0].mxu0
      %v1217 = vpop.f32.mrb[0].mxu0
      %v1218 = vadd.f32 0.0, %v1217
      %v1219 = vpop.f32.mrb[0].mxu0
      %1220 = vdwg.mxu0
      %v1223 = vunpack.c.l.b16 %v589
      %v1224 = vunpack.c.l.b16 %v590
      %v1225 = vpack.c.b16 %v1224, %v1223
      %v1227 = vsel %vm332, %v1225, 0
      %v1230 = vsel %vm336, %v492, 0
      %1232 = vmatprep.subr.bf16.mxu0 0
      %1233 = vmatpush1.bf16.msra.mxu0 %v1230
      %1234 = vmatprep.subr.bf16.mxu0 0
      %1235 = vmatpush1.bf16.msra.mxu0 0
      %1236 = vmatprep.subr.bf16.mxu0 0
      %1237 = vmatpush1.bf16.msra.mxu0 0
      %1238 = vmatprep.subr.bf16.mxu0 0
      %1239 = vmatpush1.bf16.msra.mxu0 0
      %1240 = vmatprep.subr.bf16.mxu0 0
      %1241 = vmatpush1.bf16.msra.mxu0 0
      %1242 = vmatprep.subr.bf16.mxu0 0
      %1243 = vmatpush1.bf16.msra.mxu0 0
      %1244 = vmatprep.subr.bf16.mxu0 0
      %1245 = vmatpush1.bf16.msra.mxu0 0
      %1246 = vmatprep.subr.bf16.mxu0 0
      %1247 = vmatpush1.bf16.msra.mxu0 0
      %1248 = vmatprep.subr.bf16.mxu0 0
      %1249 = vmatpush1.bf16.msra.mxu0 0
      %1250 = vmatprep.subr.bf16.mxu0 0
      %1251 = vmatpush1.bf16.msra.mxu0 0
      %1252 = vmatprep.subr.bf16.mxu0 0
      %1253 = vmatpush1.bf16.msra.mxu0 0
      %1254 = vmatprep.subr.bf16.mxu0 0
      %1255 = vmatpush1.bf16.msra.mxu0 0
      %1256 = vmatprep.subr.bf16.mxu0 0
      %1257 = vmatpush1.bf16.msra.mxu0 0
      %1258 = vmatprep.subr.bf16.mxu0 0
      %1259 = vmatpush1.bf16.msra.mxu0 0
      %1260 = vmatprep.subr.bf16.mxu0 0
      %1261 = vmatpush1.bf16.msra.mxu0 0
      %1262 = vmatprep.subr.bf16.mxu0 0
      %1263 = vmatpush1.bf16.msra.mxu0 0
      %1264 = vmatprep.mubr.bf16.mxu0 0
      %1265 = vmatmul.mubr.bf16.gmra.mrb[0].mxu0 %v1227
      %v1266 = vpop.f32.mrb[0].mxu0
      %v1267 = vadd.f32 0.0, %v1266
      %v1268 = vpop.f32.mrb[0].mxu0
      %v1269 = vpop.f32.mrb[0].mxu0
      %v1270 = vadd.f32 0.0, %v1269
      %v1271 = vpop.f32.mrb[0].mxu0
      %1272 = vdwg.mxu0
      %v1275 = vunpack.c.l.b16 %v591
      %v1276 = vunpack.c.l.b16 %v592
      %v1277 = vpack.c.b16 %v1276, %v1275
      %v1279 = vsel %vm332, %v1277, 0
      %v1282 = vsel %vm336, %v560, 0
      %1284 = vmatprep.subr.bf16.mxu0 0
      %1285 = vmatpush1.bf16.msra.mxu0 %v1282
      %1286 = vmatprep.subr.bf16.mxu0 0
      %1287 = vmatpush1.bf16.msra.mxu0 0
      %1288 = vmatprep.subr.bf16.mxu0 0
      %1289 = vmatpush1.bf16.msra.mxu0 0
      %1290 = vmatprep.subr.bf16.mxu0 0
      %1291 = vmatpush1.bf16.msra.mxu0 0
      %1292 = vmatprep.subr.bf16.mxu0 0
      %1293 = vmatpush1.bf16.msra.mxu0 0
      %1294 = vmatprep.subr.bf16.mxu0 0
      %1295 = vmatpush1.bf16.msra.mxu0 0
      %1296 = vmatprep.subr.bf16.mxu0 0
      %1297 = vmatpush1.bf16.msra.mxu0 0
      %1298 = vmatprep.subr.bf16.mxu0 0
      %1299 = vmatpush1.bf16.msra.mxu0 0
      %1300 = vmatprep.subr.bf16.mxu0 0
      %1301 = vmatpush1.bf16.msra.mxu0 0
      %1302 = vmatprep.subr.bf16.mxu0 0
      %1303 = vmatpush1.bf16.msra.mxu0 0
      %1304 = vmatprep.subr.bf16.mxu0 0
      %1305 = vmatpush1.bf16.msra.mxu0 0
      %1306 = vmatprep.subr.bf16.mxu0 0
      %1307 = vmatpush1.bf16.msra.mxu0 0
      %1308 = vmatprep.subr.bf16.mxu0 0
      %1309 = vmatpush1.bf16.msra.mxu0 0
      %1310 = vmatprep.subr.bf16.mxu0 0
      %1311 = vmatpush1.bf16.msra.mxu0 0
      %1312 = vmatprep.subr.bf16.mxu0 0
      %1313 = vmatpush1.bf16.msra.mxu0 0
      %1314 = vmatprep.subr.bf16.mxu0 0
      %1315 = vmatpush1.bf16.msra.mxu0 0
      %1316 = vmatprep.mubr.bf16.mxu0 0
      %1317 = vmatmul.mubr.bf16.gmra.mrb[0].mxu0 %v1279
      %v1318 = vpop.f32.mrb[0].mxu0
      %v1319 = vadd.f32 0.0, %v1318
      %v1320 = vpop.f32.mrb[0].mxu0
      %v1321 = vpop.f32.mrb[0].mxu0
      %v1322 = vadd.f32 0.0, %v1321
      %v1323 = vpop.f32.mrb[0].mxu0
      %1324 = vdwg.mxu0
      %v1327 = vunpack.c.l.b16 %v593
      %v1328 = vunpack.c.l.b16 %v594
      %v1329 = vpack.c.b16 %v1328, %v1327
      %v1331 = vsel %vm332, %v1329, 0
      %v1334 = vsel %vm336, %v496, 0
      %1336 = vmatprep.subr.bf16.mxu0 0
      %1337 = vmatpush1.bf16.msra.mxu0 %v1334
      %1338 = vmatprep.subr.bf16.mxu0 0
      %1339 = vmatpush1.bf16.msra.mxu0 0
      %1340 = vmatprep.subr.bf16.mxu0 0
      %1341 = vmatpush1.bf16.msra.mxu0 0
      %1342 = vmatprep.subr.bf16.mxu0 0
      %1343 = vmatpush1.bf16.msra.mxu0 0
      %1344 = vmatprep.subr.bf16.mxu0 0
      %1345 = vmatpush1.bf16.msra.mxu0 0
      %1346 = vmatprep.subr.bf16.mxu0 0
      %1347 = vmatpush1.bf16.msra.mxu0 0
      %1348 = vmatprep.subr.bf16.mxu0 0
      %1349 = vmatpush1.bf16.msra.mxu0 0
      %1350 = vmatprep.subr.bf16.mxu0 0
      %1351 = vmatpush1.bf16.msra.mxu0 0
      %1352 = vmatprep.subr.bf16.mxu0 0
      %1353 = vmatpush1.bf16.msra.mxu0 0
      %1354 = vmatprep.subr.bf16.mxu0 0
      %1355 = vmatpush1.bf16.msra.mxu0 0
      %1356 = vmatprep.subr.bf16.mxu0 0
      %1357 = vmatpush1.bf16.msra.mxu0 0
      %1358 = vmatprep.subr.bf16.mxu0 0
      %1359 = vmatpush1.bf16.msra.mxu0 0
      %1360 = vmatprep.subr.bf16.mxu0 0
      %1361 = vmatpush1.bf16.msra.mxu0 0
      %1362 = vmatprep.subr.bf16.mxu0 0
      %1363 = vmatpush1.bf16.msra.mxu0 0
      %1364 = vmatprep.subr.bf16.mxu0 0
      %1365 = vmatpush1.bf16.msra.mxu0 0
      %1366 = vmatprep.subr.bf16.mxu0 0
      %1367 = vmatpush1.bf16.msra.mxu0 0
      %1368 = vmatprep.mubr.bf16.mxu0 0
      %1369 = vmatmul.mubr.bf16.gmra.mrb[0].mxu0 %v1331
      %v1370 = vpop.f32.mrb[0].mxu0
      %v1371 = vadd.f32 0.0, %v1370
      %v1372 = vpop.f32.mrb[0].mxu0
      %v1373 = vpop.f32.mrb[0].mxu0
      %v1374 = vadd.f32 0.0, %v1373
      %v1375 = vpop.f32.mrb[0].mxu0
      %1376 = vdwg.mxu0
      %v1379 = vunpack.c.l.b16 %v595
      %v1380 = vunpack.c.l.b16 %v596
      %v1381 = vpack.c.b16 %v1380, %v1379
      %v1383 = vsel %vm332, %v1381, 0
      %v1386 = vsel %vm336, %v564, 0
      %1388 = vmatprep.subr.bf16.mxu0 0
      %1389 = vmatpush1.bf16.msra.mxu0 %v1386
      %1390 = vmatprep.subr.bf16.mxu0 0
      %1391 = vmatpush1.bf16.msra.mxu0 0
      %1392 = vmatprep.subr.bf16.mxu0 0
      %1393 = vmatpush1.bf16.msra.mxu0 0
      %1394 = vmatprep.subr.bf16.mxu0 0
      %1395 = vmatpush1.bf16.msra.mxu0 0
      %1396 = vmatprep.subr.bf16.mxu0 0
      %1397 = vmatpush1.bf16.msra.mxu0 0
      %1398 = vmatprep.subr.bf16.mxu0 0
      %1399 = vmatpush1.bf16.msra.mxu0 0
      %1400 = vmatprep.subr.bf16.mxu0 0
      %1401 = vmatpush1.bf16.msra.mxu0 0
      %1402 = vmatprep.subr.bf16.mxu0 0
      %1403 = vmatpush1.bf16.msra.mxu0 0
      %1404 = vmatprep.subr.bf16.mxu0 0
      %1405 = vmatpush1.bf16.msra.mxu0 0
      %1406 = vmatprep.subr.bf16.mxu0 0
      %1407 = vmatpush1.bf16.msra.mxu0 0
      %1408 = vmatprep.subr.bf16.mxu0 0
      %1409 = vmatpush1.bf16.msra.mxu0 0
      %1410 = vmatprep.subr.bf16.mxu0 0
      %1411 = vmatpush1.bf16.msra.mxu0 0
      %1412 = vmatprep.subr.bf16.mxu0 0
      %1413 = vmatpush1.bf16.msra.mxu0 0
      %1414 = vmatprep.subr.bf16.mxu0 0
      %1415 = vmatpush1.bf16.msra.mxu0 0
      %1416 = vmatprep.subr.bf16.mxu0 0
      %1417 = vmatpush1.bf16.msra.mxu0 0
      %1418 = vmatprep.subr.bf16.mxu0 0
      %1419 = vmatpush1.bf16.msra.mxu0 0
      %1420 = vmatprep.mubr.bf16.mxu0 0
      %1421 = vmatmul.mubr.bf16.gmra.mrb[0].mxu0 %v1383
      %v1422 = vpop.f32.mrb[0].mxu0
      %v1423 = vadd.f32 0.0, %v1422
      %v1424 = vpop.f32.mrb[0].mxu0
      %v1425 = vpop.f32.mrb[0].mxu0
      %v1426 = vadd.f32 0.0, %v1425
      %v1427 = vpop.f32.mrb[0].mxu0
      %1428 = vdwg.mxu0
      %v1429 = vld [vmem:[%s317] sm:$0xf]
      %v1430 = vld [vmem:[%s317 + $0x4] sm:$0xf]
      %v1431 = vld [vmem:[%s317 + $0x8] sm:$0xf]
      %v1432 = vld [vmem:[%s317 + $0xc] sm:$0xf]
      %v1433 = vld [vmem:[%s317 + $0x10] sm:$0xf]
      %v1434 = vld [vmem:[%s317 + $0x14] sm:$0xf]
      %v1435 = vld [vmem:[%s317 + $0x18] sm:$0xf]
      %v1436 = vld [vmem:[%s317 + $0x1c] sm:$0xf]
      %v1437 = vld [vmem:[%s317 + $0x20] sm:$0xf]
      %v1438 = vld [vmem:[%s317 + $0x24] sm:$0xf]
      %v1439 = vld [vmem:[%s317 + $0x28] sm:$0xf]
      %v1440 = vld [vmem:[%s317 + $0x2c] sm:$0xf]
      %v1441 = vld [vmem:[%s317 + $0x30] sm:$0xf]
      %v1442 = vld [vmem:[%s317 + $0x34] sm:$0xf]
      %v1443 = vld [vmem:[%s317 + $0x38] sm:$0xf]
      %v1444 = vld [vmem:[%s317 + $0x3c] sm:$0xf]
      %v1445 = vld [vmem:[%s317 + $0x40] sm:$0xf]
      %v1446 = vld [vmem:[%s317 + $0x44] sm:$0xf]
      %v1447 = vld [vmem:[%s317 + $0x48] sm:$0xf]
      %v1448 = vld [vmem:[%s317 + $0x4c] sm:$0xf]
      %v1449 = vld [vmem:[%s317 + $0x50] sm:$0xf]
      %v1450 = vld [vmem:[%s317 + $0x54] sm:$0xf]
      %v1451 = vld [vmem:[%s317 + $0x58] sm:$0xf]
      %v1452 = vld [vmem:[%s317 + $0x5c] sm:$0xf]
      %v1453 = vld [vmem:[%s317 + $0x60] sm:$0xf]
      %v1454 = vld [vmem:[%s317 + $0x64] sm:$0xf]
      %v1455 = vld [vmem:[%s317 + $0x68] sm:$0xf]
      %v1456 = vld [vmem:[%s317 + $0x6c] sm:$0xf]
      %v1457 = vld [vmem:[%s317 + $0x70] sm:$0xf]
      %v1458 = vld [vmem:[%s317 + $0x74] sm:$0xf]
      %v1459 = vld [vmem:[%s317 + $0x78] sm:$0xf]
      %v1460 = vld [vmem:[%s317 + $0x7c] sm:$0xf]
      %v1461 = vunpack.c.l.bf16 %v1429
      %v1462 = vunpack.c.l.bf16 %v1430
      %v1463 = vunpack.c.l.bf16 %v1431
      %v1464 = vunpack.c.l.bf16 %v1432
      %v1465 = vunpack.c.l.bf16 %v1433
      %v1466 = vunpack.c.l.bf16 %v1434
      %v1467 = vunpack.c.l.bf16 %v1435
      %v1468 = vunpack.c.l.bf16 %v1436
      %v1469 = vunpack.c.l.bf16 %v1437
      %v1470 = vunpack.c.l.bf16 %v1438
      %v1471 = vunpack.c.l.bf16 %v1439
      %v1472 = vunpack.c.l.bf16 %v1440
      %v1473 = vunpack.c.l.bf16 %v1441
      %v1474 = vunpack.c.l.bf16 %v1442
      %v1475 = vunpack.c.l.bf16 %v1443
      %v1476 = vunpack.c.l.bf16 %v1444
      %v1477 = vunpack.c.l.bf16 %v1445
      %v1478 = vunpack.c.l.bf16 %v1446
      %v1479 = vunpack.c.l.bf16 %v1447
      %v1480 = vunpack.c.l.bf16 %v1448
      %v1481 = vunpack.c.l.bf16 %v1449
      %v1482 = vunpack.c.l.bf16 %v1450
      %v1483 = vunpack.c.l.bf16 %v1451
      %v1484 = vunpack.c.l.bf16 %v1452
      %v1485 = vunpack.c.l.bf16 %v1453
      %v1486 = vunpack.c.l.bf16 %v1454
      %v1487 = vunpack.c.l.bf16 %v1455
      %v1488 = vunpack.c.l.bf16 %v1456
      %v1489 = vunpack.c.l.bf16 %v1457
      %v1490 = vunpack.c.l.bf16 %v1458
      %v1491 = vunpack.c.l.bf16 %v1459
      %v1492 = vunpack.c.l.bf16 %v1460
      %v1493 = vld [vmem:[%s5] sm:$0x1]
      %v1495 = vlaneseq
      %v1496 = vshrl.u32 %v1495, 7
      %v1497 = vsub.s32 0, %v1496
      %v1498 = vrot.slane %v1493, %v1497
      %v1500 = vadd.f32 %v1461, %v1498
      %v1501 = vadd.f32 %v1462, %v1498
      %v1502 = vadd.f32 %v1463, %v1498
      %v1503 = vadd.f32 %v1464, %v1498
      %v1504 = vadd.f32 %v1465, %v1498
      %v1505 = vadd.f32 %v1466, %v1498
      %v1506 = vadd.f32 %v1467, %v1498
      %v1507 = vadd.f32 %v1468, %v1498
      %v1508 = vadd.f32 %v1469, %v1498
      %v1509 = vadd.f32 %v1470, %v1498
      %v1510 = vadd.f32 %v1471, %v1498
      %v1511 = vadd.f32 %v1472, %v1498
      %v1512 = vadd.f32 %v1473, %v1498
      %v1513 = vadd.f32 %v1474, %v1498
      %v1514 = vadd.f32 %v1475, %v1498
      %v1515 = vadd.f32 %v1476, %v1498
      %v1516 = vadd.f32 %v1477, %v1498
      %v1517 = vadd.f32 %v1478, %v1498
      %v1518 = vadd.f32 %v1479, %v1498
      %v1519 = vadd.f32 %v1480, %v1498
      %v1520 = vadd.f32 %v1481, %v1498
      %v1521 = vadd.f32 %v1482, %v1498
      %v1522 = vadd.f32 %v1483, %v1498
      %v1523 = vadd.f32 %v1484, %v1498
      %v1524 = vadd.f32 %v1485, %v1498
      %v1525 = vadd.f32 %v1486, %v1498
      %v1526 = vadd.f32 %v1487, %v1498
      %v1527 = vadd.f32 %v1488, %v1498
      %v1528 = vadd.f32 %v1489, %v1498
      %v1529 = vadd.f32 %v1490, %v1498
      %v1530 = vadd.f32 %v1491, %v1498
      %v1531 = vadd.f32 %v1492, %v1498
      %v1532 = vmax.f32 %v1500, 0.0
      %v1533 = vmax.f32 %v1501, 0.0
      %v1534 = vmax.f32 %v1502, 0.0
      %v1535 = vmax.f32 %v1503, 0.0
      %v1536 = vmax.f32 %v1504, 0.0
      %v1537 = vmax.f32 %v1505, 0.0
      %v1538 = vmax.f32 %v1506, 0.0
      %v1539 = vmax.f32 %v1507, 0.0
      %v1540 = vmax.f32 %v1508, 0.0
      %v1541 = vmax.f32 %v1509, 0.0
      %v1542 = vmax.f32 %v1510, 0.0
      %v1543 = vmax.f32 %v1511, 0.0
      %v1544 = vmax.f32 %v1512, 0.0
      %v1545 = vmax.f32 %v1513, 0.0
      %v1546 = vmax.f32 %v1514, 0.0
      %v1547 = vmax.f32 %v1515, 0.0
      %v1548 = vmax.f32 %v1516, 0.0
      %v1549 = vmax.f32 %v1517, 0.0
      %v1550 = vmax.f32 %v1518, 0.0
      %v1551 = vmax.f32 %v1519, 0.0
      %v1552 = vmax.f32 %v1520, 0.0
      %v1553 = vmax.f32 %v1521, 0.0
      %v1554 = vmax.f32 %v1522, 0.0
      %v1555 = vmax.f32 %v1523, 0.0
      %v1556 = vmax.f32 %v1524, 0.0
      %v1557 = vmax.f32 %v1525, 0.0
      %v1558 = vmax.f32 %v1526, 0.0
      %v1559 = vmax.f32 %v1527, 0.0
      %v1560 = vmax.f32 %v1528, 0.0
      %v1561 = vmax.f32 %v1529, 0.0
      %v1562 = vmax.f32 %v1530, 0.0
      %v1563 = vmax.f32 %v1531, 0.0
      %v1564 = vpack.c.bf16 %v1533, %v1532
      %v1565 = vpack.c.bf16 %v1535, %v1534
      %v1566 = vpack.c.bf16 %v1537, %v1536
      %v1567 = vpack.c.bf16 %v1539, %v1538
      %v1568 = vpack.c.bf16 %v1541, %v1540
      %v1569 = vpack.c.bf16 %v1543, %v1542
      %v1570 = vpack.c.bf16 %v1545, %v1544
      %v1571 = vpack.c.bf16 %v1547, %v1546
      %v1572 = vpack.c.bf16 %v1549, %v1548
      %v1573 = vpack.c.bf16 %v1551, %v1550
      %v1574 = vpack.c.bf16 %v1553, %v1552
      %v1575 = vpack.c.bf16 %v1555, %v1554
      %v1576 = vpack.c.bf16 %v1557, %v1556
      %v1577 = vpack.c.bf16 %v1559, %v1558
      %v1578 = vpack.c.bf16 %v1561, %v1560
      %v1579 = vpack.c.bf16 %v1563, %v1562
      %v1580 = vld [vmem:[%s4] sm:$0xf]
      %v1581 = vld [vmem:[%s4 + $0x4] sm:$0xf]
      %v1584 = vunpack.c.l.b16 %v1580
      %v1585 = vunpack.c.l.b16 %v1581
      %v1586 = vpack.c.b16 %v1585, %v1584
      %vm1588 = vcmask 130048
      %v1590 = vsel %vm1588, %v1564, 0
      %v1593 = vsel %vm1588, %v1565, 0
      %v1596 = vsel %vm1588, %v1566, 0
      %v1599 = vsel %vm1588, %v1567, 0
      %v1602 = vsel %vm1588, %v1568, 0
      %v1605 = vsel %vm1588, %v1569, 0
      %v1608 = vsel %vm1588, %v1570, 0
      %v1611 = vsel %vm1588, %v1571, 0
      %v1614 = vsel %vm1588, %v1572, 0
      %v1617 = vsel %vm1588, %v1573, 0
      %v1620 = vsel %vm1588, %v1574, 0
      %v1623 = vsel %vm1588, %v1575, 0
      %v1626 = vsel %vm1588, %v1576, 0
      %v1629 = vsel %vm1588, %v1577, 0
      %v1632 = vsel %vm1588, %v1578, 0
      %v1635 = vsel %vm1588, %v1579, 0
      %1637 = vmatprep.subr.bf16.mxu0 0
      %1638 = vmatpush1.bf16.msra.mxu0 %v1586
      %1639 = vmatprep.subr.bf16.mxu0 0
      %1640 = vmatpush1.bf16.msra.mxu0 0
      %1641 = vmatprep.subr.bf16.mxu0 0
      %1642 = vmatpush1.bf16.msra.mxu0 0
      %1643 = vmatprep.subr.bf16.mxu0 0
      %1644 = vmatpush1.bf16.msra.mxu0 0
      %1645 = vmatprep.subr.bf16.mxu0 0
      %1646 = vmatpush1.bf16.msra.mxu0 0
      %1647 = vmatprep.subr.bf16.mxu0 0
      %1648 = vmatpush1.bf16.msra.mxu0 0
      %1649 = vmatprep.subr.bf16.mxu0 0
      %1650 = vmatpush1.bf16.msra.mxu0 0
      %1651 = vmatprep.subr.bf16.mxu0 0
      %1652 = vmatpush1.bf16.msra.mxu0 0
      %1653 = vmatprep.subr.bf16.mxu0 0
      %1654 = vmatpush1.bf16.msra.mxu0 0
      %1655 = vmatprep.subr.bf16.mxu0 0
      %1656 = vmatpush1.bf16.msra.mxu0 0
      %1657 = vmatprep.subr.bf16.mxu0 0
      %1658 = vmatpush1.bf16.msra.mxu0 0
      %1659 = vmatprep.subr.bf16.mxu0 0
      %1660 = vmatpush1.bf16.msra.mxu0 0
      %1661 = vmatprep.subr.bf16.mxu0 0
      %1662 = vmatpush1.bf16.msra.mxu0 0
      %1663 = vmatprep.subr.bf16.mxu0 0
      %1664 = vmatpush1.bf16.msra.mxu0 0
      %1665 = vmatprep.subr.bf16.mxu0 0
      %1666 = vmatpush1.bf16.msra.mxu0 0
      %1667 = vmatprep.subr.bf16.mxu0 0
      %1668 = vmatpush1.bf16.msra.mxu0 0
      %1669 = vmatprep.mubr.bf16.mxu0 0
      %1670 = vmatmul.mubr.bf16.gmra.mrb[0].mxu0 %v1590
      %v1671 = vpop.f32.mrb[0].mxu0
      %v1672 = vadd.f32 0.0, %v1671
      %v1673 = vpop.f32.mrb[0].mxu0
      %v1674 = vpop.f32.mrb[0].mxu0
      %v1675 = vadd.f32 0.0, %v1674
      %v1676 = vpop.f32.mrb[0].mxu0
      %1677 = vmatprep.mubr.bf16.mxu0 0
      %1678 = vmatmul.mubr.bf16.gmra.mrb[0].mxu0 %v1593
      %v1679 = vpop.f32.mrb[0].mxu0
      %v1680 = vadd.f32 0.0, %v1679
      %v1681 = vpop.f32.mrb[0].mxu0
      %v1682 = vpop.f32.mrb[0].mxu0
      %v1683 = vadd.f32 0.0, %v1682
      %v1684 = vpop.f32.mrb[0].mxu0
      %1685 = vmatprep.mubr.bf16.mxu0 0
      %1686 = vmatmul.mubr.bf16.gmra.mrb[0].mxu0 %v1596
      %v1687 = vpop.f32.mrb[0].mxu0
      %v1688 = vadd.f32 0.0, %v1687
      %v1689 = vpop.f32.mrb[0].mxu0
      %v1690 = vpop.f32.mrb[0].mxu0
      %v1691 = vadd.f32 0.0, %v1690
      %v1692 = vpop.f32.mrb[0].mxu0
      %1693 = vmatprep.mubr.bf16.mxu0 0
      %1694 = vmatmul.mubr.bf16.gmra.mrb[0].mxu0 %v1599
      %v1695 = vpop.f32.mrb[0].mxu0
      %v1696 = vadd.f32 0.0, %v1695
      %v1697 = vpop.f32.mrb[0].mxu0
      %v1698 = vpop.f32.mrb[0].mxu0
      %v1699 = vadd.f32 0.0, %v1698
      %v1700 = vpop.f32.mrb[0].mxu0
      %1701 = vmatprep.mubr.bf16.mxu0 0
      %1702 = vmatmul.mubr.bf16.gmra.mrb[0].mxu0 %v1602
      %v1703 = vpop.f32.mrb[0].mxu0
      %v1704 = vadd.f32 0.0, %v1703
      %v1705 = vpop.f32.mrb[0].mxu0
      %v1706 = vpop.f32.mrb[0].mxu0
      %v1707 = vadd.f32 0.0, %v1706
      %v1708 = vpop.f32.mrb[0].mxu0
      %1709 = vmatprep.mubr.bf16.mxu0 0
      %1710 = vmatmul.mubr.bf16.gmra.mrb[0].mxu0 %v1605
      %v1711 = vpop.f32.mrb[0].mxu0
      %v1712 = vadd.f32 0.0, %v1711
      %v1713 = vpop.f32.mrb[0].mxu0
      %v1714 = vpop.f32.mrb[0].mxu0
      %v1715 = vadd.f32 0.0, %v1714
      %v1716 = vpop.f32.mrb[0].mxu0
      %1717 = vmatprep.mubr.bf16.mxu0 0
      %1718 = vmatmul.mubr.bf16.gmra.mrb[0].mxu0 %v1608
      %v1719 = vpop.f32.mrb[0].mxu0
      %v1720 = vadd.f32 0.0, %v1719
      %v1721 = vpop.f32.mrb[0].mxu0
      %v1722 = vpop.f32.mrb[0].mxu0
      %v1723 = vadd.f32 0.0, %v1722
      %v1724 = vpop.f32.mrb[0].mxu0
      %1725 = vmatprep.mubr.bf16.mxu0 0
      %1726 = vmatmul.mubr.bf16.gmra.mrb[0].mxu0 %v1611
      %v1727 = vpop.f32.mrb[0].mxu0
      %v1728 = vadd.f32 0.0, %v1727
      %v1729 = vpop.f32.mrb[0].mxu0
      %v1730 = vpop.f32.mrb[0].mxu0
      %v1731 = vadd.f32 0.0, %v1730
      %v1732 = vpop.f32.mrb[0].mxu0
      %1733 = vmatprep.mubr.bf16.mxu0 0
      %1734 = vmatmul.mubr.bf16.gmra.mrb[0].mxu0 %v1614
      %v1735 = vpop.f32.mrb[0].mxu0
      %v1736 = vadd.f32 0.0, %v1735
      %v1737 = vpop.f32.mrb[0].mxu0
      %v1738 = vpop.f32.mrb[0].mxu0
      %v1739 = vadd.f32 0.0, %v1738
      %v1740 = vpop.f32.mrb[0].mxu0
      %1741 = vmatprep.mubr.bf16.mxu0 0
      %1742 = vmatmul.mubr.bf16.gmra.mrb[0].mxu0 %v1617
      %v1743 = vpop.f32.mrb[0].mxu0
      %v1744 = vadd.f32 0.0, %v1743
      %v1745 = vpop.f32.mrb[0].mxu0
      %v1746 = vpop.f32.mrb[0].mxu0
      %v1747 = vadd.f32 0.0, %v1746
      %v1748 = vpop.f32.mrb[0].mxu0
      %1749 = vmatprep.mubr.bf16.mxu0 0
      %1750 = vmatmul.mubr.bf16.gmra.mrb[0].mxu0 %v1620
      %v1751 = vpop.f32.mrb[0].mxu0
      %v1752 = vadd.f32 0.0, %v1751
      %v1753 = vpop.f32.mrb[0].mxu0
      %v1754 = vpop.f32.mrb[0].mxu0
      %v1755 = vadd.f32 0.0, %v1754
      %v1756 = vpop.f32.mrb[0].mxu0
      %1757 = vmatprep.mubr.bf16.mxu0 0
      %1758 = vmatmul.mubr.bf16.gmra.mrb[0].mxu0 %v1623
      %v1759 = vpop.f32.mrb[0].mxu0
      %v1760 = vadd.f32 0.0, %v1759
      %v1761 = vpop.f32.mrb[0].mxu0
      %v1762 = vpop.f32.mrb[0].mxu0
      %v1763 = vadd.f32 0.0, %v1762
      %v1764 = vpop.f32.mrb[0].mxu0
      %1765 = vmatprep.mubr.bf16.mxu0 0
      %1766 = vmatmul.mubr.bf16.gmra.mrb[0].mxu0 %v1626
      %v1767 = vpop.f32.mrb[0].mxu0
      %v1768 = vadd.f32 0.0, %v1767
      %v1769 = vpop.f32.mrb[0].mxu0
      %v1770 = vpop.f32.mrb[0].mxu0
      %v1771 = vadd.f32 0.0, %v1770
      %v1772 = vpop.f32.mrb[0].mxu0
      %1773 = vmatprep.mubr.bf16.mxu0 0
      %1774 = vmatmul.mubr.bf16.gmra.mrb[0].mxu0 %v1629
      %v1775 = vpop.f32.mrb[0].mxu0
      %v1776 = vadd.f32 0.0, %v1775
      %v1777 = vpop.f32.mrb[0].mxu0
      %v1778 = vpop.f32.mrb[0].mxu0
      %v1779 = vadd.f32 0.0, %v1778
      %v1780 = vpop.f32.mrb[0].mxu0
      %1781 = vmatprep.mubr.bf16.mxu0 0
      %1782 = vmatmul.mubr.bf16.gmra.mrb[0].mxu0 %v1632
      %v1783 = vpop.f32.mrb[0].mxu0
      %v1784 = vadd.f32 0.0, %v1783
      %v1785 = vpop.f32.mrb[0].mxu0
      %v1786 = vpop.f32.mrb[0].mxu0
      %v1787 = vadd.f32 0.0, %v1786
      %v1788 = vpop.f32.mrb[0].mxu0
      %1789 = vmatprep.mubr.bf16.mxu0 0
      %1790 = vmatmul.mubr.bf16.gmra.mrb[0].mxu0 %v1635
      %v1791 = vpop.f32.mrb[0].mxu0
      %v1792 = vadd.f32 0.0, %v1791
      %v1793 = vpop.f32.mrb[0].mxu0
      %v1794 = vpop.f32.mrb[0].mxu0
      %v1795 = vadd.f32 0.0, %v1794
      %v1796 = vpop.f32.mrb[0].mxu0
      %1797 = vdwg.mxu0
      %v1798 = vadd.f32 %v643, %v1672
      %v1799 = vadd.f32 %v646, %v1675
      %v1800 = vadd.f32 %v695, %v1680
      %v1801 = vadd.f32 %v698, %v1683
      %v1802 = vadd.f32 %v747, %v1688
      %v1803 = vadd.f32 %v750, %v1691
      %v1804 = vadd.f32 %v799, %v1696
      %v1805 = vadd.f32 %v802, %v1699
      %v1806 = vadd.f32 %v851, %v1704
      %v1807 = vadd.f32 %v854, %v1707
      %v1808 = vadd.f32 %v903, %v1712
      %v1809 = vadd.f32 %v906, %v1715
      %v1810 = vadd.f32 %v955, %v1720
      %v1811 = vadd.f32 %v958, %v1723
      %v1812 = vadd.f32 %v1007, %v1728
      %v1813 = vadd.f32 %v1010, %v1731
      %v1814 = vadd.f32 %v1059, %v1736
      %v1815 = vadd.f32 %v1062, %v1739
      %v1816 = vadd.f32 %v1111, %v1744
      %v1817 = vadd.f32 %v1114, %v1747
      %v1818 = vadd.f32 %v1163, %v1752
      %v1819 = vadd.f32 %v1166, %v1755
      %v1820 = vadd.f32 %v1215, %v1760
      %v1821 = vadd.f32 %v1218, %v1763
      %v1822 = vadd.f32 %v1267, %v1768
      %v1823 = vadd.f32 %v1270, %v1771
      %v1824 = vadd.f32 %v1319, %v1776
      %v1825 = vadd.f32 %v1322, %v1779
      %v1826 = vadd.f32 %v1371, %v1784
      %v1827 = vadd.f32 %v1374, %v1787
      %v1828 = vadd.f32 %v1423, %v1792
      %v1829 = vadd.f32 %v1426, %v1795
      %v1830 = vld [vmem:[%s7] sm:$0x1]
      %v1832 = vlaneseq
      %v1833 = vshrl.u32 %v1832, 7
      %v1834 = vsub.s32 0, %v1833
      %v1835 = vrot.slane %v1830, %v1834
      %v1837 = vadd.f32 %v1798, %v1835
      %v1838 = vadd.f32 %v1799, %v1835
      %v1839 = vadd.f32 %v1800, %v1835
      %v1840 = vadd.f32 %v1801, %v1835
      %v1841 = vadd.f32 %v1802, %v1835
      %v1842 = vadd.f32 %v1803, %v1835
      %v1843 = vadd.f32 %v1804, %v1835
      %v1844 = vadd.f32 %v1805, %v1835
      %v1845 = vadd.f32 %v1806, %v1835
      %v1846 = vadd.f32 %v1807, %v1835
      %v1847 = vadd.f32 %v1808, %v1835
      %v1848 = vadd.f32 %v1809, %v1835
      %v1849 = vadd.f32 %v1810, %v1835
      %v1850 = vadd.f32 %v1811, %v1835
      %v1851 = vadd.f32 %v1812, %v1835
      %v1852 = vadd.f32 %v1813, %v1835
      %v1853 = vadd.f32 %v1814, %v1835
      %v1854 = vadd.f32 %v1815, %v1835
      %v1855 = vadd.f32 %v1816, %v1835
      %v1856 = vadd.f32 %v1817, %v1835
      %v1857 = vadd.f32 %v1818, %v1835
      %v1858 = vadd.f32 %v1819, %v1835
      %v1859 = vadd.f32 %v1820, %v1835
      %v1860 = vadd.f32 %v1821, %v1835
      %v1861 = vadd.f32 %v1822, %v1835
      %v1862 = vadd.f32 %v1823, %v1835
      %v1863 = vadd.f32 %v1824, %v1835
      %v1864 = vadd.f32 %v1825, %v1835
      %v1865 = vadd.f32 %v1826, %v1835
      %v1866 = vadd.f32 %v1827, %v1835
      %v1867 = vadd.f32 %v1828, %v1835
      %v1868 = vadd.f32 %v1829, %v1835
      %v1869 = vmax.f32 %v1837, 0.0
      %v1870 = vmax.f32 %v1838, 0.0
      %v1871 = vmax.f32 %v1839, 0.0
      %v1872 = vmax.f32 %v1840, 0.0
      %v1873 = vmax.f32 %v1841, 0.0
      %v1874 = vmax.f32 %v1842, 0.0
      %v1875 = vmax.f32 %v1843, 0.0
      %v1876 = vmax.f32 %v1844, 0.0
      %v1877 = vmax.f32 %v1845, 0.0
      %v1878 = vmax.f32 %v1846, 0.0
      %v1879 = vmax.f32 %v1847, 0.0
      %v1880 = vmax.f32 %v1848, 0.0
      %v1881 = vmax.f32 %v1849, 0.0
      %v1882 = vmax.f32 %v1850, 0.0
      %v1883 = vmax.f32 %v1851, 0.0
      %v1884 = vmax.f32 %v1852, 0.0
      %v1885 = vmax.f32 %v1853, 0.0
      %v1886 = vmax.f32 %v1854, 0.0
      %v1887 = vmax.f32 %v1855, 0.0
      %v1888 = vmax.f32 %v1856, 0.0
      %v1889 = vmax.f32 %v1857, 0.0
      %v1890 = vmax.f32 %v1858, 0.0
      %v1891 = vmax.f32 %v1859, 0.0
      %v1892 = vmax.f32 %v1860, 0.0
      %v1893 = vmax.f32 %v1861, 0.0
      %v1894 = vmax.f32 %v1862, 0.0
      %v1895 = vmax.f32 %v1863, 0.0
      %v1896 = vmax.f32 %v1864, 0.0
      %v1897 = vmax.f32 %v1865, 0.0
      %v1898 = vmax.f32 %v1866, 0.0
      %v1899 = vmax.f32 %v1867, 0.0
      %v1900 = vmax.f32 %v1868, 0.0
      %v1901 = vpack.c.bf16 %v1870, %v1869
      %v1902 = vpack.c.bf16 %v1872, %v1871
      %v1903 = vpack.c.bf16 %v1874, %v1873
      %v1904 = vpack.c.bf16 %v1876, %v1875
      %v1905 = vpack.c.bf16 %v1878, %v1877
      %v1906 = vpack.c.bf16 %v1880, %v1879
      %v1907 = vpack.c.bf16 %v1882, %v1881
      %v1908 = vpack.c.bf16 %v1884, %v1883
      %v1909 = vpack.c.bf16 %v1886, %v1885
      %v1910 = vpack.c.bf16 %v1888, %v1887
      %v1911 = vpack.c.bf16 %v1890, %v1889
      %v1912 = vpack.c.bf16 %v1892, %v1891
      %v1913 = vpack.c.bf16 %v1894, %v1893
      %v1914 = vpack.c.bf16 %v1896, %v1895
      %v1915 = vpack.c.bf16 %v1898, %v1897
      %v1916 = vpack.c.bf16 %v1900, %v1899
      %v1917 = vld [vmem:[%s6] sm:$0xf]
      %v1919 = vsel %vm332, %v1901, 0
      %v1922 = vsel %vm332, %v1902, 0
      %v1925 = vsel %vm332, %v1903, 0
      %v1928 = vsel %vm332, %v1904, 0
      %v1931 = vsel %vm332, %v1905, 0
      %v1934 = vsel %vm332, %v1906, 0
      %v1937 = vsel %vm332, %v1907, 0
      %v1940 = vsel %vm332, %v1908, 0
      %v1943 = vsel %vm332, %v1909, 0
      %v1946 = vsel %vm332, %v1910, 0
      %v1949 = vsel %vm332, %v1911, 0
      %v1952 = vsel %vm332, %v1912, 0
      %v1955 = vsel %vm332, %v1913, 0
      %v1958 = vsel %vm332, %v1914, 0
      %v1961 = vsel %vm332, %v1915, 0
      %v1964 = vsel %vm332, %v1916, 0
      %v1967 = vsel %vm336, %v1917, 0
      %1969 = vmatprep.subr.bf16.mxu0 0
      %1970 = vmatpush1.bf16.msra.mxu0 %v1967
      %1971 = vmatprep.subr.bf16.mxu0 0
      %1972 = vmatpush1.bf16.msra.mxu0 0
      %1973 = vmatprep.subr.bf16.mxu0 0
      %1974 = vmatpush1.bf16.msra.mxu0 0
      %1975 = vmatprep.subr.bf16.mxu0 0
      %1976 = vmatpush1.bf16.msra.mxu0 0
      %1977 = vmatprep.subr.bf16.mxu0 0
      %1978 = vmatpush1.bf16.msra.mxu0 0
      %1979 = vmatprep.subr.bf16.mxu0 0
      %1980 = vmatpush1.bf16.msra.mxu0 0
      %1981 = vmatprep.subr.bf16.mxu0 0
      %1982 = vmatpush1.bf16.msra.mxu0 0
      %1983 = vmatprep.subr.bf16.mxu0 0
      %1984 = vmatpush1.bf16.msra.mxu0 0
      %1985 = vmatprep.subr.bf16.mxu0 0
      %1986 = vmatpush1.bf16.msra.mxu0 0
      %1987 = vmatprep.subr.bf16.mxu0 0
      %1988 = vmatpush1.bf16.msra.mxu0 0
      %1989 = vmatprep.subr.bf16.mxu0 0
      %1990 = vmatpush1.bf16.msra.mxu0 0
      %1991 = vmatprep.subr.bf16.mxu0 0
      %1992 = vmatpush1.bf16.msra.mxu0 0
      %1993 = vmatprep.subr.bf16.mxu0 0
      %1994 = vmatpush1.bf16.msra.mxu0 0
      %1995 = vmatprep.subr.bf16.mxu0 0
      %1996 = vmatpush1.bf16.msra.mxu0 0
      %1997 = vmatprep.subr.bf16.mxu0 0
      %1998 = vmatpush1.bf16.msra.mxu0 0
      %1999 = vmatprep.subr.bf16.mxu0 0
      %2000 = vmatpush1.bf16.msra.mxu0 0
      %2001 = vmatprep.mubr.bf16.mxu0 0
      %2002 = vmatmul.mubr.bf16.gmra.mrb[0].mxu0 %v1919
      %v2003 = vpop.f32.mrb[0].mxu0
      %v2004 = vadd.f32 0.0, %v2003
      %v2005 = vpop.f32.mrb[0].mxu0
      %v2006 = vpop.f32.mrb[0].mxu0
      %v2007 = vadd.f32 0.0, %v2006
      %v2008 = vpop.f32.mrb[0].mxu0
      %2009 = vmatprep.mubr.bf16.mxu0 0
      %2010 = vmatmul.mubr.bf16.gmra.mrb[0].mxu0 %v1922
      %v2011 = vpop.f32.mrb[0].mxu0
      %v2012 = vadd.f32 0.0, %v2011
      %v2013 = vpop.f32.mrb[0].mxu0
      %v2014 = vpop.f32.mrb[0].mxu0
      %v2015 = vadd.f32 0.0, %v2014
      %v2016 = vpop.f32.mrb[0].mxu0
      %2017 = vmatprep.mubr.bf16.mxu0 0
      %2018 = vmatmul.mubr.bf16.gmra.mrb[0].mxu0 %v1925
      %v2019 = vpop.f32.mrb[0].mxu0
      %v2020 = vadd.f32 0.0, %v2019
      %v2021 = vpop.f32.mrb[0].mxu0
      %v2022 = vpop.f32.mrb[0].mxu0
      %v2023 = vadd.f32 0.0, %v2022
      %v2024 = vpop.f32.mrb[0].mxu0
      %2025 = vmatprep.mubr.bf16.mxu0 0
      %2026 = vmatmul.mubr.bf16.gmra.mrb[0].mxu0 %v1928
      %v2027 = vpop.f32.mrb[0].mxu0
      %v2028 = vadd.f32 0.0, %v2027
      %v2029 = vpop.f32.mrb[0].mxu0
      %v2030 = vpop.f32.mrb[0].mxu0
      %v2031 = vadd.f32 0.0, %v2030
      %v2032 = vpop.f32.mrb[0].mxu0
      %2033 = vmatprep.mubr.bf16.mxu0 0
      %2034 = vmatmul.mubr.bf16.gmra.mrb[0].mxu0 %v1931
      %v2035 = vpop.f32.mrb[0].mxu0
      %v2036 = vadd.f32 0.0, %v2035
      %v2037 = vpop.f32.mrb[0].mxu0
      %v2038 = vpop.f32.mrb[0].mxu0
      %v2039 = vadd.f32 0.0, %v2038
      %v2040 = vpop.f32.mrb[0].mxu0
      %2041 = vmatprep.mubr.bf16.mxu0 0
      %2042 = vmatmul.mubr.bf16.gmra.mrb[0].mxu0 %v1934
      %v2043 = vpop.f32.mrb[0].mxu0
      %v2044 = vadd.f32 0.0, %v2043
      %v2045 = vpop.f32.mrb[0].mxu0
      %v2046 = vpop.f32.mrb[0].mxu0
      %v2047 = vadd.f32 0.0, %v2046
      %v2048 = vpop.f32.mrb[0].mxu0
      %2049 = vmatprep.mubr.bf16.mxu0 0
      %2050 = vmatmul.mubr.bf16.gmra.mrb[0].mxu0 %v1937
      %v2051 = vpop.f32.mrb[0].mxu0
      %v2052 = vadd.f32 0.0, %v2051
      %v2053 = vpop.f32.mrb[0].mxu0
      %v2054 = vpop.f32.mrb[0].mxu0
      %v2055 = vadd.f32 0.0, %v2054
      %v2056 = vpop.f32.mrb[0].mxu0
      %2057 = vmatprep.mubr.bf16.mxu0 0
      %2058 = vmatmul.mubr.bf16.gmra.mrb[0].mxu0 %v1940
      %v2059 = vpop.f32.mrb[0].mxu0
      %v2060 = vadd.f32 0.0, %v2059
      %v2061 = vpop.f32.mrb[0].mxu0
      %v2062 = vpop.f32.mrb[0].mxu0
      %v2063 = vadd.f32 0.0, %v2062
      %v2064 = vpop.f32.mrb[0].mxu0
      %2065 = vmatprep.mubr.bf16.mxu0 0
      %2066 = vmatmul.mubr.bf16.gmra.mrb[0].mxu0 %v1943
      %v2067 = vpop.f32.mrb[0].mxu0
      %v2068 = vadd.f32 0.0, %v2067
      %v2069 = vpop.f32.mrb[0].mxu0
      %v2070 = vpop.f32.mrb[0].mxu0
      %v2071 = vadd.f32 0.0, %v2070
      %v2072 = vpop.f32.mrb[0].mxu0
      %2073 = vmatprep.mubr.bf16.mxu0 0
      %2074 = vmatmul.mubr.bf16.gmra.mrb[0].mxu0 %v1946
      %v2075 = vpop.f32.mrb[0].mxu0
      %v2076 = vadd.f32 0.0, %v2075
      %v2077 = vpop.f32.mrb[0].mxu0
      %v2078 = vpop.f32.mrb[0].mxu0
      %v2079 = vadd.f32 0.0, %v2078
      %v2080 = vpop.f32.mrb[0].mxu0
      %2081 = vmatprep.mubr.bf16.mxu0 0
      %2082 = vmatmul.mubr.bf16.gmra.mrb[0].mxu0 %v1949
      %v2083 = vpop.f32.mrb[0].mxu0
      %v2084 = vadd.f32 0.0, %v2083
      %v2085 = vpop.f32.mrb[0].mxu0
      %v2086 = vpop.f32.mrb[0].mxu0
      %v2087 = vadd.f32 0.0, %v2086
      %v2088 = vpop.f32.mrb[0].mxu0
      %2089 = vmatprep.mubr.bf16.mxu0 0
      %2090 = vmatmul.mubr.bf16.gmra.mrb[0].mxu0 %v1952
      %v2091 = vpop.f32.mrb[0].mxu0
      %v2092 = vadd.f32 0.0, %v2091
      %v2093 = vpop.f32.mrb[0].mxu0
      %v2094 = vpop.f32.mrb[0].mxu0
      %v2095 = vadd.f32 0.0, %v2094
      %v2096 = vpop.f32.mrb[0].mxu0
      %2097 = vmatprep.mubr.bf16.mxu0 0
      %2098 = vmatmul.mubr.bf16.gmra.mrb[0].mxu0 %v1955
      %v2099 = vpop.f32.mrb[0].mxu0
      %v2100 = vadd.f32 0.0, %v2099
      %v2101 = vpop.f32.mrb[0].mxu0
      %v2102 = vpop.f32.mrb[0].mxu0
      %v2103 = vadd.f32 0.0, %v2102
      %v2104 = vpop.f32.mrb[0].mxu0
      %2105 = vmatprep.mubr.bf16.mxu0 0
      %2106 = vmatmul.mubr.bf16.gmra.mrb[0].mxu0 %v1958
      %v2107 = vpop.f32.mrb[0].mxu0
      %v2108 = vadd.f32 0.0, %v2107
      %v2109 = vpop.f32.mrb[0].mxu0
      %v2110 = vpop.f32.mrb[0].mxu0
      %v2111 = vadd.f32 0.0, %v2110
      %v2112 = vpop.f32.mrb[0].mxu0
      %2113 = vmatprep.mubr.bf16.mxu0 0
      %2114 = vmatmul.mubr.bf16.gmra.mrb[0].mxu0 %v1961
      %v2115 = vpop.f32.mrb[0].mxu0
      %v2116 = vadd.f32 0.0, %v2115
      %v2117 = vpop.f32.mrb[0].mxu0
      %v2118 = vpop.f32.mrb[0].mxu0
      %v2119 = vadd.f32 0.0, %v2118
      %v2120 = vpop.f32.mrb[0].mxu0
      %2121 = vmatprep.mubr.bf16.mxu0 0
      %2122 = vmatmul.mubr.bf16.gmra.mrb[0].mxu0 %v1964
      %v2123 = vpop.f32.mrb[0].mxu0
      %v2124 = vadd.f32 0.0, %v2123
      %v2125 = vpop.f32.mrb[0].mxu0
      %v2126 = vpop.f32.mrb[0].mxu0
      %v2127 = vadd.f32 0.0, %v2126
      %v2128 = vpop.f32.mrb[0].mxu0
      %2129 = vdwg.mxu0
      %v2130 = vlaneseq
      %v2131 = vshrl.u32 %v2130, 7
      %v2132 = vadd.s32 %v2131, 8
      %v2133 = vadd.s32 %v2131, 16
      %v2134 = vadd.s32 %v2131, 24
      %v2135 = vadd.s32 %v2131, 32
      %v2136 = vadd.s32 %v2131, 40
      %v2137 = vadd.s32 %v2131, 48
      %v2138 = vadd.s32 %v2131, 56
      %v2139 = vadd.s32 %v2131, 64
      %v2140 = vadd.s32 %v2131, 72
      %v2141 = vadd.s32 %v2131, 80
      %v2142 = vadd.s32 %v2131, 88
      %v2143 = vadd.s32 %v2131, 96
      %v2144 = vadd.s32 %v2131, 104
      %v2145 = vadd.s32 %v2131, 112
      %v2146 = vadd.s32 %v2131, 120
      %v2147 = vadd.s32 %v2131, 128
      %v2148 = vadd.s32 %v2131, 136
      %v2149 = vadd.s32 %v2131, 144
      %v2150 = vadd.s32 %v2131, 152
      %v2151 = vadd.s32 %v2131, 160
      %v2152 = vadd.s32 %v2131, 168
      %v2153 = vadd.s32 %v2131, 176
      %v2154 = vadd.s32 %v2131, 184
      %v2155 = vadd.s32 %v2131, 192
      %v2156 = vadd.s32 %v2131, 200
      %v2157 = vadd.s32 %v2131, 208
      %v2158 = vadd.s32 %v2131, 216
      %v2159 = vadd.s32 %v2131, 224
      %v2160 = vadd.s32 %v2131, 232
      %v2161 = vadd.s32 %v2131, 240
      %v2162 = vadd.s32 %v2131, 248
      %vm2163 = vcmp.lt.s32.totalorder %v2131, 0
      %v2164 = vsub.s32 0, %v2131
      %v2165 = vsel %vm2163, %v2164, %v2131
      %v2166 = vshrl.u32 %v2165, 4
      %v2167 = vand.u32 %v2165, 15
      %v2168 = vsub.s32 0, %v2167
      %v2169 = vsel %vm2163, %v2168, %v2167
      %vm2170 = vcmp.lt.s32.totalorder %v2132, 0
      %v2171 = vsub.s32 0, %v2132
      %v2172 = vsel %vm2170, %v2171, %v2132
      %v2173 = vshrl.u32 %v2172, 4
      %v2174 = vand.u32 %v2172, 15
      %v2175 = vsub.s32 0, %v2174
      %v2176 = vsel %vm2170, %v2175, %v2174
      %vm2177 = vcmp.lt.s32.totalorder %v2133, 0
      %v2178 = vsub.s32 0, %v2133
      %v2179 = vsel %vm2177, %v2178, %v2133
      %v2180 = vshrl.u32 %v2179, 4
      %v2181 = vand.u32 %v2179, 15
      %v2182 = vsub.s32 0, %v2181
      %v2183 = vsel %vm2177, %v2182, %v2181
      %vm2184 = vcmp.lt.s32.totalorder %v2134, 0
      %v2185 = vsub.s32 0, %v2134
      %v2186 = vsel %vm2184, %v2185, %v2134
      %v2187 = vshrl.u32 %v2186, 4
      %v2188 = vand.u32 %v2186, 15
      %v2189 = vsub.s32 0, %v2188
      %v2190 = vsel %vm2184, %v2189, %v2188
      %vm2191 = vcmp.lt.s32.totalorder %v2135, 0
      %v2192 = vsub.s32 0, %v2135
      %v2193 = vsel %vm2191, %v2192, %v2135
      %v2194 = vshrl.u32 %v2193, 4
      %v2195 = vand.u32 %v2193, 15
      %v2196 = vsub.s32 0, %v2195
      %v2197 = vsel %vm2191, %v2196, %v2195
      %vm2198 = vcmp.lt.s32.totalorder %v2136, 0
      %v2199 = vsub.s32 0, %v2136
      %v2200 = vsel %vm2198, %v2199, %v2136
      %v2201 = vshrl.u32 %v2200, 4
      %v2202 = vand.u32 %v2200, 15
      %v2203 = vsub.s32 0, %v2202
      %v2204 = vsel %vm2198, %v2203, %v2202
      %vm2205 = vcmp.lt.s32.totalorder %v2137, 0
      %v2206 = vsub.s32 0, %v2137
      %v2207 = vsel %vm2205, %v2206, %v2137
      %v2208 = vshrl.u32 %v2207, 4
      %v2209 = vand.u32 %v2207, 15
      %v2210 = vsub.s32 0, %v2209
      %v2211 = vsel %vm2205, %v2210, %v2209
      %vm2212 = vcmp.lt.s32.totalorder %v2138, 0
      %v2213 = vsub.s32 0, %v2138
      %v2214 = vsel %vm2212, %v2213, %v2138
      %v2215 = vshrl.u32 %v2214, 4
      %v2216 = vand.u32 %v2214, 15
      %v2217 = vsub.s32 0, %v2216
      %v2218 = vsel %vm2212, %v2217, %v2216
      %vm2219 = vcmp.lt.s32.totalorder %v2139, 0
      %v2220 = vsub.s32 0, %v2139
      %v2221 = vsel %vm2219, %v2220, %v2139
      %v2222 = vshrl.u32 %v2221, 4
      %v2223 = vand.u32 %v2221, 15
      %v2224 = vsub.s32 0, %v2223
      %v2225 = vsel %vm2219, %v2224, %v2223
      %vm2226 = vcmp.lt.s32.totalorder %v2140, 0
      %v2227 = vsub.s32 0, %v2140
      %v2228 = vsel %vm2226, %v2227, %v2140
      %v2229 = vshrl.u32 %v2228, 4
      %v2230 = vand.u32 %v2228, 15
      %v2231 = vsub.s32 0, %v2230
      %v2232 = vsel %vm2226, %v2231, %v2230
      %vm2233 = vcmp.lt.s32.totalorder %v2141, 0
      %v2234 = vsub.s32 0, %v2141
      %v2235 = vsel %vm2233, %v2234, %v2141
      %v2236 = vshrl.u32 %v2235, 4
      %v2237 = vand.u32 %v2235, 15
      %v2238 = vsub.s32 0, %v2237
      %v2239 = vsel %vm2233, %v2238, %v2237
      %vm2240 = vcmp.lt.s32.totalorder %v2142, 0
      %v2241 = vsub.s32 0, %v2142
      %v2242 = vsel %vm2240, %v2241, %v2142
      %v2243 = vshrl.u32 %v2242, 4
      %v2244 = vand.u32 %v2242, 15
      %v2245 = vsub.s32 0, %v2244
      %v2246 = vsel %vm2240, %v2245, %v2244
      %vm2247 = vcmp.lt.s32.totalorder %v2143, 0
      %v2248 = vsub.s32 0, %v2143
      %v2249 = vsel %vm2247, %v2248, %v2143
      %v2250 = vshrl.u32 %v2249, 4
      %v2251 = vand.u32 %v2249, 15
      %v2252 = vsub.s32 0, %v2251
      %v2253 = vsel %vm2247, %v2252, %v2251
      %vm2254 = vcmp.lt.s32.totalorder %v2144, 0
      %v2255 = vsub.s32 0, %v2144
      %v2256 = vsel %vm2254, %v2255, %v2144
      %v2257 = vshrl.u32 %v2256, 4
      %v2258 = vand.u32 %v2256, 15
      %v2259 = vsub.s32 0, %v2258
      %v2260 = vsel %vm2254, %v2259, %v2258
      %vm2261 = vcmp.lt.s32.totalorder %v2145, 0
      %v2262 = vsub.s32 0, %v2145
      %v2263 = vsel %vm2261, %v2262, %v2145
      %v2264 = vshrl.u32 %v2263, 4
      %v2265 = vand.u32 %v2263, 15
      %v2266 = vsub.s32 0, %v2265
      %v2267 = vsel %vm2261, %v2266, %v2265
      %vm2268 = vcmp.lt.s32.totalorder %v2146, 0
      %v2269 = vsub.s32 0, %v2146
      %v2270 = vsel %vm2268, %v2269, %v2146
      %v2271 = vshrl.u32 %v2270, 4
      %v2272 = vand.u32 %v2270, 15
      %v2273 = vsub.s32 0, %v2272
      %v2274 = vsel %vm2268, %v2273, %v2272
      %vm2275 = vcmp.lt.s32.totalorder %v2147, 0
      %v2276 = vsub.s32 0, %v2147
      %v2277 = vsel %vm2275, %v2276, %v2147
      %v2278 = vshrl.u32 %v2277, 4
      %v2279 = vand.u32 %v2277, 15
      %v2280 = vsub.s32 0, %v2279
      %v2281 = vsel %vm2275, %v2280, %v2279
      %vm2282 = vcmp.lt.s32.totalorder %v2148, 0
      %v2283 = vsub.s32 0, %v2148
      %v2284 = vsel %vm2282, %v2283, %v2148
      %v2285 = vshrl.u32 %v2284, 4
      %v2286 = vand.u32 %v2284, 15
      %v2287 = vsub.s32 0, %v2286
      %v2288 = vsel %vm2282, %v2287, %v2286
      %vm2289 = vcmp.lt.s32.totalorder %v2149, 0
      %v2290 = vsub.s32 0, %v2149
      %v2291 = vsel %vm2289, %v2290, %v2149
      %v2292 = vshrl.u32 %v2291, 4
      %v2293 = vand.u32 %v2291, 15
      %v2294 = vsub.s32 0, %v2293
      %v2295 = vsel %vm2289, %v2294, %v2293
      %vm2296 = vcmp.lt.s32.totalorder %v2150, 0
      %v2297 = vsub.s32 0, %v2150
      %v2298 = vsel %vm2296, %v2297, %v2150
      %v2299 = vshrl.u32 %v2298, 4
      %v2300 = vand.u32 %v2298, 15
      %v2301 = vsub.s32 0, %v2300
      %v2302 = vsel %vm2296, %v2301, %v2300
      %vm2303 = vcmp.lt.s32.totalorder %v2151, 0
      %v2304 = vsub.s32 0, %v2151
      %v2305 = vsel %vm2303, %v2304, %v2151
      %v2306 = vshrl.u32 %v2305, 4
      %v2307 = vand.u32 %v2305, 15
      %v2308 = vsub.s32 0, %v2307
      %v2309 = vsel %vm2303, %v2308, %v2307
      %vm2310 = vcmp.lt.s32.totalorder %v2152, 0
      %v2311 = vsub.s32 0, %v2152
      %v2312 = vsel %vm2310, %v2311, %v2152
      %v2313 = vshrl.u32 %v2312, 4
      %v2314 = vand.u32 %v2312, 15
      %v2315 = vsub.s32 0, %v2314
      %v2316 = vsel %vm2310, %v2315, %v2314
      %vm2317 = vcmp.lt.s32.totalorder %v2153, 0
      %v2318 = vsub.s32 0, %v2153
      %v2319 = vsel %vm2317, %v2318, %v2153
      %v2320 = vshrl.u32 %v2319, 4
      %v2321 = vand.u32 %v2319, 15
      %v2322 = vsub.s32 0, %v2321
      %v2323 = vsel %vm2317, %v2322, %v2321
      %vm2324 = vcmp.lt.s32.totalorder %v2154, 0
      %v2325 = vsub.s32 0, %v2154
      %v2326 = vsel %vm2324, %v2325, %v2154
      %v2327 = vshrl.u32 %v2326, 4
      %v2328 = vand.u32 %v2326, 15
      %v2329 = vsub.s32 0, %v2328
      %v2330 = vsel %vm2324, %v2329, %v2328
      %vm2331 = vcmp.lt.s32.totalorder %v2155, 0
      %v2332 = vsub.s32 0, %v2155
      %v2333 = vsel %vm2331, %v2332, %v2155
      %v2334 = vshrl.u32 %v2333, 4
      %v2335 = vand.u32 %v2333, 15
      %v2336 = vsub.s32 0, %v2335
      %v2337 = vsel %vm2331, %v2336, %v2335
      %vm2338 = vcmp.lt.s32.totalorder %v2156, 0
      %v2339 = vsub.s32 0, %v2156
      %v2340 = vsel %vm2338, %v2339, %v2156
      %v2341 = vshrl.u32 %v2340, 4
      %v2342 = vand.u32 %v2340, 15
      %v2343 = vsub.s32 0, %v2342
      %v2344 = vsel %vm2338, %v2343, %v2342
      %vm2345 = vcmp.lt.s32.totalorder %v2157, 0
      %v2346 = vsub.s32 0, %v2157
      %v2347 = vsel %vm2345, %v2346, %v2157
      %v2348 = vshrl.u32 %v2347, 4
      %v2349 = vand.u32 %v2347, 15
      %v2350 = vsub.s32 0, %v2349
      %v2351 = vsel %vm2345, %v2350, %v2349
      %vm2352 = vcmp.lt.s32.totalorder %v2158, 0
      %v2353 = vsub.s32 0, %v2158
      %v2354 = vsel %vm2352, %v2353, %v2158
      %v2355 = vshrl.u32 %v2354, 4
      %v2356 = vand.u32 %v2354, 15
      %v2357 = vsub.s32 0, %v2356
      %v2358 = vsel %vm2352, %v2357, %v2356
      %vm2359 = vcmp.lt.s32.totalorder %v2159, 0
      %v2360 = vsub.s32 0, %v2159
      %v2361 = vsel %vm2359, %v2360, %v2159
      %v2362 = vshrl.u32 %v2361, 4
      %v2363 = vand.u32 %v2361, 15
      %v2364 = vsub.s32 0, %v2363
      %v2365 = vsel %vm2359, %v2364, %v2363
      %vm2366 = vcmp.lt.s32.totalorder %v2160, 0
      %v2367 = vsub.s32 0, %v2160
      %v2368 = vsel %vm2366, %v2367, %v2160
      %v2369 = vshrl.u32 %v2368, 4
      %v2370 = vand.u32 %v2368, 15
      %v2371 = vsub.s32 0, %v2370
      %v2372 = vsel %vm2366, %v2371, %v2370
      %vm2373 = vcmp.lt.s32.totalorder %v2161, 0
      %v2374 = vsub.s32 0, %v2161
      %v2375 = vsel %vm2373, %v2374, %v2161
      %v2376 = vshrl.u32 %v2375, 4
      %v2377 = vand.u32 %v2375, 15
      %v2378 = vsub.s32 0, %v2377
      %v2379 = vsel %vm2373, %v2378, %v2377
      %vm2380 = vcmp.lt.s32.totalorder %v2162, 0
      %v2381 = vsub.s32 0, %v2162
      %v2382 = vsel %vm2380, %v2381, %v2162
      %v2383 = vshrl.u32 %v2382, 4
      %v2384 = vand.u32 %v2382, 15
      %v2385 = vsub.s32 0, %v2384
      %v2386 = vsel %vm2380, %v2385, %v2384
      %vm2387 = vcmp.ne.s32.totalorder %v2169, 0
      %vm2388 = vcmp.ne.s32.totalorder %v2176, 0
      %vm2389 = vcmp.ne.s32.totalorder %v2183, 0
      %vm2390 = vcmp.ne.s32.totalorder %v2190, 0
      %vm2391 = vcmp.ne.s32.totalorder %v2197, 0
      %vm2392 = vcmp.ne.s32.totalorder %v2204, 0
      %vm2393 = vcmp.ne.s32.totalorder %v2211, 0
      %vm2394 = vcmp.ne.s32.totalorder %v2218, 0
      %vm2395 = vcmp.ne.s32.totalorder %v2225, 0
      %vm2396 = vcmp.ne.s32.totalorder %v2232, 0
      %vm2397 = vcmp.ne.s32.totalorder %v2239, 0
      %vm2398 = vcmp.ne.s32.totalorder %v2246, 0
      %vm2399 = vcmp.ne.s32.totalorder %v2253, 0
      %vm2400 = vcmp.ne.s32.totalorder %v2260, 0
      %vm2401 = vcmp.ne.s32.totalorder %v2267, 0
      %vm2402 = vcmp.ne.s32.totalorder %v2274, 0
      %vm2403 = vcmp.ne.s32.totalorder %v2281, 0
      %vm2404 = vcmp.ne.s32.totalorder %v2288, 0
      %vm2405 = vcmp.ne.s32.totalorder %v2295, 0
      %vm2406 = vcmp.ne.s32.totalorder %v2302, 0
      %vm2407 = vcmp.ne.s32.totalorder %v2309, 0
      %vm2408 = vcmp.ne.s32.totalorder %v2316, 0
      %vm2409 = vcmp.ne.s32.totalorder %v2323, 0
      %vm2410 = vcmp.ne.s32.totalorder %v2330, 0
      %vm2411 = vcmp.ne.s32.totalorder %v2337, 0
      %vm2412 = vcmp.ne.s32.totalorder %v2344, 0
      %vm2413 = vcmp.ne.s32.totalorder %v2351, 0
      %vm2414 = vcmp.ne.s32.totalorder %v2358, 0
      %vm2415 = vcmp.ne.s32.totalorder %v2365, 0
      %vm2416 = vcmp.ne.s32.totalorder %v2372, 0
      %vm2417 = vcmp.ne.s32.totalorder %v2379, 0
      %vm2418 = vcmp.ne.s32.totalorder %v2386, 0
      %vm2419 = vcmp.lt.s32.totalorder %v2169, 0
      %vm2420 = vcmp.lt.s32.totalorder %v2176, 0
      %vm2421 = vcmp.lt.s32.totalorder %v2183, 0
      %vm2422 = vcmp.lt.s32.totalorder %v2190, 0
      %vm2423 = vcmp.lt.s32.totalorder %v2197, 0
      %vm2424 = vcmp.lt.s32.totalorder %v2204, 0
      %vm2425 = vcmp.lt.s32.totalorder %v2211, 0
      %vm2426 = vcmp.lt.s32.totalorder %v2218, 0
      %vm2427 = vcmp.lt.s32.totalorder %v2225, 0
      %vm2428 = vcmp.lt.s32.totalorder %v2232, 0
      %vm2429 = vcmp.lt.s32.totalorder %v2239, 0
      %vm2430 = vcmp.lt.s32.totalorder %v2246, 0
      %vm2431 = vcmp.lt.s32.totalorder %v2253, 0
      %vm2432 = vcmp.lt.s32.totalorder %v2260, 0
      %vm2433 = vcmp.lt.s32.totalorder %v2267, 0
      %vm2434 = vcmp.lt.s32.totalorder %v2274, 0
      %vm2435 = vcmp.lt.s32.totalorder %v2281, 0
      %vm2436 = vcmp.lt.s32.totalorder %v2288, 0
      %vm2437 = vcmp.lt.s32.totalorder %v2295, 0
      %vm2438 = vcmp.lt.s32.totalorder %v2302, 0
      %vm2439 = vcmp.lt.s32.totalorder %v2309, 0
      %vm2440 = vcmp.lt.s32.totalorder %v2316, 0
      %vm2441 = vcmp.lt.s32.totalorder %v2323, 0
      %vm2442 = vcmp.lt.s32.totalorder %v2330, 0
      %vm2443 = vcmp.lt.s32.totalorder %v2337, 0
      %vm2444 = vcmp.lt.s32.totalorder %v2344, 0
      %vm2445 = vcmp.lt.s32.totalorder %v2351, 0
      %vm2446 = vcmp.lt.s32.totalorder %v2358, 0
      %vm2447 = vcmp.lt.s32.totalorder %v2365, 0
      %vm2448 = vcmp.lt.s32.totalorder %v2372, 0
      %vm2449 = vcmp.lt.s32.totalorder %v2379, 0
      %vm2450 = vcmp.lt.s32.totalorder %v2386, 0
      %vm2451 = vmand %vm2419, %vm2387
      %vm2452 = vmand %vm2420, %vm2388
      %vm2453 = vmand %vm2421, %vm2389
      %vm2454 = vmand %vm2422, %vm2390
      %vm2455 = vmand %vm2423, %vm2391
      %vm2456 = vmand %vm2424, %vm2392
      %vm2457 = vmand %vm2425, %vm2393
      %vm2458 = vmand %vm2426, %vm2394
      %vm2459 = vmand %vm2427, %vm2395
      %vm2460 = vmand %vm2428, %vm2396
      %vm2461 = vmand %vm2429, %vm2397
      %vm2462 = vmand %vm2430, %vm2398
      %vm2463 = vmand %vm2431, %vm2399
      %vm2464 = vmand %vm2432, %vm2400
      %vm2465 = vmand %vm2433, %vm2401
      %vm2466 = vmand %vm2434, %vm2402
      %vm2467 = vmand %vm2435, %vm2403
      %vm2468 = vmand %vm2436, %vm2404
      %vm2469 = vmand %vm2437, %vm2405
      %vm2470 = vmand %vm2438, %vm2406
      %vm2471 = vmand %vm2439, %vm2407
      %vm2472 = vmand %vm2440, %vm2408
      %vm2473 = vmand %vm2441, %vm2409
      %vm2474 = vmand %vm2442, %vm2410
      %vm2475 = vmand %vm2443, %vm2411
      %vm2476 = vmand %vm2444, %vm2412
      %vm2477 = vmand %vm2445, %vm2413
      %vm2478 = vmand %vm2446, %vm2414
      %vm2479 = vmand %vm2447, %vm2415
      %vm2480 = vmand %vm2448, %vm2416
      %vm2481 = vmand %vm2449, %vm2417
      %vm2482 = vmand %vm2450, %vm2418
      %v2483 = vadd.s32 %v2169, 16
      %v2484 = vadd.s32 %v2176, 16
      %v2485 = vadd.s32 %v2183, 16
      %v2486 = vadd.s32 %v2190, 16
      %v2487 = vadd.s32 %v2197, 16
      %v2488 = vadd.s32 %v2204, 16
      %v2489 = vadd.s32 %v2211, 16
      %v2490 = vadd.s32 %v2218, 16
      %v2491 = vadd.s32 %v2225, 16
      %v2492 = vadd.s32 %v2232, 16
      %v2493 = vadd.s32 %v2239, 16
      %v2494 = vadd.s32 %v2246, 16
      %v2495 = vadd.s32 %v2253, 16
      %v2496 = vadd.s32 %v2260, 16
      %v2497 = vadd.s32 %v2267, 16
      %v2498 = vadd.s32 %v2274, 16
      %v2499 = vadd.s32 %v2281, 16
      %v2500 = vadd.s32 %v2288, 16
      %v2501 = vadd.s32 %v2295, 16
      %v2502 = vadd.s32 %v2302, 16
      %v2503 = vadd.s32 %v2309, 16
      %v2504 = vadd.s32 %v2316, 16
      %v2505 = vadd.s32 %v2323, 16
      %v2506 = vadd.s32 %v2330, 16
      %v2507 = vadd.s32 %v2337, 16
      %v2508 = vadd.s32 %v2344, 16
      %v2509 = vadd.s32 %v2351, 16
      %v2510 = vadd.s32 %v2358, 16
      %v2511 = vadd.s32 %v2365, 16
      %v2512 = vadd.s32 %v2372, 16
      %v2513 = vadd.s32 %v2379, 16
      %v2514 = vadd.s32 %v2386, 16
      %v2515 = vsel %vm2451, %v2483, %v2169
      %v2516 = vsel %vm2452, %v2484, %v2176
      %v2517 = vsel %vm2453, %v2485, %v2183
      %v2518 = vsel %vm2454, %v2486, %v2190
      %v2519 = vsel %vm2455, %v2487, %v2197
      %v2520 = vsel %vm2456, %v2488, %v2204
      %v2521 = vsel %vm2457, %v2489, %v2211
      %v2522 = vsel %vm2458, %v2490, %v2218
      %v2523 = vsel %vm2459, %v2491, %v2225
      %v2524 = vsel %vm2460, %v2492, %v2232
      %v2525 = vsel %vm2461, %v2493, %v2239
      %v2526 = vsel %vm2462, %v2494, %v2246
      %v2527 = vsel %vm2463, %v2495, %v2253
      %v2528 = vsel %vm2464, %v2496, %v2260
      %v2529 = vsel %vm2465, %v2497, %v2267
      %v2530 = vsel %vm2466, %v2498, %v2274
      %v2531 = vsel %vm2467, %v2499, %v2281
      %v2532 = vsel %vm2468, %v2500, %v2288
      %v2533 = vsel %vm2469, %v2501, %v2295
      %v2534 = vsel %vm2470, %v2502, %v2302
      %v2535 = vsel %vm2471, %v2503, %v2309
      %v2536 = vsel %vm2472, %v2504, %v2316
      %v2537 = vsel %vm2473, %v2505, %v2323
      %v2538 = vsel %vm2474, %v2506, %v2330
      %v2539 = vsel %vm2475, %v2507, %v2337
      %v2540 = vsel %vm2476, %v2508, %v2344
      %v2541 = vsel %vm2477, %v2509, %v2351
      %v2542 = vsel %vm2478, %v2510, %v2358
      %v2543 = vsel %vm2479, %v2511, %v2365
      %v2544 = vsel %vm2480, %v2512, %v2372
      %v2545 = vsel %vm2481, %v2513, %v2379
      %v2546 = vsel %vm2482, %v2514, %v2386
      %vm2547 = vcmp.gt.s32.totalorder %v2515, 0
      %vm2548 = vcmp.gt.s32.totalorder %v2516, 0
      %vm2549 = vcmp.gt.s32.totalorder %v2517, 0
      %vm2550 = vcmp.gt.s32.totalorder %v2518, 0
      %vm2551 = vcmp.gt.s32.totalorder %v2519, 0
      %vm2552 = vcmp.gt.s32.totalorder %v2520, 0
      %vm2553 = vcmp.gt.s32.totalorder %v2521, 0
      %vm2554 = vcmp.gt.s32.totalorder %v2522, 0
      %vm2555 = vcmp.gt.s32.totalorder %v2523, 0
      %vm2556 = vcmp.gt.s32.totalorder %v2524, 0
      %vm2557 = vcmp.gt.s32.totalorder %v2525, 0
      %vm2558 = vcmp.gt.s32.totalorder %v2526, 0
      %vm2559 = vcmp.gt.s32.totalorder %v2527, 0
      %vm2560 = vcmp.gt.s32.totalorder %v2528, 0
      %vm2561 = vcmp.gt.s32.totalorder %v2529, 0
      %vm2562 = vcmp.gt.s32.totalorder %v2530, 0
      %vm2563 = vcmp.gt.s32.totalorder %v2531, 0
      %vm2564 = vcmp.gt.s32.totalorder %v2532, 0
      %vm2565 = vcmp.gt.s32.totalorder %v2533, 0
      %vm2566 = vcmp.gt.s32.totalorder %v2534, 0
      %vm2567 = vcmp.gt.s32.totalorder %v2535, 0
      %vm2568 = vcmp.gt.s32.totalorder %v2536, 0
      %vm2569 = vcmp.gt.s32.totalorder %v2537, 0
      %vm2570 = vcmp.gt.s32.totalorder %v2538, 0
      %vm2571 = vcmp.gt.s32.totalorder %v2539, 0
      %vm2572 = vcmp.gt.s32.totalorder %v2540, 0
      %vm2573 = vcmp.gt.s32.totalorder %v2541, 0
      %vm2574 = vcmp.gt.s32.totalorder %v2542, 0
      %vm2575 = vcmp.gt.s32.totalorder %v2543, 0
      %vm2576 = vcmp.gt.s32.totalorder %v2544, 0
      %vm2577 = vcmp.gt.s32.totalorder %v2545, 0
      %vm2578 = vcmp.gt.s32.totalorder %v2546, 0
      %vm2579 = vcmp.lt.s32.totalorder %v2515, 15
      %vm2580 = vcmp.lt.s32.totalorder %v2516, 15
      %vm2581 = vcmp.lt.s32.totalorder %v2517, 15
      %vm2582 = vcmp.lt.s32.totalorder %v2518, 15
      %vm2583 = vcmp.lt.s32.totalorder %v2519, 15
      %vm2584 = vcmp.lt.s32.totalorder %v2520, 15
      %vm2585 = vcmp.lt.s32.totalorder %v2521, 15
      %vm2586 = vcmp.lt.s32.totalorder %v2522, 15
      %vm2587 = vcmp.lt.s32.totalorder %v2523, 15
      %vm2588 = vcmp.lt.s32.totalorder %v2524, 15
      %vm2589 = vcmp.lt.s32.totalorder %v2525, 15
      %vm2590 = vcmp.lt.s32.totalorder %v2526, 15
      %vm2591 = vcmp.lt.s32.totalorder %v2527, 15
      %vm2592 = vcmp.lt.s32.totalorder %v2528, 15
      %vm2593 = vcmp.lt.s32.totalorder %v2529, 15
      %vm2594 = vcmp.lt.s32.totalorder %v2530, 15
      %vm2595 = vcmp.lt.s32.totalorder %v2531, 15
      %vm2596 = vcmp.lt.s32.totalorder %v2532, 15
      %vm2597 = vcmp.lt.s32.totalorder %v2533, 15
      %vm2598 = vcmp.lt.s32.totalorder %v2534, 15
      %vm2599 = vcmp.lt.s32.totalorder %v2535, 15
      %vm2600 = vcmp.lt.s32.totalorder %v2536, 15
      %vm2601 = vcmp.lt.s32.totalorder %v2537, 15
      %vm2602 = vcmp.lt.s32.totalorder %v2538, 15
      %vm2603 = vcmp.lt.s32.totalorder %v2539, 15
      %vm2604 = vcmp.lt.s32.totalorder %v2540, 15
      %vm2605 = vcmp.lt.s32.totalorder %v2541, 15
      %vm2606 = vcmp.lt.s32.totalorder %v2542, 15
      %vm2607 = vcmp.lt.s32.totalorder %v2543, 15
      %vm2608 = vcmp.lt.s32.totalorder %v2544, 15
      %vm2609 = vcmp.lt.s32.totalorder %v2545, 15
      %vm2610 = vcmp.lt.s32.totalorder %v2546, 15
      %vm2641 = vcmask 1040384
      %v2642 = vrot.slane %v2004, 7
      %v2643 = vrot.slane %v2007, 7
      %v2644 = vsel %vm2641, %v2642, %v2643
      %v2645 = vrot.slane %v2012, 7
      %v2646 = vsel %vm2641, %v2643, %v2645
      %v2647 = vrot.slane %v2015, 7
      %v2648 = vsel %vm2641, %v2645, %v2647
      %v2649 = vrot.slane %v2020, 7
      %v2650 = vsel %vm2641, %v2647, %v2649
      %v2651 = vrot.slane %v2023, 7
      %v2652 = vsel %vm2641, %v2649, %v2651
      %v2653 = vrot.slane %v2028, 7
      %v2654 = vsel %vm2641, %v2651, %v2653
      %v2655 = vrot.slane %v2031, 7
      %v2656 = vsel %vm2641, %v2653, %v2655
      %v2657 = vrot.slane %v2036, 7
      %v2658 = vsel %vm2641, %v2655, %v2657
      %v2659 = vrot.slane %v2039, 7
      %v2660 = vsel %vm2641, %v2657, %v2659
      %v2661 = vrot.slane %v2044, 7
      %v2662 = vsel %vm2641, %v2659, %v2661
      %v2663 = vrot.slane %v2047, 7
      %v2664 = vsel %vm2641, %v2661, %v2663
      %v2665 = vrot.slane %v2052, 7
      %v2666 = vsel %vm2641, %v2663, %v2665
      %v2667 = vrot.slane %v2055, 7
      %v2668 = vsel %vm2641, %v2665, %v2667
      %v2669 = vrot.slane %v2060, 7
      %v2670 = vsel %vm2641, %v2667, %v2669
      %v2671 = vrot.slane %v2063, 7
      %v2672 = vsel %vm2641, %v2669, %v2671
      %v2673 = vrot.slane %v2068, 7
      %v2674 = vsel %vm2641, %v2671, %v2673
      %v2675 = vrot.slane %v2071, 7
      %v2676 = vsel %vm2641, %v2673, %v2675
      %v2677 = vrot.slane %v2076, 7
      %v2678 = vsel %vm2641, %v2675, %v2677
      %v2679 = vrot.slane %v2079, 7
      %v2680 = vsel %vm2641, %v2677, %v2679
      %v2681 = vrot.slane %v2084, 7
      %v2682 = vsel %vm2641, %v2679, %v2681
      %v2683 = vrot.slane %v2087, 7
      %v2684 = vsel %vm2641, %v2681, %v2683
      %v2685 = vrot.slane %v2092, 7
      %v2686 = vsel %vm2641, %v2683, %v2685
      %v2687 = vrot.slane %v2095, 7
      %v2688 = vsel %vm2641, %v2685, %v2687
      %v2689 = vrot.slane %v2100, 7
      %v2690 = vsel %vm2641, %v2687, %v2689
      %v2691 = vrot.slane %v2103, 7
      %v2692 = vsel %vm2641, %v2689, %v2691
      %v2693 = vrot.slane %v2108, 7
      %v2694 = vsel %vm2641, %v2691, %v2693
      %v2695 = vrot.slane %v2111, 7
      %v2696 = vsel %vm2641, %v2693, %v2695
      %v2697 = vrot.slane %v2116, 7
      %v2698 = vsel %vm2641, %v2695, %v2697
      %v2699 = vrot.slane %v2119, 7
      %v2700 = vsel %vm2641, %v2697, %v2699
      %v2731 = vsel %vm2641, 0.0, %v2642
      %v2732 = vsel %vm2547, 1, 0
      %v2733 = vsel %vm2548, 1, 0
      %v2734 = vsel %vm2549, 1, 0
      %v2735 = vsel %vm2550, 1, 0
      %v2736 = vsel %vm2551, 1, 0
      %v2737 = vsel %vm2552, 1, 0
      %v2738 = vsel %vm2553, 1, 0
      %v2739 = vsel %vm2554, 1, 0
      %v2740 = vsel %vm2555, 1, 0
      %v2741 = vsel %vm2556, 1, 0
      %v2742 = vsel %vm2557, 1, 0
      %v2743 = vsel %vm2558, 1, 0
      %v2744 = vsel %vm2559, 1, 0
      %v2745 = vsel %vm2560, 1, 0
      %v2746 = vsel %vm2561, 1, 0
      %v2747 = vsel %vm2562, 1, 0
      %v2748 = vsel %vm2563, 1, 0
      %v2749 = vsel %vm2564, 1, 0
      %v2750 = vsel %vm2565, 1, 0
      %v2751 = vsel %vm2566, 1, 0
      %v2752 = vsel %vm2567, 1, 0
      %v2753 = vsel %vm2568, 1, 0
      %v2754 = vsel %vm2569, 1, 0
      %v2755 = vsel %vm2570, 1, 0
      %v2756 = vsel %vm2571, 1, 0
      %v2757 = vsel %vm2572, 1, 0
      %v2758 = vsel %vm2573, 1, 0
      %v2759 = vsel %vm2574, 1, 0
      %v2760 = vsel %vm2575, 1, 0
      %v2761 = vsel %vm2576, 1, 0
      %v2762 = vsel %vm2577, 1, 0
      %v2763 = vsel %vm2578, 1, 0
      %vm2764 = vcmp.eq.s32.totalorder %v2732, 1
      %vm2765 = vcmp.eq.s32.totalorder %v2733, 1
      %vm2766 = vcmp.eq.s32.totalorder %v2734, 1
      %vm2767 = vcmp.eq.s32.totalorder %v2735, 1
      %vm2768 = vcmp.eq.s32.totalorder %v2736, 1
      %vm2769 = vcmp.eq.s32.totalorder %v2737, 1
      %vm2770 = vcmp.eq.s32.totalorder %v2738, 1
      %vm2771 = vcmp.eq.s32.totalorder %v2739, 1
      %vm2772 = vcmp.eq.s32.totalorder %v2740, 1
      %vm2773 = vcmp.eq.s32.totalorder %v2741, 1
      %vm2774 = vcmp.eq.s32.totalorder %v2742, 1
      %vm2775 = vcmp.eq.s32.totalorder %v2743, 1
      %vm2776 = vcmp.eq.s32.totalorder %v2744, 1
      %vm2777 = vcmp.eq.s32.totalorder %v2745, 1
      %vm2778 = vcmp.eq.s32.totalorder %v2746, 1
      %vm2779 = vcmp.eq.s32.totalorder %v2747, 1
      %vm2780 = vcmp.eq.s32.totalorder %v2748, 1
      %vm2781 = vcmp.eq.s32.totalorder %v2749, 1
      %vm2782 = vcmp.eq.s32.totalorder %v2750, 1
      %vm2783 = vcmp.eq.s32.totalorder %v2751, 1
      %vm2784 = vcmp.eq.s32.totalorder %v2752, 1
      %vm2785 = vcmp.eq.s32.totalorder %v2753, 1
      %vm2786 = vcmp.eq.s32.totalorder %v2754, 1
      %vm2787 = vcmp.eq.s32.totalorder %v2755, 1
      %vm2788 = vcmp.eq.s32.totalorder %v2756, 1
      %vm2789 = vcmp.eq.s32.totalorder %v2757, 1
      %vm2790 = vcmp.eq.s32.totalorder %v2758, 1
      %vm2791 = vcmp.eq.s32.totalorder %v2759, 1
      %vm2792 = vcmp.eq.s32.totalorder %v2760, 1
      %vm2793 = vcmp.eq.s32.totalorder %v2761, 1
      %vm2794 = vcmp.eq.s32.totalorder %v2762, 1
      %vm2795 = vcmp.eq.s32.totalorder %v2763, 1
      %v2796 = vsel %vm2766, %v2731, 0.0
      %v2797 = vsel %vm2767, %v2644, 0.0
      %v2798 = vsel %vm2768, %v2646, 0.0
      %v2799 = vsel %vm2769, %v2648, 0.0
      %v2800 = vsel %vm2770, %v2650, 0.0
      %v2801 = vsel %vm2771, %v2652, 0.0
      %v2802 = vsel %vm2772, %v2654, 0.0
      %v2803 = vsel %vm2773, %v2656, 0.0
      %v2804 = vsel %vm2774, %v2658, 0.0
      %v2805 = vsel %vm2775, %v2660, 0.0
      %v2806 = vsel %vm2776, %v2662, 0.0
      %v2807 = vsel %vm2777, %v2664, 0.0
      %v2808 = vsel %vm2778, %v2666, 0.0
      %v2809 = vsel %vm2779, %v2668, 0.0
      %v2810 = vsel %vm2780, %v2670, 0.0
      %v2811 = vsel %vm2781, %v2672, 0.0
      %v2812 = vsel %vm2782, %v2674, 0.0
      %v2813 = vsel %vm2783, %v2676, 0.0
      %v2814 = vsel %vm2784, %v2678, 0.0
      %v2815 = vsel %vm2785, %v2680, 0.0
      %v2816 = vsel %vm2786, %v2682, 0.0
      %v2817 = vsel %vm2787, %v2684, 0.0
      %v2818 = vsel %vm2788, %v2686, 0.0
      %v2819 = vsel %vm2789, %v2688, 0.0
      %v2820 = vsel %vm2790, %v2690, 0.0
      %v2821 = vsel %vm2791, %v2692, 0.0
      %v2822 = vsel %vm2792, %v2694, 0.0
      %v2823 = vsel %vm2793, %v2696, 0.0
      %v2824 = vsel %vm2794, %v2698, 0.0
      %v2825 = vsel %vm2795, %v2700, 0.0
      %v2826 = vadd.f32 %v2796, 0.0
      %v2827 = vadd.f32 %v2797, 0.0
      %v2828 = vadd.f32 %v2798, 0.0
      %v2829 = vadd.f32 %v2799, 0.0
      %v2830 = vadd.f32 %v2800, 0.0
      %v2831 = vadd.f32 %v2801, 0.0
      %v2832 = vadd.f32 %v2802, 0.0
      %v2833 = vadd.f32 %v2803, 0.0
      %v2834 = vadd.f32 %v2804, 0.0
      %v2835 = vadd.f32 %v2805, 0.0
      %v2836 = vadd.f32 %v2806, 0.0
      %v2837 = vadd.f32 %v2807, 0.0
      %v2838 = vadd.f32 %v2808, 0.0
      %v2839 = vadd.f32 %v2809, 0.0
      %v2840 = vadd.f32 %v2810, 0.0
      %v2841 = vadd.f32 %v2811, 0.0
      %v2842 = vadd.f32 %v2812, 0.0
      %v2843 = vadd.f32 %v2813, 0.0
      %v2844 = vadd.f32 %v2814, 0.0
      %v2845 = vadd.f32 %v2815, 0.0
      %v2846 = vadd.f32 %v2816, 0.0
      %v2847 = vadd.f32 %v2817, 0.0
      %v2848 = vadd.f32 %v2818, 0.0
      %v2849 = vadd.f32 %v2819, 0.0
      %v2850 = vadd.f32 %v2820, 0.0
      %v2851 = vadd.f32 %v2821, 0.0
      %v2852 = vadd.f32 %v2822, 0.0
      %v2853 = vadd.f32 %v2823, 0.0
      %v2854 = vadd.f32 %v2824, 0.0
      %v2855 = vadd.f32 %v2825, 0.0
      %2856 = vrot.lane.b32.xlu0 %v2004, 120
      %v2857 = vpop.permute.xlu0 %2856
      %2858 = vrot.lane.b32.xlu0 %v2007, 120
      %v2859 = vpop.permute.xlu0 %2858
      %2860 = vrot.lane.b32.xlu0 %v2012, 120
      %v2861 = vpop.permute.xlu0 %2860
      %2862 = vrot.lane.b32.xlu0 %v2015, 120
      %v2863 = vpop.permute.xlu0 %2862
      %2864 = vrot.lane.b32.xlu0 %v2020, 120
      %v2865 = vpop.permute.xlu0 %2864
      %2866 = vrot.lane.b32.xlu0 %v2023, 120
      %v2867 = vpop.permute.xlu0 %2866
      %2868 = vrot.lane.b32.xlu0 %v2028, 120
      %v2869 = vpop.permute.xlu0 %2868
      %2870 = vrot.lane.b32.xlu0 %v2031, 120
      %v2871 = vpop.permute.xlu0 %2870
      %2872 = vrot.lane.b32.xlu0 %v2036, 120
      %v2873 = vpop.permute.xlu0 %2872
      %2874 = vrot.lane.b32.xlu0 %v2039, 120
      %v2875 = vpop.permute.xlu0 %2874
      %2876 = vrot.lane.b32.xlu0 %v2044, 120
      %v2877 = vpop.permute.xlu0 %2876
      %2878 = vrot.lane.b32.xlu0 %v2047, 120
      %v2879 = vpop.permute.xlu0 %2878
      %2880 = vrot.lane.b32.xlu0 %v2052, 120
      %v2881 = vpop.permute.xlu0 %2880
      %2882 = vrot.lane.b32.xlu0 %v2055, 120
      %v2883 = vpop.permute.xlu0 %2882
      %2884 = vrot.lane.b32.xlu0 %v2060, 120
      %v2885 = vpop.permute.xlu0 %2884
      %2886 = vrot.lane.b32.xlu0 %v2063, 120
      %v2887 = vpop.permute.xlu0 %2886
      %2888 = vrot.lane.b32.xlu0 %v2068, 120
      %v2889 = vpop.permute.xlu0 %2888
      %2890 = vrot.lane.b32.xlu0 %v2071, 120
      %v2891 = vpop.permute.xlu0 %2890
      %2892 = vrot.lane.b32.xlu0 %v2076, 120
      %v2893 = vpop.permute.xlu0 %2892
      %2894 = vrot.lane.b32.xlu0 %v2079, 120
      %v2895 = vpop.permute.xlu0 %2894
      %2896 = vrot.lane.b32.xlu0 %v2084, 120
      %v2897 = vpop.permute.xlu0 %2896
      %2898 = vrot.lane.b32.xlu0 %v2087, 120
      %v2899 = vpop.permute.xlu0 %2898
      %2900 = vrot.lane.b32.xlu0 %v2092, 120
      %v2901 = vpop.permute.xlu0 %2900
      %2902 = vrot.lane.b32.xlu0 %v2095, 120
      %v2903 = vpop.permute.xlu0 %2902
      %2904 = vrot.lane.b32.xlu0 %v2100, 120
      %v2905 = vpop.permute.xlu0 %2904
      %2906 = vrot.lane.b32.xlu0 %v2103, 120
      %v2907 = vpop.permute.xlu0 %2906
      %2908 = vrot.lane.b32.xlu0 %v2108, 120
      %v2909 = vpop.permute.xlu0 %2908
      %2910 = vrot.lane.b32.xlu0 %v2111, 120
      %v2911 = vpop.permute.xlu0 %2910
      %2912 = vrot.lane.b32.xlu0 %v2116, 120
      %v2913 = vpop.permute.xlu0 %2912
      %2914 = vrot.lane.b32.xlu0 %v2119, 120
      %v2915 = vpop.permute.xlu0 %2914
      %v2946 = vadd.f32 %v2826, %v2857
      %v2947 = vadd.f32 %v2827, %v2859
      %v2948 = vadd.f32 %v2828, %v2861
      %v2949 = vadd.f32 %v2829, %v2863
      %v2950 = vadd.f32 %v2830, %v2865
      %v2951 = vadd.f32 %v2831, %v2867
      %v2952 = vadd.f32 %v2832, %v2869
      %v2953 = vadd.f32 %v2833, %v2871
      %v2954 = vadd.f32 %v2834, %v2873
      %v2955 = vadd.f32 %v2835, %v2875
      %v2956 = vadd.f32 %v2836, %v2877
      %v2957 = vadd.f32 %v2837, %v2879
      %v2958 = vadd.f32 %v2838, %v2881
      %v2959 = vadd.f32 %v2839, %v2883
      %v2960 = vadd.f32 %v2840, %v2885
      %v2961 = vadd.f32 %v2841, %v2887
      %v2962 = vadd.f32 %v2842, %v2889
      %v2963 = vadd.f32 %v2843, %v2891
      %v2964 = vadd.f32 %v2844, %v2893
      %v2965 = vadd.f32 %v2845, %v2895
      %v2966 = vadd.f32 %v2846, %v2897
      %v2967 = vadd.f32 %v2847, %v2899
      %v2968 = vadd.f32 %v2848, %v2901
      %v2969 = vadd.f32 %v2849, %v2903
      %v2970 = vadd.f32 %v2850, %v2905
      %v2971 = vadd.f32 %v2851, %v2907
      %v2972 = vadd.f32 %v2852, %v2909
      %v2973 = vadd.f32 %v2853, %v2911
      %v2974 = vadd.f32 %v2854, %v2913
      %v2975 = vadd.f32 %v2855, %v2915
      %vm2977 = vcmask 1046528
      %v2978 = vrot.slane %v2004, 1
      %v2979 = vrot.slane %v2007, 1
      %v2980 = vsel %vm2977, %v2978, %v2979
      %v2981 = vrot.slane %v2012, 1
      %v2982 = vsel %vm2977, %v2979, %v2981
      %v2983 = vrot.slane %v2015, 1
      %v2984 = vsel %vm2977, %v2981, %v2983
      %v2985 = vrot.slane %v2020, 1
      %v2986 = vsel %vm2977, %v2983, %v2985
      %v2987 = vrot.slane %v2023, 1
      %v2988 = vsel %vm2977, %v2985, %v2987
      %v2989 = vrot.slane %v2028, 1
      %v2990 = vsel %vm2977, %v2987, %v2989
      %v2991 = vrot.slane %v2031, 1
      %v2992 = vsel %vm2977, %v2989, %v2991
      %v2993 = vrot.slane %v2036, 1
      %v2994 = vsel %vm2977, %v2991, %v2993
      %v2995 = vrot.slane %v2039, 1
      %v2996 = vsel %vm2977, %v2993, %v2995
      %v2997 = vrot.slane %v2044, 1
      %v2998 = vsel %vm2977, %v2995, %v2997
      %v2999 = vrot.slane %v2047, 1
      %v3000 = vsel %vm2977, %v2997, %v2999
      %v3001 = vrot.slane %v2052, 1
      %v3002 = vsel %vm2977, %v2999, %v3001
      %v3003 = vrot.slane %v2055, 1
      %v3004 = vsel %vm2977, %v3001, %v3003
      %v3005 = vrot.slane %v2060, 1
      %v3006 = vsel %vm2977, %v3003, %v3005
      %v3007 = vrot.slane %v2063, 1
      %v3008 = vsel %vm2977, %v3005, %v3007
      %v3009 = vrot.slane %v2068, 1
      %v3010 = vsel %vm2977, %v3007, %v3009
      %v3011 = vrot.slane %v2071, 1
      %v3012 = vsel %vm2977, %v3009, %v3011
      %v3013 = vrot.slane %v2076, 1
      %v3014 = vsel %vm2977, %v3011, %v3013
      %v3015 = vrot.slane %v2079, 1
      %v3016 = vsel %vm2977, %v3013, %v3015
      %v3017 = vrot.slane %v2084, 1
      %v3018 = vsel %vm2977, %v3015, %v3017
      %v3019 = vrot.slane %v2087, 1
      %v3020 = vsel %vm2977, %v3017, %v3019
      %v3021 = vrot.slane %v2092, 1
      %v3022 = vsel %vm2977, %v3019, %v3021
      %v3023 = vrot.slane %v2095, 1
      %v3024 = vsel %vm2977, %v3021, %v3023
      %v3025 = vrot.slane %v2100, 1
      %v3026 = vsel %vm2977, %v3023, %v3025
      %v3027 = vrot.slane %v2103, 1
      %v3028 = vsel %vm2977, %v3025, %v3027
      %v3029 = vrot.slane %v2108, 1
      %v3030 = vsel %vm2977, %v3027, %v3029
      %v3031 = vrot.slane %v2111, 1
      %v3032 = vsel %vm2977, %v3029, %v3031
      %v3033 = vrot.slane %v2116, 1
      %v3034 = vsel %vm2977, %v3031, %v3033
      %v3035 = vrot.slane %v2119, 1
      %v3036 = vsel %vm2977, %v3033, %v3035
      %v3037 = vrot.slane %v2124, 1
      %v3038 = vsel %vm2977, %v3035, %v3037
      %3039 = vrot.lane.b32.xlu0 %v2978, 112
      %v3040 = vpop.permute.xlu0 %3039
      %3041 = vrot.lane.b32.xlu0 %v2980, 112
      %v3042 = vpop.permute.xlu0 %3041
      %3043 = vrot.lane.b32.xlu0 %v2982, 112
      %v3044 = vpop.permute.xlu0 %3043
      %3045 = vrot.lane.b32.xlu0 %v2984, 112
      %v3046 = vpop.permute.xlu0 %3045
      %3047 = vrot.lane.b32.xlu0 %v2986, 112
      %v3048 = vpop.permute.xlu0 %3047
      %3049 = vrot.lane.b32.xlu0 %v2988, 112
      %v3050 = vpop.permute.xlu0 %3049
      %3051 = vrot.lane.b32.xlu0 %v2990, 112
      %v3052 = vpop.permute.xlu0 %3051
      %3053 = vrot.lane.b32.xlu0 %v2992, 112
      %v3054 = vpop.permute.xlu0 %3053
      %3055 = vrot.lane.b32.xlu0 %v2994, 112
      %v3056 = vpop.permute.xlu0 %3055
      %3057 = vrot.lane.b32.xlu0 %v2996, 112
      %v3058 = vpop.permute.xlu0 %3057
      %3059 = vrot.lane.b32.xlu0 %v2998, 112
      %v3060 = vpop.permute.xlu0 %3059
      %3061 = vrot.lane.b32.xlu0 %v3000, 112
      %v3062 = vpop.permute.xlu0 %3061
      %3063 = vrot.lane.b32.xlu0 %v3002, 112
      %v3064 = vpop.permute.xlu0 %3063
      %3065 = vrot.lane.b32.xlu0 %v3004, 112
      %v3066 = vpop.permute.xlu0 %3065
      %3067 = vrot.lane.b32.xlu0 %v3006, 112
      %v3068 = vpop.permute.xlu0 %3067
      %3069 = vrot.lane.b32.xlu0 %v3008, 112
      %v3070 = vpop.permute.xlu0 %3069
      %3071 = vrot.lane.b32.xlu0 %v3010, 112
      %v3072 = vpop.permute.xlu0 %3071
      %3073 = vrot.lane.b32.xlu0 %v3012, 112
      %v3074 = vpop.permute.xlu0 %3073
      %3075 = vrot.lane.b32.xlu0 %v3014, 112
      %v3076 = vpop.permute.xlu0 %3075
      %3077 = vrot.lane.b32.xlu0 %v3016, 112
      %v3078 = vpop.permute.xlu0 %3077
      %3079 = vrot.lane.b32.xlu0 %v3018, 112
      %v3080 = vpop.permute.xlu0 %3079
      %3081 = vrot.lane.b32.xlu0 %v3020, 112
      %v3082 = vpop.permute.xlu0 %3081
      %3083 = vrot.lane.b32.xlu0 %v3022, 112
      %v3084 = vpop.permute.xlu0 %3083
      %3085 = vrot.lane.b32.xlu0 %v3024, 112
      %v3086 = vpop.permute.xlu0 %3085
      %3087 = vrot.lane.b32.xlu0 %v3026, 112
      %v3088 = vpop.permute.xlu0 %3087
      %3089 = vrot.lane.b32.xlu0 %v3028, 112
      %v3090 = vpop.permute.xlu0 %3089
      %3091 = vrot.lane.b32.xlu0 %v3030, 112
      %v3092 = vpop.permute.xlu0 %3091
      %3093 = vrot.lane.b32.xlu0 %v3032, 112
      %v3094 = vpop.permute.xlu0 %3093
      %3095 = vrot.lane.b32.xlu0 %v3034, 112
      %v3096 = vpop.permute.xlu0 %3095
      %3097 = vrot.lane.b32.xlu0 %v3036, 112
      %v3098 = vpop.permute.xlu0 %3097
      %3099 = vrot.lane.b32.xlu0 %v3038, 112
      %v3100 = vpop.permute.xlu0 %3099
      %v3132 = vsel %vm2977, 0.0, %v3040
      %v3133 = vsel %vm2579, 1, 0
      %v3134 = vsel %vm2580, 1, 0
      %v3135 = vsel %vm2581, 1, 0
      %v3136 = vsel %vm2582, 1, 0
      %v3137 = vsel %vm2583, 1, 0
      %v3138 = vsel %vm2584, 1, 0
      %v3139 = vsel %vm2585, 1, 0
      %v3140 = vsel %vm2586, 1, 0
      %v3141 = vsel %vm2587, 1, 0
      %v3142 = vsel %vm2588, 1, 0
      %v3143 = vsel %vm2589, 1, 0
      %v3144 = vsel %vm2590, 1, 0
      %v3145 = vsel %vm2591, 1, 0
      %v3146 = vsel %vm2592, 1, 0
      %v3147 = vsel %vm2593, 1, 0
      %v3148 = vsel %vm2594, 1, 0
      %v3149 = vsel %vm2595, 1, 0
      %v3150 = vsel %vm2596, 1, 0
      %v3151 = vsel %vm2597, 1, 0
      %v3152 = vsel %vm2598, 1, 0
      %v3153 = vsel %vm2599, 1, 0
      %v3154 = vsel %vm2600, 1, 0
      %v3155 = vsel %vm2601, 1, 0
      %v3156 = vsel %vm2602, 1, 0
      %v3157 = vsel %vm2603, 1, 0
      %v3158 = vsel %vm2604, 1, 0
      %v3159 = vsel %vm2605, 1, 0
      %v3160 = vsel %vm2606, 1, 0
      %v3161 = vsel %vm2607, 1, 0
      %v3162 = vsel %vm2608, 1, 0
      %v3163 = vsel %vm2609, 1, 0
      %v3164 = vsel %vm2610, 1, 0
      %vm3165 = vcmp.eq.s32.totalorder %v3133, 1
      %vm3166 = vcmp.eq.s32.totalorder %v3134, 1
      %vm3167 = vcmp.eq.s32.totalorder %v3135, 1
      %vm3168 = vcmp.eq.s32.totalorder %v3136, 1
      %vm3169 = vcmp.eq.s32.totalorder %v3137, 1
      %vm3170 = vcmp.eq.s32.totalorder %v3138, 1
      %vm3171 = vcmp.eq.s32.totalorder %v3139, 1
      %vm3172 = vcmp.eq.s32.totalorder %v3140, 1
      %vm3173 = vcmp.eq.s32.totalorder %v3141, 1
      %vm3174 = vcmp.eq.s32.totalorder %v3142, 1
      %vm3175 = vcmp.eq.s32.totalorder %v3143, 1
      %vm3176 = vcmp.eq.s32.totalorder %v3144, 1
      %vm3177 = vcmp.eq.s32.totalorder %v3145, 1
      %vm3178 = vcmp.eq.s32.totalorder %v3146, 1
      %vm3179 = vcmp.eq.s32.totalorder %v3147, 1
      %vm3180 = vcmp.eq.s32.totalorder %v3148, 1
      %vm3181 = vcmp.eq.s32.totalorder %v3149, 1
      %vm3182 = vcmp.eq.s32.totalorder %v3150, 1
      %vm3183 = vcmp.eq.s32.totalorder %v3151, 1
      %vm3184 = vcmp.eq.s32.totalorder %v3152, 1
      %vm3185 = vcmp.eq.s32.totalorder %v3153, 1
      %vm3186 = vcmp.eq.s32.totalorder %v3154, 1
      %vm3187 = vcmp.eq.s32.totalorder %v3155, 1
      %vm3188 = vcmp.eq.s32.totalorder %v3156, 1
      %vm3189 = vcmp.eq.s32.totalorder %v3157, 1
      %vm3190 = vcmp.eq.s32.totalorder %v3158, 1
      %vm3191 = vcmp.eq.s32.totalorder %v3159, 1
      %vm3192 = vcmp.eq.s32.totalorder %v3160, 1
      %vm3193 = vcmp.eq.s32.totalorder %v3161, 1
      %vm3194 = vcmp.eq.s32.totalorder %v3162, 1
      %vm3195 = vcmp.eq.s32.totalorder %v3163, 1
      %vm3196 = vcmp.eq.s32.totalorder %v3164, 1
      %v3197 = vsel %vm3166, %v3132, 0.0
      %v3198 = vsel %vm3167, %v3042, 0.0
      %v3199 = vsel %vm3168, %v3044, 0.0
      %v3200 = vsel %vm3169, %v3046, 0.0
      %v3201 = vsel %vm3170, %v3048, 0.0
      %v3202 = vsel %vm3171, %v3050, 0.0
      %v3203 = vsel %vm3172, %v3052, 0.0
      %v3204 = vsel %vm3173, %v3054, 0.0
      %v3205 = vsel %vm3174, %v3056, 0.0
      %v3206 = vsel %vm3175, %v3058, 0.0
      %v3207 = vsel %vm3176, %v3060, 0.0
      %v3208 = vsel %vm3177, %v3062, 0.0
      %v3209 = vsel %vm3178, %v3064, 0.0
      %v3210 = vsel %vm3179, %v3066, 0.0
      %v3211 = vsel %vm3180, %v3068, 0.0
      %v3212 = vsel %vm3181, %v3070, 0.0
      %v3213 = vsel %vm3182, %v3072, 0.0
      %v3214 = vsel %vm3183, %v3074, 0.0
      %v3215 = vsel %vm3184, %v3076, 0.0
      %v3216 = vsel %vm3185, %v3078, 0.0
      %v3217 = vsel %vm3186, %v3080, 0.0
      %v3218 = vsel %vm3187, %v3082, 0.0
      %v3219 = vsel %vm3188, %v3084, 0.0
      %v3220 = vsel %vm3189, %v3086, 0.0
      %v3221 = vsel %vm3190, %v3088, 0.0
      %v3222 = vsel %vm3191, %v3090, 0.0
      %v3223 = vsel %vm3192, %v3092, 0.0
      %v3224 = vsel %vm3193, %v3094, 0.0
      %v3225 = vsel %vm3194, %v3096, 0.0
      %v3226 = vsel %vm3195, %v3098, 0.0
      %v3227 = vsel %vm3196, %v3100, 0.0
      %v3228 = vadd.f32 %v3197, 0.0
      %v3229 = vadd.f32 %v2946, %v3198
      %v3230 = vadd.f32 %v2947, %v3199
      %v3231 = vadd.f32 %v2948, %v3200
      %v3232 = vadd.f32 %v2949, %v3201
      %v3233 = vadd.f32 %v2950, %v3202
      %v3234 = vadd.f32 %v2951, %v3203
      %v3235 = vadd.f32 %v2952, %v3204
      %v3236 = vadd.f32 %v2953, %v3205
      %v3237 = vadd.f32 %v2954, %v3206
      %v3238 = vadd.f32 %v2955, %v3207
      %v3239 = vadd.f32 %v2956, %v3208
      %v3240 = vadd.f32 %v2957, %v3209
      %v3241 = vadd.f32 %v2958, %v3210
      %v3242 = vadd.f32 %v2959, %v3211
      %v3243 = vadd.f32 %v2960, %v3212
      %v3244 = vadd.f32 %v2961, %v3213
      %v3245 = vadd.f32 %v2962, %v3214
      %v3246 = vadd.f32 %v2963, %v3215
      %v3247 = vadd.f32 %v2964, %v3216
      %v3248 = vadd.f32 %v2965, %v3217
      %v3249 = vadd.f32 %v2966, %v3218
      %v3250 = vadd.f32 %v2967, %v3219
      %v3251 = vadd.f32 %v2968, %v3220
      %v3252 = vadd.f32 %v2969, %v3221
      %v3253 = vadd.f32 %v2970, %v3222
      %v3254 = vadd.f32 %v2971, %v3223
      %v3255 = vadd.f32 %v2972, %v3224
      %v3256 = vadd.f32 %v2973, %v3225
      %v3257 = vadd.f32 %v2974, %v3226
      %v3258 = vadd.f32 %v2975, %v3227
      %v3260 = vrot.slane %v2124, 7
      %v3261 = vsel %vm2641, %v2699, %v3260
      %v3262 = vrot.slane %v2127, 7
      %v3263 = vsel %vm2641, %v3260, %v3262
      %3264 = vrot.lane.b32.xlu0 %v2642, 104
      %v3265 = vpop.permute.xlu0 %3264
      %3266 = vrot.lane.b32.xlu0 %v2644, 104
      %v3267 = vpop.permute.xlu0 %3266
      %3268 = vrot.lane.b32.xlu0 %v2646, 104
      %v3269 = vpop.permute.xlu0 %3268
      %3270 = vrot.lane.b32.xlu0 %v2648, 104
      %v3271 = vpop.permute.xlu0 %3270
      %3272 = vrot.lane.b32.xlu0 %v2650, 104
      %v3273 = vpop.permute.xlu0 %3272
      %3274 = vrot.lane.b32.xlu0 %v2652, 104
      %v3275 = vpop.permute.xlu0 %3274
      %3276 = vrot.lane.b32.xlu0 %v2654, 104
      %v3277 = vpop.permute.xlu0 %3276
      %3278 = vrot.lane.b32.xlu0 %v2656, 104
      %v3279 = vpop.permute.xlu0 %3278
      %3280 = vrot.lane.b32.xlu0 %v2658, 104
      %v3281 = vpop.permute.xlu0 %3280
      %3282 = vrot.lane.b32.xlu0 %v2660, 104
      %v3283 = vpop.permute.xlu0 %3282
      %3284 = vrot.lane.b32.xlu0 %v2662, 104
      %v3285 = vpop.permute.xlu0 %3284
      %3286 = vrot.lane.b32.xlu0 %v2664, 104
      %v3287 = vpop.permute.xlu0 %3286
      %3288 = vrot.lane.b32.xlu0 %v2666, 104
      %v3289 = vpop.permute.xlu0 %3288
      %3290 = vrot.lane.b32.xlu0 %v2668, 104
      %v3291 = vpop.permute.xlu0 %3290
      %3292 = vrot.lane.b32.xlu0 %v2670, 104
      %v3293 = vpop.permute.xlu0 %3292
      %3294 = vrot.lane.b32.xlu0 %v2672, 104
      %v3295 = vpop.permute.xlu0 %3294
      %3296 = vrot.lane.b32.xlu0 %v2674, 104
      %v3297 = vpop.permute.xlu0 %3296
      %3298 = vrot.lane.b32.xlu0 %v2676, 104
      %v3299 = vpop.permute.xlu0 %3298
      %3300 = vrot.lane.b32.xlu0 %v2678, 104
      %v3301 = vpop.permute.xlu0 %3300
      %3302 = vrot.lane.b32.xlu0 %v2680, 104
      %v3303 = vpop.permute.xlu0 %3302
      %3304 = vrot.lane.b32.xlu0 %v2682, 104
      %v3305 = vpop.permute.xlu0 %3304
      %3306 = vrot.lane.b32.xlu0 %v2684, 104
      %v3307 = vpop.permute.xlu0 %3306
      %3308 = vrot.lane.b32.xlu0 %v2686, 104
      %v3309 = vpop.permute.xlu0 %3308
      %3310 = vrot.lane.b32.xlu0 %v2688, 104
      %v3311 = vpop.permute.xlu0 %3310
      %3312 = vrot.lane.b32.xlu0 %v2690, 104
      %v3313 = vpop.permute.xlu0 %3312
      %3314 = vrot.lane.b32.xlu0 %v2692, 104
      %v3315 = vpop.permute.xlu0 %3314
      %3316 = vrot.lane.b32.xlu0 %v2694, 104
      %v3317 = vpop.permute.xlu0 %3316
      %3318 = vrot.lane.b32.xlu0 %v2696, 104
      %v3319 = vpop.permute.xlu0 %3318
      %3320 = vrot.lane.b32.xlu0 %v2698, 104
      %v3321 = vpop.permute.xlu0 %3320
      %3322 = vrot.lane.b32.xlu0 %v2700, 104
      %v3323 = vpop.permute.xlu0 %3322
      %3324 = vrot.lane.b32.xlu0 %v3261, 104
      %v3325 = vpop.permute.xlu0 %3324
      %3326 = vrot.lane.b32.xlu0 %v3263, 104
      %v3327 = vpop.permute.xlu0 %3326
      %v3360 = vsel %vm2641, 0.0, %v3265
      %v3361 = vsel %vm2764, %v3360, 0.0
      %v3362 = vsel %vm2765, %v3267, 0.0
      %v3363 = vsel %vm2766, %v3269, 0.0
      %v3364 = vsel %vm2767, %v3271, 0.0
      %v3365 = vsel %vm2768, %v3273, 0.0
      %v3366 = vsel %vm2769, %v3275, 0.0
      %v3367 = vsel %vm2770, %v3277, 0.0
      %v3368 = vsel %vm2771, %v3279, 0.0
      %v3369 = vsel %vm2772, %v3281, 0.0
      %v3370 = vsel %vm2773, %v3283, 0.0
      %v3371 = vsel %vm2774, %v3285, 0.0
      %v3372 = vsel %vm2775, %v3287, 0.0
      %v3373 = vsel %vm2776, %v3289, 0.0
      %v3374 = vsel %vm2777, %v3291, 0.0
      %v3375 = vsel %vm2778, %v3293, 0.0
      %v3376 = vsel %vm2779, %v3295, 0.0
      %v3377 = vsel %vm2780, %v3297, 0.0
      %v3378 = vsel %vm2781, %v3299, 0.0
      %v3379 = vsel %vm2782, %v3301, 0.0
      %v3380 = vsel %vm2783, %v3303, 0.0
      %v3381 = vsel %vm2784, %v3305, 0.0
      %v3382 = vsel %vm2785, %v3307, 0.0
      %v3383 = vsel %vm2786, %v3309, 0.0
      %v3384 = vsel %vm2787, %v3311, 0.0
      %v3385 = vsel %vm2788, %v3313, 0.0
      %v3386 = vsel %vm2789, %v3315, 0.0
      %v3387 = vsel %vm2790, %v3317, 0.0
      %v3388 = vsel %vm2791, %v3319, 0.0
      %v3389 = vsel %vm2792, %v3321, 0.0
      %v3390 = vsel %vm2793, %v3323, 0.0
      %v3391 = vsel %vm2794, %v3325, 0.0
      %v3392 = vsel %vm2795, %v3327, 0.0
      %v3393 = vadd.f32 %v3361, 0.0
      %v3394 = vadd.f32 %v3228, %v3362
      %v3395 = vadd.f32 %v3229, %v3363
      %v3396 = vadd.f32 %v3230, %v3364
      %v3397 = vadd.f32 %v3231, %v3365
      %v3398 = vadd.f32 %v3232, %v3366
      %v3399 = vadd.f32 %v3233, %v3367
      %v3400 = vadd.f32 %v3234, %v3368
      %v3401 = vadd.f32 %v3235, %v3369
      %v3402 = vadd.f32 %v3236, %v3370
      %v3403 = vadd.f32 %v3237, %v3371
      %v3404 = vadd.f32 %v3238, %v3372
      %v3405 = vadd.f32 %v3239, %v3373
      %v3406 = vadd.f32 %v3240, %v3374
      %v3407 = vadd.f32 %v3241, %v3375
      %v3408 = vadd.f32 %v3242, %v3376
      %v3409 = vadd.f32 %v3243, %v3377
      %v3410 = vadd.f32 %v3244, %v3378
      %v3411 = vadd.f32 %v3245, %v3379
      %v3412 = vadd.f32 %v3246, %v3380
      %v3413 = vadd.f32 %v3247, %v3381
      %v3414 = vadd.f32 %v3248, %v3382
      %v3415 = vadd.f32 %v3249, %v3383
      %v3416 = vadd.f32 %v3250, %v3384
      %v3417 = vadd.f32 %v3251, %v3385
      %v3418 = vadd.f32 %v3252, %v3386
      %v3419 = vadd.f32 %v3253, %v3387
      %v3420 = vadd.f32 %v3254, %v3388
      %v3421 = vadd.f32 %v3255, %v3389
      %v3422 = vadd.f32 %v3256, %v3390
      %v3423 = vadd.f32 %v3257, %v3391
      %v3424 = vadd.f32 %v3258, %v3392
      %3425 = vrot.lane.b32.xlu0 %v2004, 96
      %v3426 = vpop.permute.xlu0 %3425
      %3427 = vrot.lane.b32.xlu0 %v2007, 96
      %v3428 = vpop.permute.xlu0 %3427
      %3429 = vrot.lane.b32.xlu0 %v2012, 96
      %v3430 = vpop.permute.xlu0 %3429
      %3431 = vrot.lane.b32.xlu0 %v2015, 96
      %v3432 = vpop.permute.xlu0 %3431
      %3433 = vrot.lane.b32.xlu0 %v2020, 96
      %v3434 = vpop.permute.xlu0 %3433
      %3435 = vrot.lane.b32.xlu0 %v2023, 96
      %v3436 = vpop.permute.xlu0 %3435
      %3437 = vrot.lane.b32.xlu0 %v2028, 96
      %v3438 = vpop.permute.xlu0 %3437
      %3439 = vrot.lane.b32.xlu0 %v2031, 96
      %v3440 = vpop.permute.xlu0 %3439
      %3441 = vrot.lane.b32.xlu0 %v2036, 96
      %v3442 = vpop.permute.xlu0 %3441
      %3443 = vrot.lane.b32.xlu0 %v2039, 96
      %v3444 = vpop.permute.xlu0 %3443
      %3445 = vrot.lane.b32.xlu0 %v2044, 96
      %v3446 = vpop.permute.xlu0 %3445
      %3447 = vrot.lane.b32.xlu0 %v2047, 96
      %v3448 = vpop.permute.xlu0 %3447
      %3449 = vrot.lane.b32.xlu0 %v2052, 96
      %v3450 = vpop.permute.xlu0 %3449
      %3451 = vrot.lane.b32.xlu0 %v2055, 96
      %v3452 = vpop.permute.xlu0 %3451
      %3453 = vrot.lane.b32.xlu0 %v2060, 96
      %v3454 = vpop.permute.xlu0 %3453
      %3455 = vrot.lane.b32.xlu0 %v2063, 96
      %v3456 = vpop.permute.xlu0 %3455
      %3457 = vrot.lane.b32.xlu0 %v2068, 96
      %v3458 = vpop.permute.xlu0 %3457
      %3459 = vrot.lane.b32.xlu0 %v2071, 96
      %v3460 = vpop.permute.xlu0 %3459
      %3461 = vrot.lane.b32.xlu0 %v2076, 96
      %v3462 = vpop.permute.xlu0 %3461
      %3463 = vrot.lane.b32.xlu0 %v2079, 96
      %v3464 = vpop.permute.xlu0 %3463
      %3465 = vrot.lane.b32.xlu0 %v2084, 96
      %v3466 = vpop.permute.xlu0 %3465
      %3467 = vrot.lane.b32.xlu0 %v2087, 96
      %v3468 = vpop.permute.xlu0 %3467
      %3469 = vrot.lane.b32.xlu0 %v2092, 96
      %v3470 = vpop.permute.xlu0 %3469
      %3471 = vrot.lane.b32.xlu0 %v2095, 96
      %v3472 = vpop.permute.xlu0 %3471
      %3473 = vrot.lane.b32.xlu0 %v2100, 96
      %v3474 = vpop.permute.xlu0 %3473
      %3475 = vrot.lane.b32.xlu0 %v2103, 96
      %v3476 = vpop.permute.xlu0 %3475
      %3477 = vrot.lane.b32.xlu0 %v2108, 96
      %v3478 = vpop.permute.xlu0 %3477
      %3479 = vrot.lane.b32.xlu0 %v2111, 96
      %v3480 = vpop.permute.xlu0 %3479
      %3481 = vrot.lane.b32.xlu0 %v2116, 96
      %v3482 = vpop.permute.xlu0 %3481
      %3483 = vrot.lane.b32.xlu0 %v2119, 96
      %v3484 = vpop.permute.xlu0 %3483
      %3485 = vrot.lane.b32.xlu0 %v2124, 96
      %v3486 = vpop.permute.xlu0 %3485
      %3487 = vrot.lane.b32.xlu0 %v2127, 96
      %v3488 = vpop.permute.xlu0 %3487
      %v3521 = vadd.f32 %v3393, %v3426
      %v3522 = vadd.f32 %v3394, %v3428
      %v3523 = vadd.f32 %v3395, %v3430
      %v3524 = vadd.f32 %v3396, %v3432
      %v3525 = vadd.f32 %v3397, %v3434
      %v3526 = vadd.f32 %v3398, %v3436
      %v3527 = vadd.f32 %v3399, %v3438
      %v3528 = vadd.f32 %v3400, %v3440
      %v3529 = vadd.f32 %v3401, %v3442
      %v3530 = vadd.f32 %v3402, %v3444
      %v3531 = vadd.f32 %v3403, %v3446
      %v3532 = vadd.f32 %v3404, %v3448
      %v3533 = vadd.f32 %v3405, %v3450
      %v3534 = vadd.f32 %v3406, %v3452
      %v3535 = vadd.f32 %v3407, %v3454
      %v3536 = vadd.f32 %v3408, %v3456
      %v3537 = vadd.f32 %v3409, %v3458
      %v3538 = vadd.f32 %v3410, %v3460
      %v3539 = vadd.f32 %v3411, %v3462
      %v3540 = vadd.f32 %v3412, %v3464
      %v3541 = vadd.f32 %v3413, %v3466
      %v3542 = vadd.f32 %v3414, %v3468
      %v3543 = vadd.f32 %v3415, %v3470
      %v3544 = vadd.f32 %v3416, %v3472
      %v3545 = vadd.f32 %v3417, %v3474
      %v3546 = vadd.f32 %v3418, %v3476
      %v3547 = vadd.f32 %v3419, %v3478
      %v3548 = vadd.f32 %v3420, %v3480
      %v3549 = vadd.f32 %v3421, %v3482
      %v3550 = vadd.f32 %v3422, %v3484
      %v3551 = vadd.f32 %v3423, %v3486
      %v3552 = vadd.f32 %v3424, %v3488
      %v3553 = vrot.slane %v2127, 1
      %v3554 = vsel %vm2977, %v3037, %v3553
      %v3587 = vsel %vm2977, %v3553, 0.0
      %v3588 = vsel %vm3165, %v2980, 0.0
      %v3589 = vsel %vm3166, %v2982, 0.0
      %v3590 = vsel %vm3167, %v2984, 0.0
      %v3591 = vsel %vm3168, %v2986, 0.0
      %v3592 = vsel %vm3169, %v2988, 0.0
      %v3593 = vsel %vm3170, %v2990, 0.0
      %v3594 = vsel %vm3171, %v2992, 0.0
      %v3595 = vsel %vm3172, %v2994, 0.0
      %v3596 = vsel %vm3173, %v2996, 0.0
      %v3597 = vsel %vm3174, %v2998, 0.0
      %v3598 = vsel %vm3175, %v3000, 0.0
      %v3599 = vsel %vm3176, %v3002, 0.0
      %v3600 = vsel %vm3177, %v3004, 0.0
      %v3601 = vsel %vm3178, %v3006, 0.0
      %v3602 = vsel %vm3179, %v3008, 0.0
      %v3603 = vsel %vm3180, %v3010, 0.0
      %v3604 = vsel %vm3181, %v3012, 0.0
      %v3605 = vsel %vm3182, %v3014, 0.0
      %v3606 = vsel %vm3183, %v3016, 0.0
      %v3607 = vsel %vm3184, %v3018, 0.0
      %v3608 = vsel %vm3185, %v3020, 0.0
      %v3609 = vsel %vm3186, %v3022, 0.0
      %v3610 = vsel %vm3187, %v3024, 0.0
      %v3611 = vsel %vm3188, %v3026, 0.0
      %v3612 = vsel %vm3189, %v3028, 0.0
      %v3613 = vsel %vm3190, %v3030, 0.0
      %v3614 = vsel %vm3191, %v3032, 0.0
      %v3615 = vsel %vm3192, %v3034, 0.0
      %v3616 = vsel %vm3193, %v3036, 0.0
      %v3617 = vsel %vm3194, %v3038, 0.0
      %v3618 = vsel %vm3195, %v3554, 0.0
      %v3619 = vsel %vm3196, %v3587, 0.0
      %3652 = vrot.lane.b32.xlu0 %v3588, 88
      %v3653 = vpop.permute.xlu0 %3652
      %3654 = vrot.lane.b32.xlu0 %v3589, 88
      %v3655 = vpop.permute.xlu0 %3654
      %3656 = vrot.lane.b32.xlu0 %v3590, 88
      %v3657 = vpop.permute.xlu0 %3656
      %3658 = vrot.lane.b32.xlu0 %v3591, 88
      %v3659 = vpop.permute.xlu0 %3658
      %3660 = vrot.lane.b32.xlu0 %v3592, 88
      %v3661 = vpop.permute.xlu0 %3660
      %3662 = vrot.lane.b32.xlu0 %v3593, 88
      %v3663 = vpop.permute.xlu0 %3662
      %3664 = vrot.lane.b32.xlu0 %v3594, 88
      %v3665 = vpop.permute.xlu0 %3664
      %3666 = vrot.lane.b32.xlu0 %v3595, 88
      %v3667 = vpop.permute.xlu0 %3666
      %3668 = vrot.lane.b32.xlu0 %v3596, 88
      %v3669 = vpop.permute.xlu0 %3668
      %3670 = vrot.lane.b32.xlu0 %v3597, 88
      %v3671 = vpop.permute.xlu0 %3670
      %3672 = vrot.lane.b32.xlu0 %v3598, 88
      %v3673 = vpop.permute.xlu0 %3672
      %3674 = vrot.lane.b32.xlu0 %v3599, 88
      %v3675 = vpop.permute.xlu0 %3674
      %3676 = vrot.lane.b32.xlu0 %v3600, 88
      %v3677 = vpop.permute.xlu0 %3676
      %3678 = vrot.lane.b32.xlu0 %v3601, 88
      %v3679 = vpop.permute.xlu0 %3678
      %3680 = vrot.lane.b32.xlu0 %v3602, 88
      %v3681 = vpop.permute.xlu0 %3680
      %3682 = vrot.lane.b32.xlu0 %v3603, 88
      %v3683 = vpop.permute.xlu0 %3682
      %3684 = vrot.lane.b32.xlu0 %v3604, 88
      %v3685 = vpop.permute.xlu0 %3684
      %3686 = vrot.lane.b32.xlu0 %v3605, 88
      %v3687 = vpop.permute.xlu0 %3686
      %3688 = vrot.lane.b32.xlu0 %v3606, 88
      %v3689 = vpop.permute.xlu0 %3688
      %3690 = vrot.lane.b32.xlu0 %v3607, 88
      %v3691 = vpop.permute.xlu0 %3690
      %3692 = vrot.lane.b32.xlu0 %v3608, 88
      %v3693 = vpop.permute.xlu0 %3692
      %3694 = vrot.lane.b32.xlu0 %v3609, 88
      %v3695 = vpop.permute.xlu0 %3694
      %3696 = vrot.lane.b32.xlu0 %v3610, 88
      %v3697 = vpop.permute.xlu0 %3696
      %3698 = vrot.lane.b32.xlu0 %v3611, 88
      %v3699 = vpop.permute.xlu0 %3698
      %3700 = vrot.lane.b32.xlu0 %v3612, 88
      %v3701 = vpop.permute.xlu0 %3700
      %3702 = vrot.lane.b32.xlu0 %v3613, 88
      %v3703 = vpop.permute.xlu0 %3702
      %3704 = vrot.lane.b32.xlu0 %v3614, 88
      %v3705 = vpop.permute.xlu0 %3704
      %3706 = vrot.lane.b32.xlu0 %v3615, 88
      %v3707 = vpop.permute.xlu0 %3706
      %3708 = vrot.lane.b32.xlu0 %v3616, 88
      %v3709 = vpop.permute.xlu0 %3708
      %3710 = vrot.lane.b32.xlu0 %v3617, 88
      %v3711 = vpop.permute.xlu0 %3710
      %3712 = vrot.lane.b32.xlu0 %v3618, 88
      %v3713 = vpop.permute.xlu0 %3712
      %3714 = vrot.lane.b32.xlu0 %v3619, 88
      %v3715 = vpop.permute.xlu0 %3714
      %v3748 = vadd.f32 %v3521, %v3653
      %v3749 = vadd.f32 %v3522, %v3655
      %v3750 = vadd.f32 %v3523, %v3657
      %v3751 = vadd.f32 %v3524, %v3659
      %v3752 = vadd.f32 %v3525, %v3661
      %v3753 = vadd.f32 %v3526, %v3663
      %v3754 = vadd.f32 %v3527, %v3665
      %v3755 = vadd.f32 %v3528, %v3667
      %v3756 = vadd.f32 %v3529, %v3669
      %v3757 = vadd.f32 %v3530, %v3671
      %v3758 = vadd.f32 %v3531, %v3673
      %v3759 = vadd.f32 %v3532, %v3675
      %v3760 = vadd.f32 %v3533, %v3677
      %v3761 = vadd.f32 %v3534, %v3679
      %v3762 = vadd.f32 %v3535, %v3681
      %v3763 = vadd.f32 %v3536, %v3683
      %v3764 = vadd.f32 %v3537, %v3685
      %v3765 = vadd.f32 %v3538, %v3687
      %v3766 = vadd.f32 %v3539, %v3689
      %v3767 = vadd.f32 %v3540, %v3691
      %v3768 = vadd.f32 %v3541, %v3693
      %v3769 = vadd.f32 %v3542, %v3695
      %v3770 = vadd.f32 %v3543, %v3697
      %v3771 = vadd.f32 %v3544, %v3699
      %v3772 = vadd.f32 %v3545, %v3701
      %v3773 = vadd.f32 %v3546, %v3703
      %v3774 = vadd.f32 %v3547, %v3705
      %v3775 = vadd.f32 %v3548, %v3707
      %v3776 = vadd.f32 %v3549, %v3709
      %v3777 = vadd.f32 %v3550, %v3711
      %v3778 = vadd.f32 %v3551, %v3713
      %v3779 = vadd.f32 %v3552, %v3715
      %v3783 = vsel %vm2641, %v3262, 0.0
      %v3784 = vsel %vm2764, %v2646, 0.0
      %v3785 = vsel %vm2765, %v2648, 0.0
      %v3786 = vsel %vm2766, %v2650, 0.0
      %v3787 = vsel %vm2767, %v2652, 0.0
      %v3788 = vsel %vm2768, %v2654, 0.0
      %v3789 = vsel %vm2769, %v2656, 0.0
      %v3790 = vsel %vm2770, %v2658, 0.0
      %v3791 = vsel %vm2771, %v2660, 0.0
      %v3792 = vsel %vm2772, %v2662, 0.0
      %v3793 = vsel %vm2773, %v2664, 0.0
      %v3794 = vsel %vm2774, %v2666, 0.0
      %v3795 = vsel %vm2775, %v2668, 0.0
      %v3796 = vsel %vm2776, %v2670, 0.0
      %v3797 = vsel %vm2777, %v2672, 0.0
      %v3798 = vsel %vm2778, %v2674, 0.0
      %v3799 = vsel %vm2779, %v2676, 0.0
      %v3800 = vsel %vm2780, %v2678, 0.0
      %v3801 = vsel %vm2781, %v2680, 0.0
      %v3802 = vsel %vm2782, %v2682, 0.0
      %v3803 = vsel %vm2783, %v2684, 0.0
      %v3804 = vsel %vm2784, %v2686, 0.0
      %v3805 = vsel %vm2785, %v2688, 0.0
      %v3806 = vsel %vm2786, %v2690, 0.0
      %v3807 = vsel %vm2787, %v2692, 0.0
      %v3808 = vsel %vm2788, %v2694, 0.0
      %v3809 = vsel %vm2789, %v2696, 0.0
      %v3810 = vsel %vm2790, %v2698, 0.0
      %v3811 = vsel %vm2791, %v2700, 0.0
      %v3812 = vsel %vm2792, %v3261, 0.0
      %v3813 = vsel %vm2793, %v3263, 0.0
      %v3814 = vsel %vm2794, %v3783, 0.0
      %3847 = vrot.lane.b32.xlu0 %v3784, 80
      %v3848 = vpop.permute.xlu0 %3847
      %3849 = vrot.lane.b32.xlu0 %v3785, 80
      %v3850 = vpop.permute.xlu0 %3849
      %3851 = vrot.lane.b32.xlu0 %v3786, 80
      %v3852 = vpop.permute.xlu0 %3851
      %3853 = vrot.lane.b32.xlu0 %v3787, 80
      %v3854 = vpop.permute.xlu0 %3853
      %3855 = vrot.lane.b32.xlu0 %v3788, 80
      %v3856 = vpop.permute.xlu0 %3855
      %3857 = vrot.lane.b32.xlu0 %v3789, 80
      %v3858 = vpop.permute.xlu0 %3857
      %3859 = vrot.lane.b32.xlu0 %v3790, 80
      %v3860 = vpop.permute.xlu0 %3859
      %3861 = vrot.lane.b32.xlu0 %v3791, 80
      %v3862 = vpop.permute.xlu0 %3861
      %3863 = vrot.lane.b32.xlu0 %v3792, 80
      %v3864 = vpop.permute.xlu0 %3863
      %3865 = vrot.lane.b32.xlu0 %v3793, 80
      %v3866 = vpop.permute.xlu0 %3865
      %3867 = vrot.lane.b32.xlu0 %v3794, 80
      %v3868 = vpop.permute.xlu0 %3867
      %3869 = vrot.lane.b32.xlu0 %v3795, 80
      %v3870 = vpop.permute.xlu0 %3869
      %3871 = vrot.lane.b32.xlu0 %v3796, 80
      %v3872 = vpop.permute.xlu0 %3871
      %3873 = vrot.lane.b32.xlu0 %v3797, 80
      %v3874 = vpop.permute.xlu0 %3873
      %3875 = vrot.lane.b32.xlu0 %v3798, 80
      %v3876 = vpop.permute.xlu0 %3875
      %3877 = vrot.lane.b32.xlu0 %v3799, 80
      %v3878 = vpop.permute.xlu0 %3877
      %3879 = vrot.lane.b32.xlu0 %v3800, 80
      %v3880 = vpop.permute.xlu0 %3879
      %3881 = vrot.lane.b32.xlu0 %v3801, 80
      %v3882 = vpop.permute.xlu0 %3881
      %3883 = vrot.lane.b32.xlu0 %v3802, 80
      %v3884 = vpop.permute.xlu0 %3883
      %3885 = vrot.lane.b32.xlu0 %v3803, 80
      %v3886 = vpop.permute.xlu0 %3885
      %3887 = vrot.lane.b32.xlu0 %v3804, 80
      %v3888 = vpop.permute.xlu0 %3887
      %3889 = vrot.lane.b32.xlu0 %v3805, 80
      %v3890 = vpop.permute.xlu0 %3889
      %3891 = vrot.lane.b32.xlu0 %v3806, 80
      %v3892 = vpop.permute.xlu0 %3891
      %3893 = vrot.lane.b32.xlu0 %v3807, 80
      %v3894 = vpop.permute.xlu0 %3893
      %3895 = vrot.lane.b32.xlu0 %v3808, 80
      %v3896 = vpop.permute.xlu0 %3895
      %3897 = vrot.lane.b32.xlu0 %v3809, 80
      %v3898 = vpop.permute.xlu0 %3897
      %3899 = vrot.lane.b32.xlu0 %v3810, 80
      %v3900 = vpop.permute.xlu0 %3899
      %3901 = vrot.lane.b32.xlu0 %v3811, 80
      %v3902 = vpop.permute.xlu0 %3901
      %3903 = vrot.lane.b32.xlu0 %v3812, 80
      %v3904 = vpop.permute.xlu0 %3903
      %3905 = vrot.lane.b32.xlu0 %v3813, 80
      %v3906 = vpop.permute.xlu0 %3905
      %3907 = vrot.lane.b32.xlu0 %v3814, 80
      %v3908 = vpop.permute.xlu0 %3907
      %3909 = vrot.lane.b32.xlu0 0.0, 80
      %v3910 = vpop.permute.xlu0 %3909
      %v3943 = vadd.f32 %v3748, %v3848
      %v3944 = vadd.f32 %v3749, %v3850
      %v3945 = vadd.f32 %v3750, %v3852
      %v3946 = vadd.f32 %v3751, %v3854
      %v3947 = vadd.f32 %v3752, %v3856
      %v3948 = vadd.f32 %v3753, %v3858
      %v3949 = vadd.f32 %v3754, %v3860
      %v3950 = vadd.f32 %v3755, %v3862
      %v3951 = vadd.f32 %v3756, %v3864
      %v3952 = vadd.f32 %v3757, %v3866
      %v3953 = vadd.f32 %v3758, %v3868
      %v3954 = vadd.f32 %v3759, %v3870
      %v3955 = vadd.f32 %v3760, %v3872
      %v3956 = vadd.f32 %v3761, %v3874
      %v3957 = vadd.f32 %v3762, %v3876
      %v3958 = vadd.f32 %v3763, %v3878
      %v3959 = vadd.f32 %v3764, %v3880
      %v3960 = vadd.f32 %v3765, %v3882
      %v3961 = vadd.f32 %v3766, %v3884
      %v3962 = vadd.f32 %v3767, %v3886
      %v3963 = vadd.f32 %v3768, %v3888
      %v3964 = vadd.f32 %v3769, %v3890
      %v3965 = vadd.f32 %v3770, %v3892
      %v3966 = vadd.f32 %v3771, %v3894
      %v3967 = vadd.f32 %v3772, %v3896
      %v3968 = vadd.f32 %v3773, %v3898
      %v3969 = vadd.f32 %v3774, %v3900
      %v3970 = vadd.f32 %v3775, %v3902
      %v3971 = vadd.f32 %v3776, %v3904
      %v3972 = vadd.f32 %v3777, %v3906
      %v3973 = vadd.f32 %v3778, %v3908
      %v3974 = vadd.f32 %v3779, %v3910
      %3975 = vrot.lane.b32.xlu0 %v2012, 72
      %v3976 = vpop.permute.xlu0 %3975
      %3977 = vrot.lane.b32.xlu0 %v2015, 72
      %v3978 = vpop.permute.xlu0 %3977
      %3979 = vrot.lane.b32.xlu0 %v2020, 72
      %v3980 = vpop.permute.xlu0 %3979
      %3981 = vrot.lane.b32.xlu0 %v2023, 72
      %v3982 = vpop.permute.xlu0 %3981
      %3983 = vrot.lane.b32.xlu0 %v2028, 72
      %v3984 = vpop.permute.xlu0 %3983
      %3985 = vrot.lane.b32.xlu0 %v2031, 72
      %v3986 = vpop.permute.xlu0 %3985
      %3987 = vrot.lane.b32.xlu0 %v2036, 72
      %v3988 = vpop.permute.xlu0 %3987
      %3989 = vrot.lane.b32.xlu0 %v2039, 72
      %v3990 = vpop.permute.xlu0 %3989
      %3991 = vrot.lane.b32.xlu0 %v2044, 72
      %v3992 = vpop.permute.xlu0 %3991
      %3993 = vrot.lane.b32.xlu0 %v2047, 72
      %v3994 = vpop.permute.xlu0 %3993
      %3995 = vrot.lane.b32.xlu0 %v2052, 72
      %v3996 = vpop.permute.xlu0 %3995
      %3997 = vrot.lane.b32.xlu0 %v2055, 72
      %v3998 = vpop.permute.xlu0 %3997
      %3999 = vrot.lane.b32.xlu0 %v2060, 72
      %v4000 = vpop.permute.xlu0 %3999
      %4001 = vrot.lane.b32.xlu0 %v2063, 72
      %v4002 = vpop.permute.xlu0 %4001
      %4003 = vrot.lane.b32.xlu0 %v2068, 72
      %v4004 = vpop.permute.xlu0 %4003
      %4005 = vrot.lane.b32.xlu0 %v2071, 72
      %v4006 = vpop.permute.xlu0 %4005
      %4007 = vrot.lane.b32.xlu0 %v2076, 72
      %v4008 = vpop.permute.xlu0 %4007
      %4009 = vrot.lane.b32.xlu0 %v2079, 72
      %v4010 = vpop.permute.xlu0 %4009
      %4011 = vrot.lane.b32.xlu0 %v2084, 72
      %v4012 = vpop.permute.xlu0 %4011
      %4013 = vrot.lane.b32.xlu0 %v2087, 72
      %v4014 = vpop.permute.xlu0 %4013
      %4015 = vrot.lane.b32.xlu0 %v2092, 72
      %v4016 = vpop.permute.xlu0 %4015
      %4017 = vrot.lane.b32.xlu0 %v2095, 72
      %v4018 = vpop.permute.xlu0 %4017
      %4019 = vrot.lane.b32.xlu0 %v2100, 72
      %v4020 = vpop.permute.xlu0 %4019
      %4021 = vrot.lane.b32.xlu0 %v2103, 72
      %v4022 = vpop.permute.xlu0 %4021
      %4023 = vrot.lane.b32.xlu0 %v2108, 72
      %v4024 = vpop.permute.xlu0 %4023
      %4025 = vrot.lane.b32.xlu0 %v2111, 72
      %v4026 = vpop.permute.xlu0 %4025
      %4027 = vrot.lane.b32.xlu0 %v2116, 72
      %v4028 = vpop.permute.xlu0 %4027
      %4029 = vrot.lane.b32.xlu0 %v2119, 72
      %v4030 = vpop.permute.xlu0 %4029
      %4031 = vrot.lane.b32.xlu0 %v2124, 72
      %v4032 = vpop.permute.xlu0 %4031
      %4033 = vrot.lane.b32.xlu0 %v2127, 72
      %v4034 = vpop.permute.xlu0 %4033
      %4035 = vrot.lane.b32.xlu0 0.0, 72
      %v4036 = vpop.permute.xlu0 %4035
      %v4068 = vadd.f32 %v3943, %v3976
      %v4069 = vadd.f32 %v3944, %v3978
      %v4070 = vadd.f32 %v3945, %v3980
      %v4071 = vadd.f32 %v3946, %v3982
      %v4072 = vadd.f32 %v3947, %v3984
      %v4073 = vadd.f32 %v3948, %v3986
      %v4074 = vadd.f32 %v3949, %v3988
      %v4075 = vadd.f32 %v3950, %v3990
      %v4076 = vadd.f32 %v3951, %v3992
      %v4077 = vadd.f32 %v3952, %v3994
      %v4078 = vadd.f32 %v3953, %v3996
      %v4079 = vadd.f32 %v3954, %v3998
      %v4080 = vadd.f32 %v3955, %v4000
      %v4081 = vadd.f32 %v3956, %v4002
      %v4082 = vadd.f32 %v3957, %v4004
      %v4083 = vadd.f32 %v3958, %v4006
      %v4084 = vadd.f32 %v3959, %v4008
      %v4085 = vadd.f32 %v3960, %v4010
      %v4086 = vadd.f32 %v3961, %v4012
      %v4087 = vadd.f32 %v3962, %v4014
      %v4088 = vadd.f32 %v3963, %v4016
      %v4089 = vadd.f32 %v3964, %v4018
      %v4090 = vadd.f32 %v3965, %v4020
      %v4091 = vadd.f32 %v3966, %v4022
      %v4092 = vadd.f32 %v3967, %v4024
      %v4093 = vadd.f32 %v3968, %v4026
      %v4094 = vadd.f32 %v3969, %v4028
      %v4095 = vadd.f32 %v3970, %v4030
      %v4096 = vadd.f32 %v3971, %v4032
      %v4097 = vadd.f32 %v3972, %v4034
      %v4098 = vadd.f32 %v3973, %v4036
      %v4099 = vadd.f32 %v3974, %v4036
      %v4100 = vsel %vm3165, %v2984, 0.0
      %v4101 = vsel %vm3166, %v2986, 0.0
      %v4102 = vsel %vm3167, %v2988, 0.0
      %v4103 = vsel %vm3168, %v2990, 0.0
      %v4104 = vsel %vm3169, %v2992, 0.0
      %v4105 = vsel %vm3170, %v2994, 0.0
      %v4106 = vsel %vm3171, %v2996, 0.0
      %v4107 = vsel %vm3172, %v2998, 0.0
      %v4108 = vsel %vm3173, %v3000, 0.0
      %v4109 = vsel %vm3174, %v3002, 0.0
      %v4110 = vsel %vm3175, %v3004, 0.0
      %v4111 = vsel %vm3176, %v3006, 0.0
      %v4112 = vsel %vm3177, %v3008, 0.0
      %v4113 = vsel %vm3178, %v3010, 0.0
      %v4114 = vsel %vm3179, %v3012, 0.0
      %v4115 = vsel %vm3180, %v3014, 0.0
      %v4116 = vsel %vm3181, %v3016, 0.0
      %v4117 = vsel %vm3182, %v3018, 0.0
      %v4118 = vsel %vm3183, %v3020, 0.0
      %v4119 = vsel %vm3184, %v3022, 0.0
      %v4120 = vsel %vm3185, %v3024, 0.0
      %v4121 = vsel %vm3186, %v3026, 0.0
      %v4122 = vsel %vm3187, %v3028, 0.0
      %v4123 = vsel %vm3188, %v3030, 0.0
      %v4124 = vsel %vm3189, %v3032, 0.0
      %v4125 = vsel %vm3190, %v3034, 0.0
      %v4126 = vsel %vm3191, %v3036, 0.0
      %v4127 = vsel %vm3192, %v3038, 0.0
      %v4128 = vsel %vm3193, %v3554, 0.0
      %v4129 = vsel %vm3194, %v3587, 0.0
      %4160 = vrot.lane.b32.xlu0 %v4100, 64
      %v4161 = vpop.permute.xlu0 %4160
      %4162 = vrot.lane.b32.xlu0 %v4101, 64
      %v4163 = vpop.permute.xlu0 %4162
      %4164 = vrot.lane.b32.xlu0 %v4102, 64
      %v4165 = vpop.permute.xlu0 %4164
      %4166 = vrot.lane.b32.xlu0 %v4103, 64
      %v4167 = vpop.permute.xlu0 %4166
      %4168 = vrot.lane.b32.xlu0 %v4104, 64
      %v4169 = vpop.permute.xlu0 %4168
      %4170 = vrot.lane.b32.xlu0 %v4105, 64
      %v4171 = vpop.permute.xlu0 %4170
      %4172 = vrot.lane.b32.xlu0 %v4106, 64
      %v4173 = vpop.permute.xlu0 %4172
      %4174 = vrot.lane.b32.xlu0 %v4107, 64
      %v4175 = vpop.permute.xlu0 %4174
      %4176 = vrot.lane.b32.xlu0 %v4108, 64
      %v4177 = vpop.permute.xlu0 %4176
      %4178 = vrot.lane.b32.xlu0 %v4109, 64
      %v4179 = vpop.permute.xlu0 %4178
      %4180 = vrot.lane.b32.xlu0 %v4110, 64
      %v4181 = vpop.permute.xlu0 %4180
      %4182 = vrot.lane.b32.xlu0 %v4111, 64
      %v4183 = vpop.permute.xlu0 %4182
      %4184 = vrot.lane.b32.xlu0 %v4112, 64
      %v4185 = vpop.permute.xlu0 %4184
      %4186 = vrot.lane.b32.xlu0 %v4113, 64
      %v4187 = vpop.permute.xlu0 %4186
      %4188 = vrot.lane.b32.xlu0 %v4114, 64
      %v4189 = vpop.permute.xlu0 %4188
      %4190 = vrot.lane.b32.xlu0 %v4115, 64
      %v4191 = vpop.permute.xlu0 %4190
      %4192 = vrot.lane.b32.xlu0 %v4116, 64
      %v4193 = vpop.permute.xlu0 %4192
      %4194 = vrot.lane.b32.xlu0 %v4117, 64
      %v4195 = vpop.permute.xlu0 %4194
      %4196 = vrot.lane.b32.xlu0 %v4118, 64
      %v4197 = vpop.permute.xlu0 %4196
      %4198 = vrot.lane.b32.xlu0 %v4119, 64
      %v4199 = vpop.permute.xlu0 %4198
      %4200 = vrot.lane.b32.xlu0 %v4120, 64
      %v4201 = vpop.permute.xlu0 %4200
      %4202 = vrot.lane.b32.xlu0 %v4121, 64
      %v4203 = vpop.permute.xlu0 %4202
      %4204 = vrot.lane.b32.xlu0 %v4122, 64
      %v4205 = vpop.permute.xlu0 %4204
      %4206 = vrot.lane.b32.xlu0 %v4123, 64
      %v4207 = vpop.permute.xlu0 %4206
      %4208 = vrot.lane.b32.xlu0 %v4124, 64
      %v4209 = vpop.permute.xlu0 %4208
      %4210 = vrot.lane.b32.xlu0 %v4125, 64
      %v4211 = vpop.permute.xlu0 %4210
      %4212 = vrot.lane.b32.xlu0 %v4126, 64
      %v4213 = vpop.permute.xlu0 %4212
      %4214 = vrot.lane.b32.xlu0 %v4127, 64
      %v4215 = vpop.permute.xlu0 %4214
      %4216 = vrot.lane.b32.xlu0 %v4128, 64
      %v4217 = vpop.permute.xlu0 %4216
      %4218 = vrot.lane.b32.xlu0 %v4129, 64
      %v4219 = vpop.permute.xlu0 %4218
      %4220 = vrot.lane.b32.xlu0 0.0, 64
      %v4221 = vpop.permute.xlu0 %4220
      %v4253 = vadd.f32 %v4068, %v4161
      %v4254 = vadd.f32 %v4069, %v4163
      %v4255 = vadd.f32 %v4070, %v4165
      %v4256 = vadd.f32 %v4071, %v4167
      %v4257 = vadd.f32 %v4072, %v4169
      %v4258 = vadd.f32 %v4073, %v4171
      %v4259 = vadd.f32 %v4074, %v4173
      %v4260 = vadd.f32 %v4075, %v4175
      %v4261 = vadd.f32 %v4076, %v4177
      %v4262 = vadd.f32 %v4077, %v4179
      %v4263 = vadd.f32 %v4078, %v4181
      %v4264 = vadd.f32 %v4079, %v4183
      %v4265 = vadd.f32 %v4080, %v4185
      %v4266 = vadd.f32 %v4081, %v4187
      %v4267 = vadd.f32 %v4082, %v4189
      %v4268 = vadd.f32 %v4083, %v4191
      %v4269 = vadd.f32 %v4084, %v4193
      %v4270 = vadd.f32 %v4085, %v4195
      %v4271 = vadd.f32 %v4086, %v4197
      %v4272 = vadd.f32 %v4087, %v4199
      %v4273 = vadd.f32 %v4088, %v4201
      %v4274 = vadd.f32 %v4089, %v4203
      %v4275 = vadd.f32 %v4090, %v4205
      %v4276 = vadd.f32 %v4091, %v4207
      %v4277 = vadd.f32 %v4092, %v4209
      %v4278 = vadd.f32 %v4093, %v4211
      %v4279 = vadd.f32 %v4094, %v4213
      %v4280 = vadd.f32 %v4095, %v4215
      %v4281 = vadd.f32 %v4096, %v4217
      %v4282 = vadd.f32 %v4097, %v4219
      %v4283 = vadd.f32 %v4098, %v4221
      %v4284 = vadd.f32 %v4099, %v4221
      %4285 = vst.msk [vmem:[%s322] sm:$0xff] %vm332, %v4253
      %4286 = vst.msk [vmem:[%s322 + $0x8] sm:$0xff] %vm332, %v4254
      %4287 = vst.msk [vmem:[%s322 + $0x10] sm:$0xff] %vm332, %v4255
      %4288 = vst.msk [vmem:[%s322 + $0x18] sm:$0xff] %vm332, %v4256
      %4289 = vst.msk [vmem:[%s322 + $0x20] sm:$0xff] %vm332, %v4257
      %4290 = vst.msk [vmem:[%s322 + $0x28] sm:$0xff] %vm332, %v4258
      %4291 = vst.msk [vmem:[%s322 + $0x30] sm:$0xff] %vm332, %v4259
      %4292 = vst.msk [vmem:[%s322 + $0x38] sm:$0xff] %vm332, %v4260
      %4293 = vst.msk [vmem:[%s322 + $0x40] sm:$0xff] %vm332, %v4261
      %4294 = vst.msk [vmem:[%s322 + $0x48] sm:$0xff] %vm332, %v4262
      %4295 = vst.msk [vmem:[%s322 + $0x50] sm:$0xff] %vm332, %v4263
      %4296 = vst.msk [vmem:[%s322 + $0x58] sm:$0xff] %vm332, %v4264
      %4297 = vst.msk [vmem:[%s322 + $0x60] sm:$0xff] %vm332, %v4265
      %4298 = vst.msk [vmem:[%s322 + $0x68] sm:$0xff] %vm332, %v4266
      %4299 = vst.msk [vmem:[%s322 + $0x70] sm:$0xff] %vm332, %v4267
      %4300 = vst.msk [vmem:[%s322 + $0x78] sm:$0xff] %vm332, %v4268
      %4301 = vst.msk [vmem:[%s322 + $0x80] sm:$0xff] %vm332, %v4269
      %4302 = vst.msk [vmem:[%s322 + $0x88] sm:$0xff] %vm332, %v4270
      %4303 = vst.msk [vmem:[%s322 + $0x90] sm:$0xff] %vm332, %v4271
      %4304 = vst.msk [vmem:[%s322 + $0x98] sm:$0xff] %vm332, %v4272
      %4305 = vst.msk [vmem:[%s322 + $0xa0] sm:$0xff] %vm332, %v4273
      %4306 = vst.msk [vmem:[%s322 + $0xa8] sm:$0xff] %vm332, %v4274
      %4307 = vst.msk [vmem:[%s322 + $0xb0] sm:$0xff] %vm332, %v4275
      %4308 = vst.msk [vmem:[%s322 + $0xb8] sm:$0xff] %vm332, %v4276
      %4309 = vst.msk [vmem:[%s322 + $0xc0] sm:$0xff] %vm332, %v4277
      %4310 = vst.msk [vmem:[%s322 + $0xc8] sm:$0xff] %vm332, %v4278
      %4311 = vst.msk [vmem:[%s322 + $0xd0] sm:$0xff] %vm332, %v4279
      %4312 = vst.msk [vmem:[%s322 + $0xd8] sm:$0xff] %vm332, %v4280
      %4313 = vst.msk [vmem:[%s322 + $0xe0] sm:$0xff] %vm332, %v4281
      %4314 = vst.msk [vmem:[%s322 + $0xe8] sm:$0xff] %vm332, %v4282
      %4315 = vst.msk [vmem:[%s322 + $0xf0] sm:$0xff] %vm332, %v4283
      %4316 = vst.msk [vmem:[%s322 + $0xf8] sm:$0xff] %vm332, %v4284
      %p4317 = scmp.lt.s32.totalorder %s19, 1
      %s4318 = scalar_select %p4317, %s19, 1
      %s4319 = smul.addr %s4318, 32
      %s4320 = smul.addr %s4319, 8
      %s4321 = scalar_lea.vmem %s8, %s4320
      // Predicated region
      $region53: #{upsample_forward.1} parent=51 // pred_check
        %p4322 = pneg %p215
      $region54: #{upsample_forward.1} parent=51 // pred_check_branch
        %4324 = sbr.rel (%p4322) target = $region56
      $region55: #{upsample_forward.1} parent=51 // pred_region
        _
      $region56: #{upsample_forward.1} parent=51 // pred_fallthru
        _
    $region52: #{upsample_forward.1} parent=5 // pred_fallthru
      _
    %p4325 = scmp.le.s32.totalorder 2, %s14
    // Predicated region
    $region57: #{upsample_forward.1} parent=5 // pred_check
      %p4326 = pneg %p4325
    $region58: #{upsample_forward.1} parent=5 // pred_check_branch
      %4328 = sbr.rel (%p4326) target = $region60
    $region59: #{upsample_forward.1} parent=5 // pred_region
      %s4329 = ssub.s32 %s14, 2
      // Predicated region
      $region61: #{upsample_forward.1} parent=59 // pred_check
        %p4330 = pneg %p221
      $region62: #{upsample_forward.1} parent=59 // pred_check_branch
        %4332 = sbr.rel (%p4330) target = $region64
      $region63: #{upsample_forward.1} parent=59 // pred_region
        %p4333 = scmp.lt.s32.totalorder %s20, 1
        %s4334 = scalar_select %p4333, %s20, 1
        %s4335 = smul.addr %s4334, 32
        %s4336 = smul.addr %s4335, 8
        %s4337 = scalar_lea.vmem %s8, %s4336
      $region64: #{upsample_forward.1} parent=59 // pred_fallthru
        _
    $region60: #{upsample_forward.1} parent=5 // pred_fallthru
      _
  $region6: #{upsample_forward.1} parent=0 // loop_footer
    %s18 = sadd.s32 1, %s14
  $region7: #{upsample_forward.1} parent=0 // loop_footer_branch
    %13 = sbr.rel target = $region3
  $region8: #{upsample_forward.1} parent=0 // loop_exit
    _

</llo_original>
